<compile_context>
chip_gen: v5e
topology: v5e:2x2
jax: 0.10.0
libtpu: 0.0.40
codegen_flags: <defaults>
</compile_context>

<pallas_src>
from functools import partial

import jax
import jax.numpy as jnp
from jax.experimental import pallas as pl
from jax.experimental.pallas import tpu as pltpu


def _round_up(x, m):
    return ((x + m - 1) // m) * m


TH = 16  # output rows per grid step (review: 16-32; 16 keeps nb >= 2 for the 55x55 case)


@partial(jax.jit, static_argnames=("padding",))
def conv_transpose_silu(x_nchw, w_t, bias, *, padding=1):
    """x_nchw: (N, Cin, H, W); w_t: (Cin, Cout, K, K) [PyTorch ConvTranspose2d layout]."""
    N, Cin, H, W = x_nchw.shape
    _, Cout, K, _ = w_t.shape
    pad = K - 1 - padding                       # = 3 for K=5, padding=1
    Ho = H - 1 - 2 * padding + K                # = H + 2
    Wo = W - 1 - 2 * padding + K                # = W + 2

    Ho_pad = _round_up(Ho, TH)                  # padded output rows (grid multiple)
    Wp_pad = _round_up(Wo, 8)                   # flat row stride (sublane aligned)
    Hp_pad = Ho_pad + K - 1                     # padded-input rows reachable by any tap
    W_col = Wp_pad + K - 1                      # padded-input cols before kw-shifting
    Cfold = _round_up(K * Cin, 128)             # kw-folded contraction dim (lane aligned)
    Cout_pad = _round_up(Cout, 128)
    M = TH * Wp_pad                             # rows of each output block / matmul M-dim
    nb = Ho_pad // TH

    # ---- glue (fused under jit): NHWC, conv+alignment pad, kw-fold, flatten H*W ------
    x = jnp.transpose(x_nchw, (0, 2, 3, 1))
    x_pad = jnp.pad(
        x,
        ((0, 0),
         (pad, Hp_pad - H - pad),
         (pad, W_col - W - pad),
         (0, 0)))
    # kw-fold: channel-concat the K column-shifted views, then pad channels to Cfold.
    x_fold = jnp.concatenate(
        [x_pad[:, :, kw:kw + Wp_pad, :] for kw in range(K)], axis=-1)
    x_fold = jnp.pad(x_fold, ((0, 0), (0, 0), (0, 0), (0, Cfold - K * Cin)))
    x_flat = x_fold.reshape(N, Hp_pad * Wp_pad, Cfold)

    # transposed-conv -> conv weight: flip spatially, (K, K, Cin, Cout); fold (kw, ci)
    # into the contraction axis to match x_fold, then zero-pad to (K, Cfold, Cout_pad).
    w_conv = jnp.transpose(jnp.flip(w_t, (2, 3)), (2, 3, 0, 1))      # (K, K, Cin, Cout)
    w_fold = w_conv.reshape(K, K * Cin, Cout)
    w_fold = jnp.pad(w_fold, ((0, 0), (0, Cfold - K * Cin), (0, Cout_pad - Cout)))
    b2 = jnp.pad(bias, (0, Cout_pad - Cout)).reshape(1, Cout_pad)

    def kernel(x_ref, w_ref, b_ref, o_ref, acc_ref):
        # x_ref: (Hp_pad*Wp_pad, Cfold)   whole kw-folded image of this batch element
        # w_ref: (K, Cfold, Cout_pad)     folded conv weight
        # b_ref: (1, Cout_pad)
        # o_ref: (M, Cout_pad)            one block of TH output rows (flat over W)
        # acc_ref: (M, Cout_pad) f32      VMEM accumulator
        i = pl.program_id(1)
        base = pl.multiple_of(i * M, 8)                 # = (i*TH) * Wp_pad

        # kh = 0: fuse the bias into the first tap (no separate broadcast store).
        acc_ref[...] = jnp.dot(x_ref[pl.ds(base, M), :], w_ref[0],
                               preferred_element_type=jnp.float32) + b_ref[...]

        # kh = 1 .. K-2: accumulate (every slice start is sublane-aligned: Wp_pad % 8 == 0)
        for kh in range(1, K - 1):
            start = pl.multiple_of(base + kh * Wp_pad, 8)
            acc_ref[...] += jnp.dot(x_ref[pl.ds(start, M), :], w_ref[kh],
                                    preferred_element_type=jnp.float32)

        # kh = K-1: fuse SiLU into the last tap and write the output block once.
        start = pl.multiple_of(base + (K - 1) * Wp_pad, 8)
        v1 = acc_ref[...] + jnp.dot(x_ref[pl.ds(start, M), :], w_ref[K - 1],
                                    preferred_element_type=jnp.float32)
        o_ref[...] = (v1 * jax.nn.sigmoid(v1)).astype(o_ref.dtype)

    # VMEM budget computed from actual (double-buffered) block sizes + margin.
    x_itm = jnp.dtype(x_nchw.dtype).itemsize
    w_itm = jnp.dtype(w_t.dtype).itemsize
    x_blk = Hp_pad * Wp_pad * Cfold * x_itm
    w_blk = K * Cfold * Cout_pad * w_itm
    o_blk = M * Cout_pad * x_itm
    acc_blk = M * Cout_pad * 4
    vmem_bytes = 2 * (x_blk + w_blk + o_blk) + acc_blk + (4 << 20)
    vmem_bytes = min(max(vmem_bytes, 16 << 20), 64 << 20)

    out_flat = pl.pallas_call(
        kernel,
        out_shape=jax.ShapeDtypeStruct((N, Ho_pad * Wp_pad, Cout_pad), x_nchw.dtype),
        grid_spec=pltpu.PrefetchScalarGridSpec(
            num_scalar_prefetch=0,
            grid=(N, nb),
            in_specs=[
                pl.BlockSpec((None, Hp_pad * Wp_pad, Cfold), lambda n, i: (n, 0, 0)),
                pl.BlockSpec((K, Cfold, Cout_pad), lambda n, i: (0, 0, 0)),
                pl.BlockSpec((1, Cout_pad), lambda n, i: (0, 0)),
            ],
            out_specs=pl.BlockSpec((None, M, Cout_pad), lambda n, i: (n, i, 0)),
            scratch_shapes=[pltpu.VMEM((M, Cout_pad), jnp.float32)],
        ),
        compiler_params=pltpu.CompilerParams(
            dimension_semantics=("parallel", "parallel"),
            vmem_limit_bytes=vmem_bytes),
    )(x_flat, w_fold, b2)

    out = out_flat.reshape(N, Ho_pad, Wp_pad, Cout_pad)[:, :Ho, :Wo, :Cout]
    return jnp.transpose(out, (0, 3, 1, 2))                       # back to NCHW


def reference(x_nchw, w_t, bias, padding=1):
    """Pure-JAX/XLA reference: conv-transpose as padded cross-correlation, then SiLU."""
    K = w_t.shape[2]
    pad = K - 1 - padding
    w_oihw = jnp.transpose(jnp.flip(w_t, (2, 3)), (1, 0, 2, 3))   # (Cout, Cin, K, K)
    v1 = jax.lax.conv_general_dilated(
        x_nchw, w_oihw, window_strides=(1, 1),
        padding=[(pad, pad), (pad, pad)],
        dimension_numbers=("NCHW", "OIHW", "NCHW"))
    v1 = v1 + bias[None, :, None, None]
    return v1 * jax.nn.sigmoid(v1)


if __name__ == "__main__":
    # Original module: x1 = (1, 106, 55, 55), ConvTranspose2d(106, 242, 5, stride=1, padding=1).
    # Small shapes here with identical conv structure (K=5, stride=1, padding=1).
    N, Cin, Cout, H, W, K = 2, 8, 16, 16, 16, 5

    key = jax.random.PRNGKey(0)
    kx, kw, kb = jax.random.split(key, 3)
    x1 = jax.random.normal(kx, (N, Cin, H, W), jnp.float32)
    w_t = jax.random.normal(kw, (Cin, Cout, K, K), jnp.float32) * 0.05
    bias = jax.random.normal(kb, (Cout,), jnp.float32) * 0.05

    out = conv_transpose_silu(x1, w_t, bias, padding=1)
    out = jax.block_until_ready(out)

    assert out.shape == (N, Cout, H + 2, W + 2), out.shape
    ref = reference(x1, w_t, bias, padding=1)
    assert jnp.allclose(out, ref, atol=1e-4, rtol=1e-4), \
        float(jnp.max(jnp.abs(out - ref)))

    print("KERNEL_OK")
</pallas_src>

<mosaic_0001>
module attributes {stable_mosaic.version = 11 : i64} {
  func.func @kernel(%arg0: i32, %arg1: i32, %arg2: memref<1x864x128xf32, #tpu.memory_space<vmem>>, %arg3: memref<5x128x128xf32, #tpu.memory_space<vmem>>, %arg4: memref<1x128xf32, #tpu.memory_space<vmem>>, %arg5: memref<1x384x128xf32, #tpu.memory_space<vmem>>, %arg6: memref<384x128xf32, #tpu.memory_space<vmem>>) attributes {dimension_semantics = [#tpu.dimension_semantics<parallel>, #tpu.dimension_semantics<parallel>], iteration_bounds = array<i64: 2, 2>, scalar_prefetch = 0 : i64, scratch_operands = 1 : i64, tpu.core_type = #tpu.core_type<tc>, window_params = [{transform_indices = @transform_0, window_bounds = array<i64: 1, 864, 128>}, {pipeline_mode = #tpu.pipeline_mode<synchronous>, transform_indices = @transform_1, window_bounds = array<i64: 5, 128, 128>}, {pipeline_mode = #tpu.pipeline_mode<synchronous>, transform_indices = @transform_2, window_bounds = array<i64: 1, 128>}, {transform_indices = @transform_3, window_bounds = array<i64: 1, 384, 128>}]} {
    %c384_i32 = arith.constant 384 : i32
    %0 = arith.muli %arg1, %c384_i32 : i32
    %1 = tpu.assume_multiple %0, 8 : i32
    %c0 = arith.constant 0 : index
    %2 = arith.index_cast %1 : i32 to index
    %c0_0 = arith.constant 0 : index
    %3 = vector.load %arg2[%c0, %2, %c0_0] : memref<1x864x128xf32, #tpu.memory_space<vmem>>, vector<1x384x128xf32>
    %4 = vector.shape_cast %3 : vector<1x384x128xf32> to vector<384x128xf32>
    %c0_1 = arith.constant 0 : index
    %c0_2 = arith.constant 0 : index
    %c0_3 = arith.constant 0 : index
    %5 = vector.load %arg3[%c0_1, %c0_2, %c0_3] : memref<5x128x128xf32, #tpu.memory_space<vmem>>, vector<1x128x128xf32>
    %6 = vector.shape_cast %5 : vector<1x128x128xf32> to vector<128x128xf32>
    %cst = arith.constant dense<0.000000e+00> : vector<384x128xf32>
    %7 = tpu.matmul %4, %6, %cst {dimension_numbers = #tpu.dot_dimension_numbers<[1], [0], [0], [1], [0, 0, 1, 1], [], []>} : vector<384x128xf32>, vector<128x128xf32>, vector<384x128xf32> -> vector<384x128xf32>
    %c0_4 = arith.constant 0 : index
    %c0_5 = arith.constant 0 : index
    %8 = vector.load %arg4[%c0_4, %c0_5] : memref<1x128xf32, #tpu.memory_space<vmem>>, vector<1x128xf32>
    %9 = vector.broadcast %8 : vector<1x128xf32> to vector<384x128xf32>
    %10 = arith.addf %7, %9 : vector<384x128xf32>
    %c0_6 = arith.constant 0 : index
    %c0_7 = arith.constant 0 : index
    %11 = vector.load %arg6[%c0_6, %c0_7] : memref<384x128xf32, #tpu.memory_space<vmem>>, vector<384x128xf32>
    tpu.vector_store %arg6[%c0_6, %c0_7], %10 {strides = array<i32>} : memref<384x128xf32, #tpu.memory_space<vmem>>, vector<384x128xf32>,
    %c24_i32 = arith.constant 24 : i32
    %12 = arith.addi %1, %c24_i32 : i32
    %13 = tpu.assume_multiple %12, 8 : i32
    %c0_8 = arith.constant 0 : index
    %c0_9 = arith.constant 0 : index
    %14 = vector.load %arg6[%c0_8, %c0_9] : memref<384x128xf32, #tpu.memory_space<vmem>>, vector<384x128xf32>
    %c0_10 = arith.constant 0 : index
    %15 = arith.index_cast %13 : i32 to index
    %c0_11 = arith.constant 0 : index
    %16 = vector.load %arg2[%c0_10, %15, %c0_11] : memref<1x864x128xf32, #tpu.memory_space<vmem>>, vector<1x384x128xf32>
    %17 = vector.shape_cast %16 : vector<1x384x128xf32> to vector<384x128xf32>
    %c1 = arith.constant 1 : index
    %c0_12 = arith.constant 0 : index
    %c0_13 = arith.constant 0 : index
    %18 = vector.load %arg3[%c1, %c0_12, %c0_13] : memref<5x128x128xf32, #tpu.memory_space<vmem>>, vector<1x128x128xf32>
    %19 = vector.shape_cast %18 : vector<1x128x128xf32> to vector<128x128xf32>
    %cst_14 = arith.constant dense<0.000000e+00> : vector<384x128xf32>
    %20 = tpu.matmul %17, %19, %cst_14 {dimension_numbers = #tpu.dot_dimension_numbers<[1], [0], [0], [1], [0, 0, 1, 1], [], []>} : vector<384x128xf32>, vector<128x128xf32>, vector<384x128xf32> -> vector<384x128xf32>
    %21 = arith.addf %14, %20 : vector<384x128xf32>
    %c0_15 = arith.constant 0 : index
    %c0_16 = arith.constant 0 : index
    %22 = vector.load %arg6[%c0_15, %c0_16] : memref<384x128xf32, #tpu.memory_space<vmem>>, vector<384x128xf32>
    tpu.vector_store %arg6[%c0_15, %c0_16], %21 {strides = array<i32>} : memref<384x128xf32, #tpu.memory_space<vmem>>, vector<384x128xf32>,
    %c48_i32 = arith.constant 48 : i32
    %23 = arith.addi %1, %c48_i32 : i32
    %24 = tpu.assume_multiple %23, 8 : i32
    %c0_17 = arith.constant 0 : index
    %c0_18 = arith.constant 0 : index
    %25 = vector.load %arg6[%c0_17, %c0_18] : memref<384x128xf32, #tpu.memory_space<vmem>>, vector<384x128xf32>
    %c0_19 = arith.constant 0 : index
    %26 = arith.index_cast %24 : i32 to index
    %c0_20 = arith.constant 0 : index
    %27 = vector.load %arg2[%c0_19, %26, %c0_20] : memref<1x864x128xf32, #tpu.memory_space<vmem>>, vector<1x384x128xf32>
    %28 = vector.shape_cast %27 : vector<1x384x128xf32> to vector<384x128xf32>
    %c2 = arith.constant 2 : index
    %c0_21 = arith.constant 0 : index
    %c0_22 = arith.constant 0 : index
    %29 = vector.load %arg3[%c2, %c0_21, %c0_22] : memref<5x128x128xf32, #tpu.memory_space<vmem>>, vector<1x128x128xf32>
    %30 = vector.shape_cast %29 : vector<1x128x128xf32> to vector<128x128xf32>
    %cst_23 = arith.constant dense<0.000000e+00> : vector<384x128xf32>
    %31 = tpu.matmul %28, %30, %cst_23 {dimension_numbers = #tpu.dot_dimension_numbers<[1], [0], [0], [1], [0, 0, 1, 1], [], []>} : vector<384x128xf32>, vector<128x128xf32>, vector<384x128xf32> -> vector<384x128xf32>
    %32 = arith.addf %25, %31 : vector<384x128xf32>
    %c0_24 = arith.constant 0 : index
    %c0_25 = arith.constant 0 : index
    %33 = vector.load %arg6[%c0_24, %c0_25] : memref<384x128xf32, #tpu.memory_space<vmem>>, vector<384x128xf32>
    tpu.vector_store %arg6[%c0_24, %c0_25], %32 {strides = array<i32>} : memref<384x128xf32, #tpu.memory_space<vmem>>, vector<384x128xf32>,
    %c72_i32 = arith.constant 72 : i32
    %34 = arith.addi %1, %c72_i32 : i32
    %35 = tpu.assume_multiple %34, 8 : i32
    %c0_26 = arith.constant 0 : index
    %c0_27 = arith.constant 0 : index
    %36 = vector.load %arg6[%c0_26, %c0_27] : memref<384x128xf32, #tpu.memory_space<vmem>>, vector<384x128xf32>
    %c0_28 = arith.constant 0 : index
    %37 = arith.index_cast %35 : i32 to index
    %c0_29 = arith.constant 0 : index
    %38 = vector.load %arg2[%c0_28, %37, %c0_29] : memref<1x864x128xf32, #tpu.memory_space<vmem>>, vector<1x384x128xf32>
    %39 = vector.shape_cast %38 : vector<1x384x128xf32> to vector<384x128xf32>
    %c3 = arith.constant 3 : index
    %c0_30 = arith.constant 0 : index
    %c0_31 = arith.constant 0 : index
    %40 = vector.load %arg3[%c3, %c0_30, %c0_31] : memref<5x128x128xf32, #tpu.memory_space<vmem>>, vector<1x128x128xf32>
    %41 = vector.shape_cast %40 : vector<1x128x128xf32> to vector<128x128xf32>
    %cst_32 = arith.constant dense<0.000000e+00> : vector<384x128xf32>
    %42 = tpu.matmul %39, %41, %cst_32 {dimension_numbers = #tpu.dot_dimension_numbers<[1], [0], [0], [1], [0, 0, 1, 1], [], []>} : vector<384x128xf32>, vector<128x128xf32>, vector<384x128xf32> -> vector<384x128xf32>
    %43 = arith.addf %36, %42 : vector<384x128xf32>
    %c0_33 = arith.constant 0 : index
    %c0_34 = arith.constant 0 : index
    %44 = vector.load %arg6[%c0_33, %c0_34] : memref<384x128xf32, #tpu.memory_space<vmem>>, vector<384x128xf32>
    tpu.vector_store %arg6[%c0_33, %c0_34], %43 {strides = array<i32>} : memref<384x128xf32, #tpu.memory_space<vmem>>, vector<384x128xf32>,
    %c96_i32 = arith.constant 96 : i32
    %45 = arith.addi %1, %c96_i32 : i32
    %46 = tpu.assume_multiple %45, 8 : i32
    %c0_35 = arith.constant 0 : index
    %c0_36 = arith.constant 0 : index
    %47 = vector.load %arg6[%c0_35, %c0_36] : memref<384x128xf32, #tpu.memory_space<vmem>>, vector<384x128xf32>
    %c0_37 = arith.constant 0 : index
    %48 = arith.index_cast %46 : i32 to index
    %c0_38 = arith.constant 0 : index
    %49 = vector.load %arg2[%c0_37, %48, %c0_38] : memref<1x864x128xf32, #tpu.memory_space<vmem>>, vector<1x384x128xf32>
    %50 = vector.shape_cast %49 : vector<1x384x128xf32> to vector<384x128xf32>
    %c4 = arith.constant 4 : index
    %c0_39 = arith.constant 0 : index
    %c0_40 = arith.constant 0 : index
    %51 = vector.load %arg3[%c4, %c0_39, %c0_40] : memref<5x128x128xf32, #tpu.memory_space<vmem>>, vector<1x128x128xf32>
    %52 = vector.shape_cast %51 : vector<1x128x128xf32> to vector<128x128xf32>
    %cst_41 = arith.constant dense<0.000000e+00> : vector<384x128xf32>
    %53 = tpu.matmul %50, %52, %cst_41 {dimension_numbers = #tpu.dot_dimension_numbers<[1], [0], [0], [1], [0, 0, 1, 1], [], []>} : vector<384x128xf32>, vector<128x128xf32>, vector<384x128xf32> -> vector<384x128xf32>
    %54 = arith.addf %47, %53 : vector<384x128xf32>
    %55 = arith.negf %54 : vector<384x128xf32>
    %56 = math.exp %55 : vector<384x128xf32>
    %cst_42 = arith.constant 1.000000e+00 : f32
    %57 = vector.broadcast %cst_42 : f32 to vector<384x128xf32>
    %58 = arith.addf %57, %56 : vector<384x128xf32>
    %59 = arith.divf %57, %58 : vector<384x128xf32>
    %60 = arith.mulf %54, %59 : vector<384x128xf32>
    %c0_43 = arith.constant 0 : index
    %c0_44 = arith.constant 0 : index
    %c0_45 = arith.constant 0 : index
    %61 = vector.load %arg5[%c0_43, %c0_44, %c0_45] : memref<1x384x128xf32, #tpu.memory_space<vmem>>, vector<1x384x128xf32>
    %62 = vector.shape_cast %61 : vector<1x384x128xf32> to vector<384x128xf32>
    %63 = vector.shape_cast %60 : vector<384x128xf32> to vector<1x384x128xf32>
    tpu.vector_store %arg5[%c0_43, %c0_44, %c0_45], %63 {strides = array<i32>} : memref<1x384x128xf32, #tpu.memory_space<vmem>>, vector<1x384x128xf32>,
    return
  }
  func.func @transform_0(%arg0: i32, %arg1: i32) -> (i32, i32, i32) {
    %c0_i32 = arith.constant 0 : i32
    %c0_i32_0 = arith.constant 0 : i32
    %c0_i32_1 = arith.constant 0 : i32
    return %arg0, %c0_i32, %c0_i32_0 : i32, i32, i32
  }
  func.func @transform_1(%arg0: i32, %arg1: i32) -> (i32, i32, i32) {
    %c0_i32 = arith.constant 0 : i32
    %c0_i32_0 = arith.constant 0 : i32
    %c0_i32_1 = arith.constant 0 : i32
    %c0_i32_2 = arith.constant 0 : i32
    return %c0_i32, %c0_i32_0, %c0_i32_1 : i32, i32, i32
  }
  func.func @transform_2(%arg0: i32, %arg1: i32) -> (i32, i32) {
    %c0_i32 = arith.constant 0 : i32
    %c0_i32_0 = arith.constant 0 : i32
    %c0_i32_1 = arith.constant 0 : i32
    return %c0_i32, %c0_i32_0 : i32, i32
  }
  func.func @transform_3(%arg0: i32, %arg1: i32) -> (i32, i32, i32) {
    %c0_i32 = arith.constant 0 : i32
    %c0_i32_0 = arith.constant 0 : i32
    return %arg0, %arg1, %c0_i32 : i32, i32, i32
  }
}

</mosaic_0001>

<llo_original>
// kernel: conv_transpose_silu.1
$region0: #{conv_transpose_silu.1}
  #allocation0 [shape = 'u32[]', space=smem, size = 0x4, offset = 0x4, fixed_abs, tag = 'smem constant byte address 0x4 - core index']
  #allocation1 [shape = 'u32[72,128]{1,0:T(1,128)}', space=vmem, size = 0x9000, scoped, tag = 'internal scratch']
  #allocation2 [shape = 'f32[384,128]{1,0:T(8,128)}', space=vmem, size = 0x30000, scoped, tag = 'scratch operand']
  %s0 = inlined_call_operand.vmem [shape: f32[2,864,128], index: 0, kind: input, shape index: {}]
  %s1 = inlined_call_operand.vmem [shape: f32[5,128,128], index: 1, kind: input, shape index: {}]
  %s2 = inlined_call_operand.vmem [shape: f32[1,128], index: 2, kind: input, shape index: {}]
  %s3 = inlined_call_operand.vmem [shape: f32[2,768,128], index: 3, kind: output, shape index: {}]
  %s4 = sld [smem:[#allocation0]]
  $region45: #{conv_transpose_silu.1} parent=0
    _
  %s6 = ssub.s32 1, %s4
  %s7 = scalar_select 0, %s6, %s4
  loop: start=0, step=1, limit=6
  $region2: #{conv_transpose_silu.1} parent=0 // loop_pre_header
    _
  $region3: #{conv_transpose_silu.1} parent=0 // loop_header
    %s9 = sphi 0, %s13
    %p10 = scmp.ge.s32.totalorder %s9, 6
    %s16 = sphi 0, %s28
    %s17 = sphi 0, %s24
    %s18 = sphi 0, %s16
    %s19 = sphi 0, %s17
    %s20 = sphi 0, %s18
    %s21 = sphi 0, %s19
    %s31 = sphi 0, %s33
    %s34 = sphi 0, %s31
    %s35 = sphi 0, %s34
    %s51 = sphi 0, %s35
    %s55 = sphi 0, %s55
    %s57 = sphi 0, %s55
    %s58 = sphi 0, %s57
    %s72 = sphi 0, %s58
    %s76 = sphi 0, %s76
    %s78 = sphi 0, %s76
    %s79 = sphi 0, %s78
    %s93 = sphi 0, %s79
    %s101 = sphi 0, %s103
    %s104 = sphi 0, %s101
    %s105 = sphi 0, %s104
    %s121 = sphi 0, %s105
  $region4: #{conv_transpose_silu.1} parent=0 // loop_header_branch
    %12 = sbr.rel (%p10) target = $region8
  $region5: #{conv_transpose_silu.1} parent=0 // loop_body
    %s14 = ssub.s32 %s9, 1
    %s15 = ssub.s32 %s9, 2
    %s22 = sadd.s32 1, %s17
    %p23 = scmp.ge.s32.totalorder %s22, 2
    %s24 = scalar_select %p23, 0, %s22
    %s25 = sadd.s32 1, %s16
    %s26 = scalar_select %p23, %s25, %s16
    %p27 = scmp.ge.s32.totalorder %s26, 2
    %s28 = scalar_select %p27, 0, %s26
    %s29 = ssub.s32 %s16, %s28
    %p30 = scmp.eq.s32.totalorder %s29, 0
    %s32 = sadd.s32 %s31, 1
    %s33 = scalar_select %p30, %s31, %s32
    %p36 = pneg %p30
    %p37 = scmp.eq.s32.totalorder %s9, 3
    %p38 = por %p36, %p37
    %p39 = scmp.ne.s32.totalorder %s31, %s34
    %p40 = scmp.eq.s32.totalorder %s9, 0
    %p41 = por %p39, %p40
    %p42 = scmp.ne.s32.totalorder %s31, %s34
    %p43 = scmp.eq.s32.totalorder %s14, 3
    %p44 = por %p42, %p43
    %p45 = scmp.ne.s32.totalorder %s34, %s35
    %p46 = scmp.eq.s32.totalorder %s14, 0
    %p47 = por %p45, %p46
    %p48 = scmp.ne.s32.totalorder %s34, %s35
    %p49 = scmp.eq.s32.totalorder %s15, 3
    %p50 = por %p48, %p49
    %p52 = scmp.ne.s32.totalorder %s35, %s51
    %p53 = scmp.eq.s32.totalorder %s15, 0
    %p54 = por %p52, %p53
    %s56 = sadd.s32 %s55, 1
    %p59 = scmp.eq.s32.totalorder %s9, 3
    %p60 = scmp.ne.s32.totalorder %s55, %s57
    %p61 = scmp.eq.s32.totalorder %s9, 0
    %p62 = por %p60, %p61
    %p63 = scmp.ne.s32.totalorder %s55, %s57
    %p64 = scmp.eq.s32.totalorder %s14, 3
    %p65 = por %p63, %p64
    %p66 = scmp.ne.s32.totalorder %s57, %s58
    %p67 = scmp.eq.s32.totalorder %s14, 0
    %p68 = por %p66, %p67
    %p69 = scmp.ne.s32.totalorder %s57, %s58
    %p70 = scmp.eq.s32.totalorder %s15, 3
    %p71 = por %p69, %p70
    %p73 = scmp.ne.s32.totalorder %s58, %s72
    %p74 = scmp.eq.s32.totalorder %s15, 0
    %p75 = por %p73, %p74
    %s77 = sadd.s32 %s76, 1
    %p80 = scmp.eq.s32.totalorder %s9, 3
    %p81 = scmp.ne.s32.totalorder %s76, %s78
    %p82 = scmp.eq.s32.totalorder %s9, 0
    %p83 = por %p81, %p82
    %p84 = scmp.ne.s32.totalorder %s76, %s78
    %p85 = scmp.eq.s32.totalorder %s14, 3
    %p86 = por %p84, %p85
    %p87 = scmp.ne.s32.totalorder %s78, %s79
    %p88 = scmp.eq.s32.totalorder %s14, 0
    %p89 = por %p87, %p88
    %p90 = scmp.ne.s32.totalorder %s78, %s79
    %p91 = scmp.eq.s32.totalorder %s15, 3
    %p92 = por %p90, %p91
    %p94 = scmp.ne.s32.totalorder %s79, %s93
    %p95 = scmp.eq.s32.totalorder %s15, 0
    %p96 = por %p94, %p95
    %s97 = ssub.s32 %s16, %s28
    %s98 = ssub.s32 %s17, %s24
    %s99 = sor.u32 %s97, %s98
    %p100 = scmp.eq.s32.totalorder %s99, 0
    %s102 = sadd.s32 %s101, 1
    %s103 = scalar_select %p100, %s101, %s102
    %p106 = pneg %p100
    %p107 = scmp.eq.s32.totalorder %s9, 3
    %p108 = por %p106, %p107
    %p109 = scmp.ne.s32.totalorder %s101, %s104
    %p110 = scmp.eq.s32.totalorder %s9, 0
    %p111 = por %p109, %p110
    %p112 = scmp.ne.s32.totalorder %s101, %s104
    %p113 = scmp.eq.s32.totalorder %s14, 3
    %p114 = por %p112, %p113
    %p115 = scmp.ne.s32.totalorder %s104, %s105
    %p116 = scmp.eq.s32.totalorder %s14, 0
    %p117 = por %p115, %p116
    %p118 = scmp.ne.s32.totalorder %s104, %s105
    %p119 = scmp.eq.s32.totalorder %s15, 3
    %p120 = por %p118, %p119
    %p122 = scmp.ne.s32.totalorder %s105, %s121
    %p123 = scmp.eq.s32.totalorder %s15, 0
    %p124 = por %p122, %p123
    %p125 = scmp.le.s32.totalorder 1, %s9
    %p126 = scmp.lt.s32.totalorder %s9, 5
    %p127 = pnand %p125, %p126
    %p128 = pneg %p127
    // Predicated region
    $region9: #{conv_transpose_silu.1} parent=5 // pred_check
      _
    $region10: #{conv_transpose_silu.1} parent=5 // pred_check_branch
      %130 = sbr.rel (%p127) target = $region12
    $region11: #{conv_transpose_silu.1} parent=5 // pred_region
      %s131 = ssub.s32 %s9, 1
      // Predicated region
      $region13: #{conv_transpose_silu.1} parent=11 // pred_check
        %p132 = pneg %p68
      $region14: #{conv_transpose_silu.1} parent=11 // pred_check_branch
        %134 = sbr.rel (%p132) target = $region16
      $region15: #{conv_transpose_silu.1} parent=11 // pred_region
        _
      $region16: #{conv_transpose_silu.1} parent=11 // pred_fallthru
        _
      // Predicated region
      $region17: #{conv_transpose_silu.1} parent=11 // pred_check
        %p135 = pneg %p89
      $region18: #{conv_transpose_silu.1} parent=11 // pred_check_branch
        %137 = sbr.rel (%p135) target = $region20
      $region19: #{conv_transpose_silu.1} parent=11 // pred_region
        _
      $region20: #{conv_transpose_silu.1} parent=11 // pred_fallthru
        _
    $region12: #{conv_transpose_silu.1} parent=5 // pred_fallthru
      _
    %p138 = scmp.lt.s32.totalorder %s9, 4
    // Predicated region
    $region21: #{conv_transpose_silu.1} parent=5 // pred_check
      %p139 = pneg %p138
    $region22: #{conv_transpose_silu.1} parent=5 // pred_check_branch
      %141 = sbr.rel (%p139) target = $region24
    $region23: #{conv_transpose_silu.1} parent=5 // pred_region
      // Predicated region
      $region25: #{conv_transpose_silu.1} parent=23 // pred_check
        %p142 = pneg %p41
      $region26: #{conv_transpose_silu.1} parent=23 // pred_check_branch
        %144 = sbr.rel (%p142) target = $region28
      $region27: #{conv_transpose_silu.1} parent=23 // pred_region
        %p145 = scmp.lt.s32.totalorder %s16, 1
        %s146 = scalar_select %p145, %s16, 1
        %s147 = smul.addr %s146, 108
        %s148 = smul.addr %s147, 8
        %s149 = scalar_lea.vmem %s0, %s148
      $region28: #{conv_transpose_silu.1} parent=23 // pred_fallthru
        _
    $region24: #{conv_transpose_silu.1} parent=5 // pred_fallthru
      _
    %p150 = scmp.le.s32.totalorder 1, %s9
    %p151 = scmp.lt.s32.totalorder %s9, 5
    %p152 = pnand %p150, %p151
    %p153 = pneg %p152
    // Predicated region
    $region29: #{conv_transpose_silu.1} parent=5 // pred_check
      _
    $region30: #{conv_transpose_silu.1} parent=5 // pred_check_branch
      %155 = sbr.rel (%p152) target = $region32
    $region31: #{conv_transpose_silu.1} parent=5 // pred_region
      %s156 = ssub.s32 %s9, 1
      %p157 = scmp.lt.s32.totalorder %s18, 1
      %s158 = scalar_select %p157, %s18, 1
      %s159 = smul.addr %s158, 108
      %s160 = smul.addr %s159, 8
      %s161 = scalar_lea.vmem %s0, %s160
      %p162 = pneg %p47
      %p163 = pneg %p44
      %p164 = pneg %p68
      %p165 = pneg %p65
      %p166 = pneg %p89
      %p167 = pneg %p86
      %p168 = pneg %p117
      %p169 = pneg %p114
      %s170 = smul.u32 48, %s19
      %p171 = scmp.lt.s32.totalorder %s18, 1
      %s172 = scalar_select %p171, %s18, 1
      %p173 = scmp.lt.s32.totalorder %s170, 95
      %s174 = scalar_select %p173, %s170, 95
      %s175 = smul.addr %s172, 96
      %s176 = sadd.s32 %s174, %s175
      %s177 = smul.addr %s176, 8
      %s178 = scalar_lea.vmem %s3, %s177
      %p179 = scmp.lt.s32.totalorder %s18, 1
      %s180 = scalar_select %p179, %s18, 1
      %s181 = smul.addr %s180, 108
      %s182 = smul.addr %s181, 8
      %s183 = scalar_lea.vmem %s0, %s182
      %s184 = smul.u32 48, %s19
      %p185 = scmp.lt.s32.totalorder %s18, 1
      %s186 = scalar_select %p185, %s18, 1
      %p187 = scmp.lt.s32.totalorder %s184, 95
      %s188 = scalar_select %p187, %s184, 95
      %s189 = smul.addr %s186, 96
      %s190 = sadd.s32 %s188, %s189
      %s191 = smul.addr %s190, 8
      %s192 = scalar_lea.vmem %s3, %s191
      %s193 = smul.u32 48, %s19
      %s194 = smul.u32 %s19, 384
      %s195 = scalar_lea.vmem %s183, %s194
      %v196 = vld [vmem:[%s195] sm:$0xff]
      %v197 = vld [vmem:[%s195 + $0x8] sm:$0xff]
      %v198 = vld [vmem:[%s195 + $0x10] sm:$0xff]
      %v199 = vld [vmem:[%s195 + $0x18] sm:$0xff]
      %v200 = vld [vmem:[%s195 + $0x20] sm:$0xff]
      %v201 = vld [vmem:[%s195 + $0x28] sm:$0xff]
      %v202 = vld [vmem:[%s195 + $0x30] sm:$0xff]
      %v203 = vld [vmem:[%s195 + $0x38] sm:$0xff]
      %v204 = vld [vmem:[%s195 + $0x40] sm:$0xff]
      %v205 = vld [vmem:[%s195 + $0x48] sm:$0xff]
      %v206 = vld [vmem:[%s195 + $0x50] sm:$0xff]
      %v207 = vld [vmem:[%s195 + $0x58] sm:$0xff]
      %v208 = vld [vmem:[%s195 + $0x60] sm:$0xff]
      %v209 = vld [vmem:[%s195 + $0x68] sm:$0xff]
      %v210 = vld [vmem:[%s195 + $0x70] sm:$0xff]
      %v211 = vld [vmem:[%s195 + $0x78] sm:$0xff]
      %v212 = vld [vmem:[%s195 + $0x80] sm:$0xff]
      %v213 = vld [vmem:[%s195 + $0x88] sm:$0xff]
      %v214 = vld [vmem:[%s195 + $0x90] sm:$0xff]
      %v215 = vld [vmem:[%s195 + $0x98] sm:$0xff]
      %v216 = vld [vmem:[%s195 + $0xa0] sm:$0xff]
      %v217 = vld [vmem:[%s195 + $0xa8] sm:$0xff]
      %v218 = vld [vmem:[%s195 + $0xb0] sm:$0xff]
      %v219 = vld [vmem:[%s195 + $0xb8] sm:$0xff]
      %v220 = vld [vmem:[%s195 + $0xc0] sm:$0xff]
      %v221 = vld [vmem:[%s195 + $0xc8] sm:$0xff]
      %v222 = vld [vmem:[%s195 + $0xd0] sm:$0xff]
      %v223 = vld [vmem:[%s195 + $0xd8] sm:$0xff]
      %v224 = vld [vmem:[%s195 + $0xe0] sm:$0xff]
      %v225 = vld [vmem:[%s195 + $0xe8] sm:$0xff]
      %v226 = vld [vmem:[%s195 + $0xf0] sm:$0xff]
      %v227 = vld [vmem:[%s195 + $0xf8] sm:$0xff]
      %v228 = vld [vmem:[%s195 + $0x100] sm:$0xff]
      %v229 = vld [vmem:[%s195 + $0x108] sm:$0xff]
      %v230 = vld [vmem:[%s195 + $0x110] sm:$0xff]
      %v231 = vld [vmem:[%s195 + $0x118] sm:$0xff]
      %v232 = vld [vmem:[%s195 + $0x120] sm:$0xff]
      %v233 = vld [vmem:[%s195 + $0x128] sm:$0xff]
      %v234 = vld [vmem:[%s195 + $0x130] sm:$0xff]
      %v235 = vld [vmem:[%s195 + $0x138] sm:$0xff]
      %v236 = vld [vmem:[%s195 + $0x140] sm:$0xff]
      %v237 = vld [vmem:[%s195 + $0x148] sm:$0xff]
      %v238 = vld [vmem:[%s195 + $0x150] sm:$0xff]
      %v239 = vld [vmem:[%s195 + $0x158] sm:$0xff]
      %v240 = vld [vmem:[%s195 + $0x160] sm:$0xff]
      %v241 = vld [vmem:[%s195 + $0x168] sm:$0xff]
      %v242 = vld [vmem:[%s195 + $0x170] sm:$0xff]
      %v243 = vld [vmem:[%s195 + $0x178] sm:$0xff]
      %v244 = vld [vmem:[%s1] sm:$0xff]
      %v245 = vld [vmem:[%s1 + $0x8] sm:$0xff]
      %v246 = vld [vmem:[%s1 + $0x10] sm:$0xff]
      %v247 = vld [vmem:[%s1 + $0x18] sm:$0xff]
      %v248 = vld [vmem:[%s1 + $0x20] sm:$0xff]
      %v249 = vld [vmem:[%s1 + $0x28] sm:$0xff]
      %v250 = vld [vmem:[%s1 + $0x30] sm:$0xff]
      %v251 = vld [vmem:[%s1 + $0x38] sm:$0xff]
      %v252 = vld [vmem:[%s1 + $0x40] sm:$0xff]
      %v253 = vld [vmem:[%s1 + $0x48] sm:$0xff]
      %v254 = vld [vmem:[%s1 + $0x50] sm:$0xff]
      %v255 = vld [vmem:[%s1 + $0x58] sm:$0xff]
      %v256 = vld [vmem:[%s1 + $0x60] sm:$0xff]
      %v257 = vld [vmem:[%s1 + $0x68] sm:$0xff]
      %v258 = vld [vmem:[%s1 + $0x70] sm:$0xff]
      %v259 = vld [vmem:[%s1 + $0x78] sm:$0xff]
      %v260 = vld [vmem:[%s2] sm:$0x1]
      %v262 = vperm.slane %v260, 0
      %264 = vmatpush.msra.mxu0 %v259
      %265 = vmatpush.msra.mxu0 %v258
      %266 = vmatpush.msra.mxu0 %v257
      %267 = vmatpush.msra.mxu0 %v256
      %268 = vmatpush.msra.mxu0 %v255
      %269 = vmatpush.msra.mxu0 %v254
      %270 = vmatpush.msra.mxu0 %v253
      %271 = vmatpush.msra.mxu0 %v252
      %272 = vmatpush.msra.mxu0 %v251
      %273 = vmatpush.msra.mxu0 %v250
      %274 = vmatpush.msra.mxu0 %v249
      %275 = vmatpush.msra.mxu0 %v248
      %276 = vmatpush.msra.mxu0 %v247
      %277 = vmatpush.msra.mxu0 %v246
      %278 = vmatpush.msra.mxu0 %v245
      %279 = vmatpush.msra.mxu0 %v244
      %280 = vmatmul.f32.gmra.mxu0 %v196
      %v281 = vpop.f32.mrf.mxu0
      %v282 = vadd.f32 %v262, %v281
      %283 = vmatmul.f32.gmra.mxu0 %v197
      %v284 = vpop.f32.mrf.mxu0
      %v285 = vadd.f32 %v262, %v284
      %286 = vmatmul.f32.gmra.mxu0 %v198
      %v287 = vpop.f32.mrf.mxu0
      %v288 = vadd.f32 %v262, %v287
      %289 = vmatmul.f32.gmra.mxu0 %v199
      %v290 = vpop.f32.mrf.mxu0
      %v291 = vadd.f32 %v262, %v290
      %292 = vmatmul.f32.gmra.mxu0 %v200
      %v293 = vpop.f32.mrf.mxu0
      %v294 = vadd.f32 %v262, %v293
      %295 = vmatmul.f32.gmra.mxu0 %v201
      %v296 = vpop.f32.mrf.mxu0
      %v297 = vadd.f32 %v262, %v296
      %298 = vmatmul.f32.gmra.mxu0 %v202
      %v299 = vpop.f32.mrf.mxu0
      %v300 = vadd.f32 %v262, %v299
      %301 = vmatmul.f32.gmra.mxu0 %v203
      %v302 = vpop.f32.mrf.mxu0
      %v303 = vadd.f32 %v262, %v302
      %304 = vmatmul.f32.gmra.mxu0 %v204
      %v305 = vpop.f32.mrf.mxu0
      %v306 = vadd.f32 %v262, %v305
      %307 = vmatmul.f32.gmra.mxu0 %v205
      %v308 = vpop.f32.mrf.mxu0
      %v309 = vadd.f32 %v262, %v308
      %310 = vmatmul.f32.gmra.mxu0 %v206
      %v311 = vpop.f32.mrf.mxu0
      %v312 = vadd.f32 %v262, %v311
      %313 = vmatmul.f32.gmra.mxu0 %v207
      %v314 = vpop.f32.mrf.mxu0
      %v315 = vadd.f32 %v262, %v314
      %316 = vmatmul.f32.gmra.mxu0 %v208
      %v317 = vpop.f32.mrf.mxu0
      %v318 = vadd.f32 %v262, %v317
      %319 = vmatmul.f32.gmra.mxu0 %v209
      %v320 = vpop.f32.mrf.mxu0
      %v321 = vadd.f32 %v262, %v320
      %322 = vmatmul.f32.gmra.mxu0 %v210
      %v323 = vpop.f32.mrf.mxu0
      %v324 = vadd.f32 %v262, %v323
      %325 = vmatmul.f32.gmra.mxu0 %v211
      %v326 = vpop.f32.mrf.mxu0
      %v327 = vadd.f32 %v262, %v326
      %328 = vmatmul.f32.gmra.mxu0 %v212
      %v329 = vpop.f32.mrf.mxu0
      %v330 = vadd.f32 %v262, %v329
      %331 = vmatmul.f32.gmra.mxu0 %v213
      %v332 = vpop.f32.mrf.mxu0
      %v333 = vadd.f32 %v262, %v332
      %334 = vmatmul.f32.gmra.mxu0 %v214
      %v335 = vpop.f32.mrf.mxu0
      %v336 = vadd.f32 %v262, %v335
      %337 = vmatmul.f32.gmra.mxu0 %v215
      %v338 = vpop.f32.mrf.mxu0
      %v339 = vadd.f32 %v262, %v338
      %340 = vmatmul.f32.gmra.mxu0 %v216
      %v341 = vpop.f32.mrf.mxu0
      %v342 = vadd.f32 %v262, %v341
      %343 = vmatmul.f32.gmra.mxu0 %v217
      %v344 = vpop.f32.mrf.mxu0
      %v345 = vadd.f32 %v262, %v344
      %346 = vmatmul.f32.gmra.mxu0 %v218
      %v347 = vpop.f32.mrf.mxu0
      %v348 = vadd.f32 %v262, %v347
      %349 = vmatmul.f32.gmra.mxu0 %v219
      %v350 = vpop.f32.mrf.mxu0
      %v351 = vadd.f32 %v262, %v350
      %352 = vmatmul.f32.gmra.mxu0 %v220
      %v353 = vpop.f32.mrf.mxu0
      %v354 = vadd.f32 %v262, %v353
      %355 = vmatmul.f32.gmra.mxu0 %v221
      %v356 = vpop.f32.mrf.mxu0
      %v357 = vadd.f32 %v262, %v356
      %358 = vmatmul.f32.gmra.mxu0 %v222
      %v359 = vpop.f32.mrf.mxu0
      %v360 = vadd.f32 %v262, %v359
      %361 = vmatmul.f32.gmra.mxu0 %v223
      %v362 = vpop.f32.mrf.mxu0
      %v363 = vadd.f32 %v262, %v362
      %364 = vmatmul.f32.gmra.mxu0 %v224
      %v365 = vpop.f32.mrf.mxu0
      %v366 = vadd.f32 %v262, %v365
      %367 = vmatmul.f32.gmra.mxu0 %v225
      %v368 = vpop.f32.mrf.mxu0
      %v369 = vadd.f32 %v262, %v368
      %370 = vmatmul.f32.gmra.mxu0 %v226
      %v371 = vpop.f32.mrf.mxu0
      %v372 = vadd.f32 %v262, %v371
      %373 = vmatmul.f32.gmra.mxu0 %v227
      %v374 = vpop.f32.mrf.mxu0
      %v375 = vadd.f32 %v262, %v374
      %376 = vmatmul.f32.gmra.mxu0 %v228
      %v377 = vpop.f32.mrf.mxu0
      %v378 = vadd.f32 %v262, %v377
      %379 = vmatmul.f32.gmra.mxu0 %v229
      %v380 = vpop.f32.mrf.mxu0
      %v381 = vadd.f32 %v262, %v380
      %382 = vmatmul.f32.gmra.mxu0 %v230
      %v383 = vpop.f32.mrf.mxu0
      %v384 = vadd.f32 %v262, %v383
      %385 = vmatmul.f32.gmra.mxu0 %v231
      %v386 = vpop.f32.mrf.mxu0
      %v387 = vadd.f32 %v262, %v386
      %388 = vmatmul.f32.gmra.mxu0 %v232
      %v389 = vpop.f32.mrf.mxu0
      %v390 = vadd.f32 %v262, %v389
      %391 = vmatmul.f32.gmra.mxu0 %v233
      %v392 = vpop.f32.mrf.mxu0
      %v393 = vadd.f32 %v262, %v392
      %394 = vmatmul.f32.gmra.mxu0 %v234
      %v395 = vpop.f32.mrf.mxu0
      %v396 = vadd.f32 %v262, %v395
      %397 = vmatmul.f32.gmra.mxu0 %v235
      %v398 = vpop.f32.mrf.mxu0
      %v399 = vadd.f32 %v262, %v398
      %400 = vmatmul.f32.gmra.mxu0 %v236
      %v401 = vpop.f32.mrf.mxu0
      %v402 = vadd.f32 %v262, %v401
      %403 = vmatmul.f32.gmra.mxu0 %v237
      %v404 = vpop.f32.mrf.mxu0
      %v405 = vadd.f32 %v262, %v404
      %406 = vmatmul.f32.gmra.mxu0 %v238
      %v407 = vpop.f32.mrf.mxu0
      %v408 = vadd.f32 %v262, %v407
      %409 = vmatmul.f32.gmra.mxu0 %v239
      %v410 = vpop.f32.mrf.mxu0
      %v411 = vadd.f32 %v262, %v410
      %412 = vmatmul.f32.gmra.mxu0 %v240
      %v413 = vpop.f32.mrf.mxu0
      %v414 = vadd.f32 %v262, %v413
      %415 = vmatmul.f32.gmra.mxu0 %v241
      %v416 = vpop.f32.mrf.mxu0
      %v417 = vadd.f32 %v262, %v416
      %418 = vmatmul.f32.gmra.mxu0 %v242
      %v419 = vpop.f32.mrf.mxu0
      %v420 = vadd.f32 %v262, %v419
      %421 = vmatmul.f32.gmra.mxu0 %v243
      %v422 = vpop.f32.mrf.mxu0
      %v423 = vadd.f32 %v262, %v422
      %424 = vdwg.mxu0
      %425 = vst [vmem:[#allocation2] sm:$0xff] %v282
      %426 = vst [vmem:[#allocation2 + $0x8] sm:$0xff] %v285
      %427 = vst [vmem:[#allocation2 + $0x10] sm:$0xff] %v288
      %428 = vst [vmem:[#allocation2 + $0x18] sm:$0xff] %v291
      %429 = vst [vmem:[#allocation2 + $0x20] sm:$0xff] %v294
      %430 = vst [vmem:[#allocation2 + $0x28] sm:$0xff] %v297
      %431 = vst [vmem:[#allocation2 + $0x30] sm:$0xff] %v300
      %432 = vst [vmem:[#allocation2 + $0x38] sm:$0xff] %v303
      %433 = vst [vmem:[#allocation2 + $0x40] sm:$0xff] %v306
      %434 = vst [vmem:[#allocation2 + $0x48] sm:$0xff] %v309
      %435 = vst [vmem:[#allocation2 + $0x50] sm:$0xff] %v312
      %436 = vst [vmem:[#allocation2 + $0x58] sm:$0xff] %v315
      %437 = vst [vmem:[#allocation2 + $0x60] sm:$0xff] %v318
      %438 = vst [vmem:[#allocation2 + $0x68] sm:$0xff] %v321
      %439 = vst [vmem:[#allocation2 + $0x70] sm:$0xff] %v324
      %440 = vst [vmem:[#allocation2 + $0x78] sm:$0xff] %v327
      %441 = vst [vmem:[#allocation2 + $0x80] sm:$0xff] %v330
      %442 = vst [vmem:[#allocation2 + $0x88] sm:$0xff] %v333
      %443 = vst [vmem:[#allocation2 + $0x90] sm:$0xff] %v336
      %444 = vst [vmem:[#allocation2 + $0x98] sm:$0xff] %v339
      %445 = vst [vmem:[#allocation2 + $0xa0] sm:$0xff] %v342
      %446 = vst [vmem:[#allocation2 + $0xa8] sm:$0xff] %v345
      %447 = vst [vmem:[#allocation2 + $0xb0] sm:$0xff] %v348
      %448 = vst [vmem:[#allocation2 + $0xb8] sm:$0xff] %v351
      %449 = vst [vmem:[#allocation2 + $0xc0] sm:$0xff] %v354
      %450 = vst [vmem:[#allocation2 + $0xc8] sm:$0xff] %v357
      %451 = vst [vmem:[#allocation2 + $0xd0] sm:$0xff] %v360
      %452 = vst [vmem:[#allocation2 + $0xd8] sm:$0xff] %v363
      %453 = vst [vmem:[#allocation2 + $0xe0] sm:$0xff] %v366
      %454 = vst [vmem:[#allocation2 + $0xe8] sm:$0xff] %v369
      %455 = vst [vmem:[#allocation2 + $0xf0] sm:$0xff] %v372
      %456 = vst [vmem:[#allocation2 + $0xf8] sm:$0xff] %v375
      %457 = vst [vmem:[#allocation2 + $0x100] sm:$0xff] %v378
      %458 = vst [vmem:[#allocation2 + $0x108] sm:$0xff] %v381
      %459 = vst [vmem:[#allocation2 + $0x110] sm:$0xff] %v384
      %460 = vst [vmem:[#allocation2 + $0x118] sm:$0xff] %v387
      %461 = vst [vmem:[#allocation2 + $0x120] sm:$0xff] %v390
      %462 = vst [vmem:[#allocation2 + $0x128] sm:$0xff] %v393
      %463 = vst [vmem:[#allocation2 + $0x130] sm:$0xff] %v396
      %464 = vst [vmem:[#allocation2 + $0x138] sm:$0xff] %v399
      %465 = vst [vmem:[#allocation2 + $0x140] sm:$0xff] %v402
      %466 = vst [vmem:[#allocation2 + $0x148] sm:$0xff] %v405
      %467 = vst [vmem:[#allocation2 + $0x150] sm:$0xff] %v408
      %468 = vst [vmem:[#allocation2 + $0x158] sm:$0xff] %v411
      %469 = vst [vmem:[#allocation2 + $0x160] sm:$0xff] %v414
      %470 = vst [vmem:[#allocation2 + $0x168] sm:$0xff] %v417
      %471 = vst [vmem:[#allocation2 + $0x170] sm:$0xff] %v420
      %472 = vst [vmem:[#allocation2 + $0x178] sm:$0xff] %v423
      %s473 = sadd.s32 %s194, 24
      %v474 = vld [vmem:[#allocation2] sm:$0xff]
      %v475 = vld [vmem:[#allocation2 + $0x8] sm:$0xff]
      %v476 = vld [vmem:[#allocation2 + $0x10] sm:$0xff]
      %v477 = vld [vmem:[#allocation2 + $0x18] sm:$0xff]
      %v478 = vld [vmem:[#allocation2 + $0x20] sm:$0xff]
      %v479 = vld [vmem:[#allocation2 + $0x28] sm:$0xff]
      %v480 = vld [vmem:[#allocation2 + $0x30] sm:$0xff]
      %v481 = vld [vmem:[#allocation2 + $0x38] sm:$0xff]
      %v482 = vld [vmem:[#allocation2 + $0x40] sm:$0xff]
      %v483 = vld [vmem:[#allocation2 + $0x48] sm:$0xff]
      %v484 = vld [vmem:[#allocation2 + $0x50] sm:$0xff]
      %v485 = vld [vmem:[#allocation2 + $0x58] sm:$0xff]
      %v486 = vld [vmem:[#allocation2 + $0x60] sm:$0xff]
      %v487 = vld [vmem:[#allocation2 + $0x68] sm:$0xff]
      %v488 = vld [vmem:[#allocation2 + $0x70] sm:$0xff]
      %v489 = vld [vmem:[#allocation2 + $0x78] sm:$0xff]
      %v490 = vld [vmem:[#allocation2 + $0x80] sm:$0xff]
      %v491 = vld [vmem:[#allocation2 + $0x88] sm:$0xff]
      %v492 = vld [vmem:[#allocation2 + $0x90] sm:$0xff]
      %v493 = vld [vmem:[#allocation2 + $0x98] sm:$0xff]
      %v494 = vld [vmem:[#allocation2 + $0xa0] sm:$0xff]
      %v495 = vld [vmem:[#allocation2 + $0xa8] sm:$0xff]
      %v496 = vld [vmem:[#allocation2 + $0xb0] sm:$0xff]
      %v497 = vld [vmem:[#allocation2 + $0xb8] sm:$0xff]
      %v498 = vld [vmem:[#allocation2 + $0xc0] sm:$0xff]
      %v499 = vld [vmem:[#allocation2 + $0xc8] sm:$0xff]
      %v500 = vld [vmem:[#allocation2 + $0xd0] sm:$0xff]
      %v501 = vld [vmem:[#allocation2 + $0xd8] sm:$0xff]
      %v502 = vld [vmem:[#allocation2 + $0xe0] sm:$0xff]
      %v503 = vld [vmem:[#allocation2 + $0xe8] sm:$0xff]
      %v504 = vld [vmem:[#allocation2 + $0xf0] sm:$0xff]
      %v505 = vld [vmem:[#allocation2 + $0xf8] sm:$0xff]
      %v506 = vld [vmem:[#allocation2 + $0x100] sm:$0xff]
      %v507 = vld [vmem:[#allocation2 + $0x108] sm:$0xff]
      %v508 = vld [vmem:[#allocation2 + $0x110] sm:$0xff]
      %v509 = vld [vmem:[#allocation2 + $0x118] sm:$0xff]
      %v510 = vld [vmem:[#allocation2 + $0x120] sm:$0xff]
      %v511 = vld [vmem:[#allocation2 + $0x128] sm:$0xff]
      %v512 = vld [vmem:[#allocation2 + $0x130] sm:$0xff]
      %v513 = vld [vmem:[#allocation2 + $0x138] sm:$0xff]
      %v514 = vld [vmem:[#allocation2 + $0x140] sm:$0xff]
      %v515 = vld [vmem:[#allocation2 + $0x148] sm:$0xff]
      %v516 = vld [vmem:[#allocation2 + $0x150] sm:$0xff]
      %v517 = vld [vmem:[#allocation2 + $0x158] sm:$0xff]
      %v518 = vld [vmem:[#allocation2 + $0x160] sm:$0xff]
      %v519 = vld [vmem:[#allocation2 + $0x168] sm:$0xff]
      %v520 = vld [vmem:[#allocation2 + $0x170] sm:$0xff]
      %v521 = vld [vmem:[#allocation2 + $0x178] sm:$0xff]
      %s522 = scalar_lea.vmem %s183, %s473
      %v523 = vld [vmem:[%s522] sm:$0xff]
      %v524 = vld [vmem:[%s522 + $0x8] sm:$0xff]
      %v525 = vld [vmem:[%s522 + $0x10] sm:$0xff]
      %v526 = vld [vmem:[%s522 + $0x18] sm:$0xff]
      %v527 = vld [vmem:[%s522 + $0x20] sm:$0xff]
      %v528 = vld [vmem:[%s522 + $0x28] sm:$0xff]
      %v529 = vld [vmem:[%s522 + $0x30] sm:$0xff]
      %v530 = vld [vmem:[%s522 + $0x38] sm:$0xff]
      %v531 = vld [vmem:[%s522 + $0x40] sm:$0xff]
      %v532 = vld [vmem:[%s522 + $0x48] sm:$0xff]
      %v533 = vld [vmem:[%s522 + $0x50] sm:$0xff]
      %v534 = vld [vmem:[%s522 + $0x58] sm:$0xff]
      %v535 = vld [vmem:[%s522 + $0x60] sm:$0xff]
      %v536 = vld [vmem:[%s522 + $0x68] sm:$0xff]
      %v537 = vld [vmem:[%s522 + $0x70] sm:$0xff]
      %v538 = vld [vmem:[%s522 + $0x78] sm:$0xff]
      %v539 = vld [vmem:[%s522 + $0x80] sm:$0xff]
      %v540 = vld [vmem:[%s522 + $0x88] sm:$0xff]
      %v541 = vld [vmem:[%s522 + $0x90] sm:$0xff]
      %v542 = vld [vmem:[%s522 + $0x98] sm:$0xff]
      %v543 = vld [vmem:[%s522 + $0xa0] sm:$0xff]
      %v544 = vld [vmem:[%s522 + $0xa8] sm:$0xff]
      %v545 = vld [vmem:[%s522 + $0xb0] sm:$0xff]
      %v546 = vld [vmem:[%s522 + $0xb8] sm:$0xff]
      %v547 = vld [vmem:[%s522 + $0xc0] sm:$0xff]
      %v548 = vld [vmem:[%s522 + $0xc8] sm:$0xff]
      %v549 = vld [vmem:[%s522 + $0xd0] sm:$0xff]
      %v550 = vld [vmem:[%s522 + $0xd8] sm:$0xff]
      %v551 = vld [vmem:[%s522 + $0xe0] sm:$0xff]
      %v552 = vld [vmem:[%s522 + $0xe8] sm:$0xff]
      %v553 = vld [vmem:[%s522 + $0xf0] sm:$0xff]
      %v554 = vld [vmem:[%s522 + $0xf8] sm:$0xff]
      %v555 = vld [vmem:[%s522 + $0x100] sm:$0xff]
      %v556 = vld [vmem:[%s522 + $0x108] sm:$0xff]
      %v557 = vld [vmem:[%s522 + $0x110] sm:$0xff]
      %v558 = vld [vmem:[%s522 + $0x118] sm:$0xff]
      %v559 = vld [vmem:[%s522 + $0x120] sm:$0xff]
      %v560 = vld [vmem:[%s522 + $0x128] sm:$0xff]
      %v561 = vld [vmem:[%s522 + $0x130] sm:$0xff]
      %v562 = vld [vmem:[%s522 + $0x138] sm:$0xff]
      %v563 = vld [vmem:[%s522 + $0x140] sm:$0xff]
      %v564 = vld [vmem:[%s522 + $0x148] sm:$0xff]
      %v565 = vld [vmem:[%s522 + $0x150] sm:$0xff]
      %v566 = vld [vmem:[%s522 + $0x158] sm:$0xff]
      %v567 = vld [vmem:[%s522 + $0x160] sm:$0xff]
      %v568 = vld [vmem:[%s522 + $0x168] sm:$0xff]
      %v569 = vld [vmem:[%s522 + $0x170] sm:$0xff]
      %v570 = vld [vmem:[%s522 + $0x178] sm:$0xff]
      %s571 = scalar_lea.vmem %s1, 128
      %v572 = vld [vmem:[%s571] sm:$0xff]
      %v573 = vld [vmem:[%s571 + $0x8] sm:$0xff]
      %v574 = vld [vmem:[%s571 + $0x10] sm:$0xff]
      %v575 = vld [vmem:[%s571 + $0x18] sm:$0xff]
      %v576 = vld [vmem:[%s571 + $0x20] sm:$0xff]
      %v577 = vld [vmem:[%s571 + $0x28] sm:$0xff]
      %v578 = vld [vmem:[%s571 + $0x30] sm:$0xff]
      %v579 = vld [vmem:[%s571 + $0x38] sm:$0xff]
      %v580 = vld [vmem:[%s571 + $0x40] sm:$0xff]
      %v581 = vld [vmem:[%s571 + $0x48] sm:$0xff]
      %v582 = vld [vmem:[%s571 + $0x50] sm:$0xff]
      %v583 = vld [vmem:[%s571 + $0x58] sm:$0xff]
      %v584 = vld [vmem:[%s571 + $0x60] sm:$0xff]
      %v585 = vld [vmem:[%s571 + $0x68] sm:$0xff]
      %v586 = vld [vmem:[%s571 + $0x70] sm:$0xff]
      %v587 = vld [vmem:[%s571 + $0x78] sm:$0xff]
      %588 = vmatpush.msra.mxu0 %v587
      %589 = vmatpush.msra.mxu0 %v586
      %590 = vmatpush.msra.mxu0 %v585
      %591 = vmatpush.msra.mxu0 %v584
      %592 = vmatpush.msra.mxu0 %v583
      %593 = vmatpush.msra.mxu0 %v582
      %594 = vmatpush.msra.mxu0 %v581
      %595 = vmatpush.msra.mxu0 %v580
      %596 = vmatpush.msra.mxu0 %v579
      %597 = vmatpush.msra.mxu0 %v578
      %598 = vmatpush.msra.mxu0 %v577
      %599 = vmatpush.msra.mxu0 %v576
      %600 = vmatpush.msra.mxu0 %v575
      %601 = vmatpush.msra.mxu0 %v574
      %602 = vmatpush.msra.mxu0 %v573
      %603 = vmatpush.msra.mxu0 %v572
      %604 = vmatmul.f32.gmra.mxu0 %v523
      %v605 = vpop.f32.mrf.mxu0
      %v606 = vadd.f32 0.0, %v605
      %607 = vmatmul.f32.gmra.mxu0 %v524
      %v608 = vpop.f32.mrf.mxu0
      %v609 = vadd.f32 0.0, %v608
      %610 = vmatmul.f32.gmra.mxu0 %v525
      %v611 = vpop.f32.mrf.mxu0
      %v612 = vadd.f32 0.0, %v611
      %613 = vmatmul.f32.gmra.mxu0 %v526
      %v614 = vpop.f32.mrf.mxu0
      %v615 = vadd.f32 0.0, %v614
      %616 = vmatmul.f32.gmra.mxu0 %v527
      %v617 = vpop.f32.mrf.mxu0
      %v618 = vadd.f32 0.0, %v617
      %619 = vmatmul.f32.gmra.mxu0 %v528
      %v620 = vpop.f32.mrf.mxu0
      %v621 = vadd.f32 0.0, %v620
      %622 = vmatmul.f32.gmra.mxu0 %v529
      %v623 = vpop.f32.mrf.mxu0
      %v624 = vadd.f32 0.0, %v623
      %625 = vmatmul.f32.gmra.mxu0 %v530
      %v626 = vpop.f32.mrf.mxu0
      %v627 = vadd.f32 0.0, %v626
      %628 = vmatmul.f32.gmra.mxu0 %v531
      %v629 = vpop.f32.mrf.mxu0
      %v630 = vadd.f32 0.0, %v629
      %631 = vmatmul.f32.gmra.mxu0 %v532
      %v632 = vpop.f32.mrf.mxu0
      %v633 = vadd.f32 0.0, %v632
      %634 = vmatmul.f32.gmra.mxu0 %v533
      %v635 = vpop.f32.mrf.mxu0
      %v636 = vadd.f32 0.0, %v635
      %637 = vmatmul.f32.gmra.mxu0 %v534
      %v638 = vpop.f32.mrf.mxu0
      %v639 = vadd.f32 0.0, %v638
      %640 = vmatmul.f32.gmra.mxu0 %v535
      %v641 = vpop.f32.mrf.mxu0
      %v642 = vadd.f32 0.0, %v641
      %643 = vmatmul.f32.gmra.mxu0 %v536
      %v644 = vpop.f32.mrf.mxu0
      %v645 = vadd.f32 0.0, %v644
      %646 = vmatmul.f32.gmra.mxu0 %v537
      %v647 = vpop.f32.mrf.mxu0
      %v648 = vadd.f32 0.0, %v647
      %649 = vmatmul.f32.gmra.mxu0 %v538
      %v650 = vpop.f32.mrf.mxu0
      %v651 = vadd.f32 0.0, %v650
      %652 = vmatmul.f32.gmra.mxu0 %v539
      %v653 = vpop.f32.mrf.mxu0
      %v654 = vadd.f32 0.0, %v653
      %655 = vmatmul.f32.gmra.mxu0 %v540
      %v656 = vpop.f32.mrf.mxu0
      %v657 = vadd.f32 0.0, %v656
      %658 = vmatmul.f32.gmra.mxu0 %v541
      %v659 = vpop.f32.mrf.mxu0
      %v660 = vadd.f32 0.0, %v659
      %661 = vmatmul.f32.gmra.mxu0 %v542
      %v662 = vpop.f32.mrf.mxu0
      %v663 = vadd.f32 0.0, %v662
      %664 = vmatmul.f32.gmra.mxu0 %v543
      %v665 = vpop.f32.mrf.mxu0
      %v666 = vadd.f32 0.0, %v665
      %667 = vmatmul.f32.gmra.mxu0 %v544
      %v668 = vpop.f32.mrf.mxu0
      %v669 = vadd.f32 0.0, %v668
      %670 = vmatmul.f32.gmra.mxu0 %v545
      %v671 = vpop.f32.mrf.mxu0
      %v672 = vadd.f32 0.0, %v671
      %673 = vmatmul.f32.gmra.mxu0 %v546
      %v674 = vpop.f32.mrf.mxu0
      %v675 = vadd.f32 0.0, %v674
      %676 = vmatmul.f32.gmra.mxu0 %v547
      %v677 = vpop.f32.mrf.mxu0
      %v678 = vadd.f32 0.0, %v677
      %679 = vmatmul.f32.gmra.mxu0 %v548
      %v680 = vpop.f32.mrf.mxu0
      %v681 = vadd.f32 0.0, %v680
      %682 = vmatmul.f32.gmra.mxu0 %v549
      %v683 = vpop.f32.mrf.mxu0
      %v684 = vadd.f32 0.0, %v683
      %685 = vmatmul.f32.gmra.mxu0 %v550
      %v686 = vpop.f32.mrf.mxu0
      %v687 = vadd.f32 0.0, %v686
      %688 = vmatmul.f32.gmra.mxu0 %v551
      %v689 = vpop.f32.mrf.mxu0
      %v690 = vadd.f32 0.0, %v689
      %691 = vmatmul.f32.gmra.mxu0 %v552
      %v692 = vpop.f32.mrf.mxu0
      %v693 = vadd.f32 0.0, %v692
      %694 = vmatmul.f32.gmra.mxu0 %v553
      %v695 = vpop.f32.mrf.mxu0
      %v696 = vadd.f32 0.0, %v695
      %697 = vmatmul.f32.gmra.mxu0 %v554
      %v698 = vpop.f32.mrf.mxu0
      %v699 = vadd.f32 0.0, %v698
      %700 = vmatmul.f32.gmra.mxu0 %v555
      %v701 = vpop.f32.mrf.mxu0
      %v702 = vadd.f32 0.0, %v701
      %703 = vmatmul.f32.gmra.mxu0 %v556
      %v704 = vpop.f32.mrf.mxu0
      %v705 = vadd.f32 0.0, %v704
      %706 = vmatmul.f32.gmra.mxu0 %v557
      %v707 = vpop.f32.mrf.mxu0
      %v708 = vadd.f32 0.0, %v707
      %709 = vmatmul.f32.gmra.mxu0 %v558
      %v710 = vpop.f32.mrf.mxu0
      %v711 = vadd.f32 0.0, %v710
      %712 = vmatmul.f32.gmra.mxu0 %v559
      %v713 = vpop.f32.mrf.mxu0
      %v714 = vadd.f32 0.0, %v713
      %715 = vmatmul.f32.gmra.mxu0 %v560
      %v716 = vpop.f32.mrf.mxu0
      %v717 = vadd.f32 0.0, %v716
      %718 = vmatmul.f32.gmra.mxu0 %v561
      %v719 = vpop.f32.mrf.mxu0
      %v720 = vadd.f32 0.0, %v719
      %721 = vmatmul.f32.gmra.mxu0 %v562
      %v722 = vpop.f32.mrf.mxu0
      %v723 = vadd.f32 0.0, %v722
      %724 = vmatmul.f32.gmra.mxu0 %v563
      %v725 = vpop.f32.mrf.mxu0
      %v726 = vadd.f32 0.0, %v725
      %727 = vmatmul.f32.gmra.mxu0 %v564
      %v728 = vpop.f32.mrf.mxu0
      %v729 = vadd.f32 0.0, %v728
      %730 = vmatmul.f32.gmra.mxu0 %v565
      %v731 = vpop.f32.mrf.mxu0
      %v732 = vadd.f32 0.0, %v731
      %733 = vmatmul.f32.gmra.mxu0 %v566
      %v734 = vpop.f32.mrf.mxu0
      %v735 = vadd.f32 0.0, %v734
      %736 = vmatmul.f32.gmra.mxu0 %v567
      %v737 = vpop.f32.mrf.mxu0
      %v738 = vadd.f32 0.0, %v737
      %739 = vmatmul.f32.gmra.mxu0 %v568
      %v740 = vpop.f32.mrf.mxu0
      %v741 = vadd.f32 0.0, %v740
      %742 = vmatmul.f32.gmra.mxu0 %v569
      %v743 = vpop.f32.mrf.mxu0
      %v744 = vadd.f32 0.0, %v743
      %745 = vmatmul.f32.gmra.mxu0 %v570
      %v746 = vpop.f32.mrf.mxu0
      %v747 = vadd.f32 0.0, %v746
      %748 = vdwg.mxu0
      %v749 = vadd.f32 %v474, %v606
      %v750 = vadd.f32 %v475, %v609
      %v751 = vadd.f32 %v476, %v612
      %v752 = vadd.f32 %v477, %v615
      %v753 = vadd.f32 %v478, %v618
      %v754 = vadd.f32 %v479, %v621
      %v755 = vadd.f32 %v480, %v624
      %v756 = vadd.f32 %v481, %v627
      %v757 = vadd.f32 %v482, %v630
      %v758 = vadd.f32 %v483, %v633
      %v759 = vadd.f32 %v484, %v636
      %v760 = vadd.f32 %v485, %v639
      %v761 = vadd.f32 %v486, %v642
      %v762 = vadd.f32 %v487, %v645
      %v763 = vadd.f32 %v488, %v648
      %v764 = vadd.f32 %v489, %v651
      %v765 = vadd.f32 %v490, %v654
      %v766 = vadd.f32 %v491, %v657
      %v767 = vadd.f32 %v492, %v660
      %v768 = vadd.f32 %v493, %v663
      %v769 = vadd.f32 %v494, %v666
      %v770 = vadd.f32 %v495, %v669
      %v771 = vadd.f32 %v496, %v672
      %v772 = vadd.f32 %v497, %v675
      %v773 = vadd.f32 %v498, %v678
      %v774 = vadd.f32 %v499, %v681
      %v775 = vadd.f32 %v500, %v684
      %v776 = vadd.f32 %v501, %v687
      %v777 = vadd.f32 %v502, %v690
      %v778 = vadd.f32 %v503, %v693
      %v779 = vadd.f32 %v504, %v696
      %v780 = vadd.f32 %v505, %v699
      %v781 = vadd.f32 %v506, %v702
      %v782 = vadd.f32 %v507, %v705
      %v783 = vadd.f32 %v508, %v708
      %v784 = vadd.f32 %v509, %v711
      %v785 = vadd.f32 %v510, %v714
      %v786 = vadd.f32 %v511, %v717
      %v787 = vadd.f32 %v512, %v720
      %v788 = vadd.f32 %v513, %v723
      %v789 = vadd.f32 %v514, %v726
      %v790 = vadd.f32 %v515, %v729
      %v791 = vadd.f32 %v516, %v732
      %v792 = vadd.f32 %v517, %v735
      %v793 = vadd.f32 %v518, %v738
      %v794 = vadd.f32 %v519, %v741
      %v795 = vadd.f32 %v520, %v744
      %v796 = vadd.f32 %v521, %v747
      %797 = vst [vmem:[#allocation2] sm:$0xff] %v749
      %798 = vst [vmem:[#allocation2 + $0x8] sm:$0xff] %v750
      %799 = vst [vmem:[#allocation2 + $0x10] sm:$0xff] %v751
      %800 = vst [vmem:[#allocation2 + $0x18] sm:$0xff] %v752
      %801 = vst [vmem:[#allocation2 + $0x20] sm:$0xff] %v753
      %802 = vst [vmem:[#allocation2 + $0x28] sm:$0xff] %v754
      %803 = vst [vmem:[#allocation2 + $0x30] sm:$0xff] %v755
      %804 = vst [vmem:[#allocation2 + $0x38] sm:$0xff] %v756
      %805 = vst [vmem:[#allocation2 + $0x40] sm:$0xff] %v757
      %806 = vst [vmem:[#allocation2 + $0x48] sm:$0xff] %v758
      %807 = vst [vmem:[#allocation2 + $0x50] sm:$0xff] %v759
      %808 = vst [vmem:[#allocation2 + $0x58] sm:$0xff] %v760
      %809 = vst [vmem:[#allocation2 + $0x60] sm:$0xff] %v761
      %810 = vst [vmem:[#allocation2 + $0x68] sm:$0xff] %v762
      %811 = vst [vmem:[#allocation2 + $0x70] sm:$0xff] %v763
      %812 = vst [vmem:[#allocation2 + $0x78] sm:$0xff] %v764
      %813 = vst [vmem:[#allocation2 + $0x80] sm:$0xff] %v765
      %814 = vst [vmem:[#allocation2 + $0x88] sm:$0xff] %v766
      %815 = vst [vmem:[#allocation2 + $0x90] sm:$0xff] %v767
      %816 = vst [vmem:[#allocation2 + $0x98] sm:$0xff] %v768
      %817 = vst [vmem:[#allocation2 + $0xa0] sm:$0xff] %v769
      %818 = vst [vmem:[#allocation2 + $0xa8] sm:$0xff] %v770
      %819 = vst [vmem:[#allocation2 + $0xb0] sm:$0xff] %v771
      %820 = vst [vmem:[#allocation2 + $0xb8] sm:$0xff] %v772
      %821 = vst [vmem:[#allocation2 + $0xc0] sm:$0xff] %v773
      %822 = vst [vmem:[#allocation2 + $0xc8] sm:$0xff] %v774
      %823 = vst [vmem:[#allocation2 + $0xd0] sm:$0xff] %v775
      %824 = vst [vmem:[#allocation2 + $0xd8] sm:$0xff] %v776
      %825 = vst [vmem:[#allocation2 + $0xe0] sm:$0xff] %v777
      %826 = vst [vmem:[#allocation2 + $0xe8] sm:$0xff] %v778
      %827 = vst [vmem:[#allocation2 + $0xf0] sm:$0xff] %v779
      %828 = vst [vmem:[#allocation2 + $0xf8] sm:$0xff] %v780
      %829 = vst [vmem:[#allocation2 + $0x100] sm:$0xff] %v781
      %830 = vst [vmem:[#allocation2 + $0x108] sm:$0xff] %v782
      %831 = vst [vmem:[#allocation2 + $0x110] sm:$0xff] %v783
      %832 = vst [vmem:[#allocation2 + $0x118] sm:$0xff] %v784
      %833 = vst [vmem:[#allocation2 + $0x120] sm:$0xff] %v785
      %834 = vst [vmem:[#allocation2 + $0x128] sm:$0xff] %v786
      %835 = vst [vmem:[#allocation2 + $0x130] sm:$0xff] %v787
      %836 = vst [vmem:[#allocation2 + $0x138] sm:$0xff] %v788
      %837 = vst [vmem:[#allocation2 + $0x140] sm:$0xff] %v789
      %838 = vst [vmem:[#allocation2 + $0x148] sm:$0xff] %v790
      %839 = vst [vmem:[#allocation2 + $0x150] sm:$0xff] %v791
      %840 = vst [vmem:[#allocation2 + $0x158] sm:$0xff] %v792
      %841 = vst [vmem:[#allocation2 + $0x160] sm:$0xff] %v793
      %842 = vst [vmem:[#allocation2 + $0x168] sm:$0xff] %v794
      %843 = vst [vmem:[#allocation2 + $0x170] sm:$0xff] %v795
      %844 = vst [vmem:[#allocation2 + $0x178] sm:$0xff] %v796
      %s845 = sadd.s32 %s194, 48
      %v846 = vld [vmem:[#allocation2] sm:$0xff]
      %v847 = vld [vmem:[#allocation2 + $0x8] sm:$0xff]
      %v848 = vld [vmem:[#allocation2 + $0x10] sm:$0xff]
      %v849 = vld [vmem:[#allocation2 + $0x18] sm:$0xff]
      %v850 = vld [vmem:[#allocation2 + $0x20] sm:$0xff]
      %v851 = vld [vmem:[#allocation2 + $0x28] sm:$0xff]
      %v852 = vld [vmem:[#allocation2 + $0x30] sm:$0xff]
      %v853 = vld [vmem:[#allocation2 + $0x38] sm:$0xff]
      %v854 = vld [vmem:[#allocation2 + $0x40] sm:$0xff]
      %v855 = vld [vmem:[#allocation2 + $0x48] sm:$0xff]
      %v856 = vld [vmem:[#allocation2 + $0x50] sm:$0xff]
      %v857 = vld [vmem:[#allocation2 + $0x58] sm:$0xff]
      %v858 = vld [vmem:[#allocation2 + $0x60] sm:$0xff]
      %v859 = vld [vmem:[#allocation2 + $0x68] sm:$0xff]
      %v860 = vld [vmem:[#allocation2 + $0x70] sm:$0xff]
      %v861 = vld [vmem:[#allocation2 + $0x78] sm:$0xff]
      %v862 = vld [vmem:[#allocation2 + $0x80] sm:$0xff]
      %v863 = vld [vmem:[#allocation2 + $0x88] sm:$0xff]
      %v864 = vld [vmem:[#allocation2 + $0x90] sm:$0xff]
      %v865 = vld [vmem:[#allocation2 + $0x98] sm:$0xff]
      %v866 = vld [vmem:[#allocation2 + $0xa0] sm:$0xff]
      %v867 = vld [vmem:[#allocation2 + $0xa8] sm:$0xff]
      %v868 = vld [vmem:[#allocation2 + $0xb0] sm:$0xff]
      %v869 = vld [vmem:[#allocation2 + $0xb8] sm:$0xff]
      %v870 = vld [vmem:[#allocation2 + $0xc0] sm:$0xff]
      %v871 = vld [vmem:[#allocation2 + $0xc8] sm:$0xff]
      %v872 = vld [vmem:[#allocation2 + $0xd0] sm:$0xff]
      %v873 = vld [vmem:[#allocation2 + $0xd8] sm:$0xff]
      %v874 = vld [vmem:[#allocation2 + $0xe0] sm:$0xff]
      %v875 = vld [vmem:[#allocation2 + $0xe8] sm:$0xff]
      %v876 = vld [vmem:[#allocation2 + $0xf0] sm:$0xff]
      %v877 = vld [vmem:[#allocation2 + $0xf8] sm:$0xff]
      %v878 = vld [vmem:[#allocation2 + $0x100] sm:$0xff]
      %v879 = vld [vmem:[#allocation2 + $0x108] sm:$0xff]
      %v880 = vld [vmem:[#allocation2 + $0x110] sm:$0xff]
      %v881 = vld [vmem:[#allocation2 + $0x118] sm:$0xff]
      %v882 = vld [vmem:[#allocation2 + $0x120] sm:$0xff]
      %v883 = vld [vmem:[#allocation2 + $0x128] sm:$0xff]
      %v884 = vld [vmem:[#allocation2 + $0x130] sm:$0xff]
      %v885 = vld [vmem:[#allocation2 + $0x138] sm:$0xff]
      %v886 = vld [vmem:[#allocation2 + $0x140] sm:$0xff]
      %v887 = vld [vmem:[#allocation2 + $0x148] sm:$0xff]
      %v888 = vld [vmem:[#allocation2 + $0x150] sm:$0xff]
      %v889 = vld [vmem:[#allocation2 + $0x158] sm:$0xff]
      %v890 = vld [vmem:[#allocation2 + $0x160] sm:$0xff]
      %v891 = vld [vmem:[#allocation2 + $0x168] sm:$0xff]
      %v892 = vld [vmem:[#allocation2 + $0x170] sm:$0xff]
      %v893 = vld [vmem:[#allocation2 + $0x178] sm:$0xff]
      %s894 = scalar_lea.vmem %s183, %s845
      %v895 = vld [vmem:[%s894] sm:$0xff]
      %v896 = vld [vmem:[%s894 + $0x8] sm:$0xff]
      %v897 = vld [vmem:[%s894 + $0x10] sm:$0xff]
      %v898 = vld [vmem:[%s894 + $0x18] sm:$0xff]
      %v899 = vld [vmem:[%s894 + $0x20] sm:$0xff]
      %v900 = vld [vmem:[%s894 + $0x28] sm:$0xff]
      %v901 = vld [vmem:[%s894 + $0x30] sm:$0xff]
      %v902 = vld [vmem:[%s894 + $0x38] sm:$0xff]
      %v903 = vld [vmem:[%s894 + $0x40] sm:$0xff]
      %v904 = vld [vmem:[%s894 + $0x48] sm:$0xff]
      %v905 = vld [vmem:[%s894 + $0x50] sm:$0xff]
      %v906 = vld [vmem:[%s894 + $0x58] sm:$0xff]
      %v907 = vld [vmem:[%s894 + $0x60] sm:$0xff]
      %v908 = vld [vmem:[%s894 + $0x68] sm:$0xff]
      %v909 = vld [vmem:[%s894 + $0x70] sm:$0xff]
      %v910 = vld [vmem:[%s894 + $0x78] sm:$0xff]
      %v911 = vld [vmem:[%s894 + $0x80] sm:$0xff]
      %v912 = vld [vmem:[%s894 + $0x88] sm:$0xff]
      %v913 = vld [vmem:[%s894 + $0x90] sm:$0xff]
      %v914 = vld [vmem:[%s894 + $0x98] sm:$0xff]
      %v915 = vld [vmem:[%s894 + $0xa0] sm:$0xff]
      %v916 = vld [vmem:[%s894 + $0xa8] sm:$0xff]
      %v917 = vld [vmem:[%s894 + $0xb0] sm:$0xff]
      %v918 = vld [vmem:[%s894 + $0xb8] sm:$0xff]
      %v919 = vld [vmem:[%s894 + $0xc0] sm:$0xff]
      %v920 = vld [vmem:[%s894 + $0xc8] sm:$0xff]
      %v921 = vld [vmem:[%s894 + $0xd0] sm:$0xff]
      %v922 = vld [vmem:[%s894 + $0xd8] sm:$0xff]
      %v923 = vld [vmem:[%s894 + $0xe0] sm:$0xff]
      %v924 = vld [vmem:[%s894 + $0xe8] sm:$0xff]
      %v925 = vld [vmem:[%s894 + $0xf0] sm:$0xff]
      %v926 = vld [vmem:[%s894 + $0xf8] sm:$0xff]
      %v927 = vld [vmem:[%s894 + $0x100] sm:$0xff]
      %v928 = vld [vmem:[%s894 + $0x108] sm:$0xff]
      %v929 = vld [vmem:[%s894 + $0x110] sm:$0xff]
      %v930 = vld [vmem:[%s894 + $0x118] sm:$0xff]
      %v931 = vld [vmem:[%s894 + $0x120] sm:$0xff]
      %v932 = vld [vmem:[%s894 + $0x128] sm:$0xff]
      %v933 = vld [vmem:[%s894 + $0x130] sm:$0xff]
      %v934 = vld [vmem:[%s894 + $0x138] sm:$0xff]
      %v935 = vld [vmem:[%s894 + $0x140] sm:$0xff]
      %v936 = vld [vmem:[%s894 + $0x148] sm:$0xff]
      %v937 = vld [vmem:[%s894 + $0x150] sm:$0xff]
      %v938 = vld [vmem:[%s894 + $0x158] sm:$0xff]
      %v939 = vld [vmem:[%s894 + $0x160] sm:$0xff]
      %v940 = vld [vmem:[%s894 + $0x168] sm:$0xff]
      %v941 = vld [vmem:[%s894 + $0x170] sm:$0xff]
      %v942 = vld [vmem:[%s894 + $0x178] sm:$0xff]
      %s943 = scalar_lea.vmem %s1, 256
      %v944 = vld [vmem:[%s943] sm:$0xff]
      %v945 = vld [vmem:[%s943 + $0x8] sm:$0xff]
      %v946 = vld [vmem:[%s943 + $0x10] sm:$0xff]
      %v947 = vld [vmem:[%s943 + $0x18] sm:$0xff]
      %v948 = vld [vmem:[%s943 + $0x20] sm:$0xff]
      %v949 = vld [vmem:[%s943 + $0x28] sm:$0xff]
      %v950 = vld [vmem:[%s943 + $0x30] sm:$0xff]
      %v951 = vld [vmem:[%s943 + $0x38] sm:$0xff]
      %v952 = vld [vmem:[%s943 + $0x40] sm:$0xff]
      %v953 = vld [vmem:[%s943 + $0x48] sm:$0xff]
      %v954 = vld [vmem:[%s943 + $0x50] sm:$0xff]
      %v955 = vld [vmem:[%s943 + $0x58] sm:$0xff]
      %v956 = vld [vmem:[%s943 + $0x60] sm:$0xff]
      %v957 = vld [vmem:[%s943 + $0x68] sm:$0xff]
      %v958 = vld [vmem:[%s943 + $0x70] sm:$0xff]
      %v959 = vld [vmem:[%s943 + $0x78] sm:$0xff]
      %960 = vmatpush.msra.mxu0 %v959
      %961 = vmatpush.msra.mxu0 %v958
      %962 = vmatpush.msra.mxu0 %v957
      %963 = vmatpush.msra.mxu0 %v956
      %964 = vmatpush.msra.mxu0 %v955
      %965 = vmatpush.msra.mxu0 %v954
      %966 = vmatpush.msra.mxu0 %v953
      %967 = vmatpush.msra.mxu0 %v952
      %968 = vmatpush.msra.mxu0 %v951
      %969 = vmatpush.msra.mxu0 %v950
      %970 = vmatpush.msra.mxu0 %v949
      %971 = vmatpush.msra.mxu0 %v948
      %972 = vmatpush.msra.mxu0 %v947
      %973 = vmatpush.msra.mxu0 %v946
      %974 = vmatpush.msra.mxu0 %v945
      %975 = vmatpush.msra.mxu0 %v944
      %976 = vmatmul.f32.gmra.mxu0 %v895
      %v977 = vpop.f32.mrf.mxu0
      %v978 = vadd.f32 0.0, %v977
      %979 = vmatmul.f32.gmra.mxu0 %v896
      %v980 = vpop.f32.mrf.mxu0
      %v981 = vadd.f32 0.0, %v980
      %982 = vmatmul.f32.gmra.mxu0 %v897
      %v983 = vpop.f32.mrf.mxu0
      %v984 = vadd.f32 0.0, %v983
      %985 = vmatmul.f32.gmra.mxu0 %v898
      %v986 = vpop.f32.mrf.mxu0
      %v987 = vadd.f32 0.0, %v986
      %988 = vmatmul.f32.gmra.mxu0 %v899
      %v989 = vpop.f32.mrf.mxu0
      %v990 = vadd.f32 0.0, %v989
      %991 = vmatmul.f32.gmra.mxu0 %v900
      %v992 = vpop.f32.mrf.mxu0
      %v993 = vadd.f32 0.0, %v992
      %994 = vmatmul.f32.gmra.mxu0 %v901
      %v995 = vpop.f32.mrf.mxu0
      %v996 = vadd.f32 0.0, %v995
      %997 = vmatmul.f32.gmra.mxu0 %v902
      %v998 = vpop.f32.mrf.mxu0
      %v999 = vadd.f32 0.0, %v998
      %1000 = vmatmul.f32.gmra.mxu0 %v903
      %v1001 = vpop.f32.mrf.mxu0
      %v1002 = vadd.f32 0.0, %v1001
      %1003 = vmatmul.f32.gmra.mxu0 %v904
      %v1004 = vpop.f32.mrf.mxu0
      %v1005 = vadd.f32 0.0, %v1004
      %1006 = vmatmul.f32.gmra.mxu0 %v905
      %v1007 = vpop.f32.mrf.mxu0
      %v1008 = vadd.f32 0.0, %v1007
      %1009 = vmatmul.f32.gmra.mxu0 %v906
      %v1010 = vpop.f32.mrf.mxu0
      %v1011 = vadd.f32 0.0, %v1010
      %1012 = vmatmul.f32.gmra.mxu0 %v907
      %v1013 = vpop.f32.mrf.mxu0
      %v1014 = vadd.f32 0.0, %v1013
      %1015 = vmatmul.f32.gmra.mxu0 %v908
      %v1016 = vpop.f32.mrf.mxu0
      %v1017 = vadd.f32 0.0, %v1016
      %1018 = vmatmul.f32.gmra.mxu0 %v909
      %v1019 = vpop.f32.mrf.mxu0
      %v1020 = vadd.f32 0.0, %v1019
      %1021 = vmatmul.f32.gmra.mxu0 %v910
      %v1022 = vpop.f32.mrf.mxu0
      %v1023 = vadd.f32 0.0, %v1022
      %1024 = vmatmul.f32.gmra.mxu0 %v911
      %v1025 = vpop.f32.mrf.mxu0
      %v1026 = vadd.f32 0.0, %v1025
      %1027 = vmatmul.f32.gmra.mxu0 %v912
      %v1028 = vpop.f32.mrf.mxu0
      %v1029 = vadd.f32 0.0, %v1028
      %1030 = vmatmul.f32.gmra.mxu0 %v913
      %v1031 = vpop.f32.mrf.mxu0
      %v1032 = vadd.f32 0.0, %v1031
      %1033 = vmatmul.f32.gmra.mxu0 %v914
      %v1034 = vpop.f32.mrf.mxu0
      %v1035 = vadd.f32 0.0, %v1034
      %1036 = vmatmul.f32.gmra.mxu0 %v915
      %v1037 = vpop.f32.mrf.mxu0
      %v1038 = vadd.f32 0.0, %v1037
      %1039 = vmatmul.f32.gmra.mxu0 %v916
      %v1040 = vpop.f32.mrf.mxu0
      %v1041 = vadd.f32 0.0, %v1040
      %1042 = vmatmul.f32.gmra.mxu0 %v917
      %v1043 = vpop.f32.mrf.mxu0
      %v1044 = vadd.f32 0.0, %v1043
      %1045 = vmatmul.f32.gmra.mxu0 %v918
      %v1046 = vpop.f32.mrf.mxu0
      %v1047 = vadd.f32 0.0, %v1046
      %1048 = vmatmul.f32.gmra.mxu0 %v919
      %v1049 = vpop.f32.mrf.mxu0
      %v1050 = vadd.f32 0.0, %v1049
      %1051 = vmatmul.f32.gmra.mxu0 %v920
      %v1052 = vpop.f32.mrf.mxu0
      %v1053 = vadd.f32 0.0, %v1052
      %1054 = vmatmul.f32.gmra.mxu0 %v921
      %v1055 = vpop.f32.mrf.mxu0
      %v1056 = vadd.f32 0.0, %v1055
      %1057 = vmatmul.f32.gmra.mxu0 %v922
      %v1058 = vpop.f32.mrf.mxu0
      %v1059 = vadd.f32 0.0, %v1058
      %1060 = vmatmul.f32.gmra.mxu0 %v923
      %v1061 = vpop.f32.mrf.mxu0
      %v1062 = vadd.f32 0.0, %v1061
      %1063 = vmatmul.f32.gmra.mxu0 %v924
      %v1064 = vpop.f32.mrf.mxu0
      %v1065 = vadd.f32 0.0, %v1064
      %1066 = vmatmul.f32.gmra.mxu0 %v925
      %v1067 = vpop.f32.mrf.mxu0
      %v1068 = vadd.f32 0.0, %v1067
      %1069 = vmatmul.f32.gmra.mxu0 %v926
      %v1070 = vpop.f32.mrf.mxu0
      %v1071 = vadd.f32 0.0, %v1070
      %1072 = vmatmul.f32.gmra.mxu0 %v927
      %v1073 = vpop.f32.mrf.mxu0
      %v1074 = vadd.f32 0.0, %v1073
      %1075 = vmatmul.f32.gmra.mxu0 %v928
      %v1076 = vpop.f32.mrf.mxu0
      %v1077 = vadd.f32 0.0, %v1076
      %1078 = vmatmul.f32.gmra.mxu0 %v929
      %v1079 = vpop.f32.mrf.mxu0
      %v1080 = vadd.f32 0.0, %v1079
      %1081 = vmatmul.f32.gmra.mxu0 %v930
      %v1082 = vpop.f32.mrf.mxu0
      %v1083 = vadd.f32 0.0, %v1082
      %1084 = vmatmul.f32.gmra.mxu0 %v931
      %v1085 = vpop.f32.mrf.mxu0
      %v1086 = vadd.f32 0.0, %v1085
      %1087 = vmatmul.f32.gmra.mxu0 %v932
      %v1088 = vpop.f32.mrf.mxu0
      %v1089 = vadd.f32 0.0, %v1088
      %1090 = vmatmul.f32.gmra.mxu0 %v933
      %v1091 = vpop.f32.mrf.mxu0
      %v1092 = vadd.f32 0.0, %v1091
      %1093 = vmatmul.f32.gmra.mxu0 %v934
      %v1094 = vpop.f32.mrf.mxu0
      %v1095 = vadd.f32 0.0, %v1094
      %1096 = vmatmul.f32.gmra.mxu0 %v935
      %v1097 = vpop.f32.mrf.mxu0
      %v1098 = vadd.f32 0.0, %v1097
      %1099 = vmatmul.f32.gmra.mxu0 %v936
      %v1100 = vpop.f32.mrf.mxu0
      %v1101 = vadd.f32 0.0, %v1100
      %1102 = vmatmul.f32.gmra.mxu0 %v937
      %v1103 = vpop.f32.mrf.mxu0
      %v1104 = vadd.f32 0.0, %v1103
      %1105 = vmatmul.f32.gmra.mxu0 %v938
      %v1106 = vpop.f32.mrf.mxu0
      %v1107 = vadd.f32 0.0, %v1106
      %1108 = vmatmul.f32.gmra.mxu0 %v939
      %v1109 = vpop.f32.mrf.mxu0
      %v1110 = vadd.f32 0.0, %v1109
      %1111 = vmatmul.f32.gmra.mxu0 %v940
      %v1112 = vpop.f32.mrf.mxu0
      %v1113 = vadd.f32 0.0, %v1112
      %1114 = vmatmul.f32.gmra.mxu0 %v941
      %v1115 = vpop.f32.mrf.mxu0
      %v1116 = vadd.f32 0.0, %v1115
      %1117 = vmatmul.f32.gmra.mxu0 %v942
      %v1118 = vpop.f32.mrf.mxu0
      %v1119 = vadd.f32 0.0, %v1118
      %1120 = vdwg.mxu0
      %v1121 = vadd.f32 %v846, %v978
      %v1122 = vadd.f32 %v847, %v981
      %v1123 = vadd.f32 %v848, %v984
      %v1124 = vadd.f32 %v849, %v987
      %v1125 = vadd.f32 %v850, %v990
      %v1126 = vadd.f32 %v851, %v993
      %v1127 = vadd.f32 %v852, %v996
      %v1128 = vadd.f32 %v853, %v999
      %v1129 = vadd.f32 %v854, %v1002
      %v1130 = vadd.f32 %v855, %v1005
      %v1131 = vadd.f32 %v856, %v1008
      %v1132 = vadd.f32 %v857, %v1011
      %v1133 = vadd.f32 %v858, %v1014
      %v1134 = vadd.f32 %v859, %v1017
      %v1135 = vadd.f32 %v860, %v1020
      %v1136 = vadd.f32 %v861, %v1023
      %v1137 = vadd.f32 %v862, %v1026
      %v1138 = vadd.f32 %v863, %v1029
      %v1139 = vadd.f32 %v864, %v1032
      %v1140 = vadd.f32 %v865, %v1035
      %v1141 = vadd.f32 %v866, %v1038
      %v1142 = vadd.f32 %v867, %v1041
      %v1143 = vadd.f32 %v868, %v1044
      %v1144 = vadd.f32 %v869, %v1047
      %v1145 = vadd.f32 %v870, %v1050
      %v1146 = vadd.f32 %v871, %v1053
      %v1147 = vadd.f32 %v872, %v1056
      %v1148 = vadd.f32 %v873, %v1059
      %v1149 = vadd.f32 %v874, %v1062
      %v1150 = vadd.f32 %v875, %v1065
      %v1151 = vadd.f32 %v876, %v1068
      %v1152 = vadd.f32 %v877, %v1071
      %v1153 = vadd.f32 %v878, %v1074
      %v1154 = vadd.f32 %v879, %v1077
      %v1155 = vadd.f32 %v880, %v1080
      %v1156 = vadd.f32 %v881, %v1083
      %v1157 = vadd.f32 %v882, %v1086
      %v1158 = vadd.f32 %v883, %v1089
      %v1159 = vadd.f32 %v884, %v1092
      %v1160 = vadd.f32 %v885, %v1095
      %v1161 = vadd.f32 %v886, %v1098
      %v1162 = vadd.f32 %v887, %v1101
      %v1163 = vadd.f32 %v888, %v1104
      %v1164 = vadd.f32 %v889, %v1107
      %v1165 = vadd.f32 %v890, %v1110
      %v1166 = vadd.f32 %v891, %v1113
      %v1167 = vadd.f32 %v892, %v1116
      %v1168 = vadd.f32 %v893, %v1119
      %1169 = vst [vmem:[#allocation2] sm:$0xff] %v1121
      %1170 = vst [vmem:[#allocation2 + $0x8] sm:$0xff] %v1122
      %1171 = vst [vmem:[#allocation2 + $0x10] sm:$0xff] %v1123
      %1172 = vst [vmem:[#allocation2 + $0x18] sm:$0xff] %v1124
      %1173 = vst [vmem:[#allocation2 + $0x20] sm:$0xff] %v1125
      %1174 = vst [vmem:[#allocation2 + $0x28] sm:$0xff] %v1126
      %1175 = vst [vmem:[#allocation2 + $0x30] sm:$0xff] %v1127
      %1176 = vst [vmem:[#allocation2 + $0x38] sm:$0xff] %v1128
      %1177 = vst [vmem:[#allocation2 + $0x40] sm:$0xff] %v1129
      %1178 = vst [vmem:[#allocation2 + $0x48] sm:$0xff] %v1130
      %1179 = vst [vmem:[#allocation2 + $0x50] sm:$0xff] %v1131
      %1180 = vst [vmem:[#allocation2 + $0x58] sm:$0xff] %v1132
      %1181 = vst [vmem:[#allocation2 + $0x60] sm:$0xff] %v1133
      %1182 = vst [vmem:[#allocation2 + $0x68] sm:$0xff] %v1134
      %1183 = vst [vmem:[#allocation2 + $0x70] sm:$0xff] %v1135
      %1184 = vst [vmem:[#allocation2 + $0x78] sm:$0xff] %v1136
      %1185 = vst [vmem:[#allocation2 + $0x80] sm:$0xff] %v1137
      %1186 = vst [vmem:[#allocation2 + $0x88] sm:$0xff] %v1138
      %1187 = vst [vmem:[#allocation2 + $0x90] sm:$0xff] %v1139
      %1188 = vst [vmem:[#allocation2 + $0x98] sm:$0xff] %v1140
      %1189 = vst [vmem:[#allocation2 + $0xa0] sm:$0xff] %v1141
      %1190 = vst [vmem:[#allocation2 + $0xa8] sm:$0xff] %v1142
      %1191 = vst [vmem:[#allocation2 + $0xb0] sm:$0xff] %v1143
      %1192 = vst [vmem:[#allocation2 + $0xb8] sm:$0xff] %v1144
      %1193 = vst [vmem:[#allocation2 + $0xc0] sm:$0xff] %v1145
      %1194 = vst [vmem:[#allocation2 + $0xc8] sm:$0xff] %v1146
      %1195 = vst [vmem:[#allocation2 + $0xd0] sm:$0xff] %v1147
      %1196 = vst [vmem:[#allocation2 + $0xd8] sm:$0xff] %v1148
      %1197 = vst [vmem:[#allocation2 + $0xe0] sm:$0xff] %v1149
      %1198 = vst [vmem:[#allocation2 + $0xe8] sm:$0xff] %v1150
      %1199 = vst [vmem:[#allocation2 + $0xf0] sm:$0xff] %v1151
      %1200 = vst [vmem:[#allocation2 + $0xf8] sm:$0xff] %v1152
      %1201 = vst [vmem:[#allocation2 + $0x100] sm:$0xff] %v1153
      %1202 = vst [vmem:[#allocation2 + $0x108] sm:$0xff] %v1154
      %1203 = vst [vmem:[#allocation2 + $0x110] sm:$0xff] %v1155
      %1204 = vst [vmem:[#allocation2 + $0x118] sm:$0xff] %v1156
      %1205 = vst [vmem:[#allocation2 + $0x120] sm:$0xff] %v1157
      %1206 = vst [vmem:[#allocation2 + $0x128] sm:$0xff] %v1158
      %1207 = vst [vmem:[#allocation2 + $0x130] sm:$0xff] %v1159
      %1208 = vst [vmem:[#allocation2 + $0x138] sm:$0xff] %v1160
      %1209 = vst [vmem:[#allocation2 + $0x140] sm:$0xff] %v1161
      %1210 = vst [vmem:[#allocation2 + $0x148] sm:$0xff] %v1162
      %1211 = vst [vmem:[#allocation2 + $0x150] sm:$0xff] %v1163
      %1212 = vst [vmem:[#allocation2 + $0x158] sm:$0xff] %v1164
      %1213 = vst [vmem:[#allocation2 + $0x160] sm:$0xff] %v1165
      %1214 = vst [vmem:[#allocation2 + $0x168] sm:$0xff] %v1166
      %1215 = vst [vmem:[#allocation2 + $0x170] sm:$0xff] %v1167
      %1216 = vst [vmem:[#allocation2 + $0x178] sm:$0xff] %v1168
      %s1217 = sadd.s32 %s194, 72
      %v1218 = vld [vmem:[#allocation2] sm:$0xff]
      %v1219 = vld [vmem:[#allocation2 + $0x8] sm:$0xff]
      %v1220 = vld [vmem:[#allocation2 + $0x10] sm:$0xff]
      %v1221 = vld [vmem:[#allocation2 + $0x18] sm:$0xff]
      %v1222 = vld [vmem:[#allocation2 + $0x20] sm:$0xff]
      %v1223 = vld [vmem:[#allocation2 + $0x28] sm:$0xff]
      %v1224 = vld [vmem:[#allocation2 + $0x30] sm:$0xff]
      %v1225 = vld [vmem:[#allocation2 + $0x38] sm:$0xff]
      %v1226 = vld [vmem:[#allocation2 + $0x40] sm:$0xff]
      %v1227 = vld [vmem:[#allocation2 + $0x48] sm:$0xff]
      %v1228 = vld [vmem:[#allocation2 + $0x50] sm:$0xff]
      %v1229 = vld [vmem:[#allocation2 + $0x58] sm:$0xff]
      %v1230 = vld [vmem:[#allocation2 + $0x60] sm:$0xff]
      %v1231 = vld [vmem:[#allocation2 + $0x68] sm:$0xff]
      %v1232 = vld [vmem:[#allocation2 + $0x70] sm:$0xff]
      %v1233 = vld [vmem:[#allocation2 + $0x78] sm:$0xff]
      %v1234 = vld [vmem:[#allocation2 + $0x80] sm:$0xff]
      %v1235 = vld [vmem:[#allocation2 + $0x88] sm:$0xff]
      %v1236 = vld [vmem:[#allocation2 + $0x90] sm:$0xff]
      %v1237 = vld [vmem:[#allocation2 + $0x98] sm:$0xff]
      %v1238 = vld [vmem:[#allocation2 + $0xa0] sm:$0xff]
      %v1239 = vld [vmem:[#allocation2 + $0xa8] sm:$0xff]
      %v1240 = vld [vmem:[#allocation2 + $0xb0] sm:$0xff]
      %v1241 = vld [vmem:[#allocation2 + $0xb8] sm:$0xff]
      %v1242 = vld [vmem:[#allocation2 + $0xc0] sm:$0xff]
      %v1243 = vld [vmem:[#allocation2 + $0xc8] sm:$0xff]
      %v1244 = vld [vmem:[#allocation2 + $0xd0] sm:$0xff]
      %v1245 = vld [vmem:[#allocation2 + $0xd8] sm:$0xff]
      %v1246 = vld [vmem:[#allocation2 + $0xe0] sm:$0xff]
      %v1247 = vld [vmem:[#allocation2 + $0xe8] sm:$0xff]
      %v1248 = vld [vmem:[#allocation2 + $0xf0] sm:$0xff]
      %v1249 = vld [vmem:[#allocation2 + $0xf8] sm:$0xff]
      %v1250 = vld [vmem:[#allocation2 + $0x100] sm:$0xff]
      %v1251 = vld [vmem:[#allocation2 + $0x108] sm:$0xff]
      %v1252 = vld [vmem:[#allocation2 + $0x110] sm:$0xff]
      %v1253 = vld [vmem:[#allocation2 + $0x118] sm:$0xff]
      %v1254 = vld [vmem:[#allocation2 + $0x120] sm:$0xff]
      %v1255 = vld [vmem:[#allocation2 + $0x128] sm:$0xff]
      %v1256 = vld [vmem:[#allocation2 + $0x130] sm:$0xff]
      %v1257 = vld [vmem:[#allocation2 + $0x138] sm:$0xff]
      %v1258 = vld [vmem:[#allocation2 + $0x140] sm:$0xff]
      %v1259 = vld [vmem:[#allocation2 + $0x148] sm:$0xff]
      %v1260 = vld [vmem:[#allocation2 + $0x150] sm:$0xff]
      %v1261 = vld [vmem:[#allocation2 + $0x158] sm:$0xff]
      %v1262 = vld [vmem:[#allocation2 + $0x160] sm:$0xff]
      %v1263 = vld [vmem:[#allocation2 + $0x168] sm:$0xff]
      %v1264 = vld [vmem:[#allocation2 + $0x170] sm:$0xff]
      %v1265 = vld [vmem:[#allocation2 + $0x178] sm:$0xff]
      %s1266 = scalar_lea.vmem %s183, %s1217
      %v1267 = vld [vmem:[%s1266] sm:$0xff]
      %v1268 = vld [vmem:[%s1266 + $0x8] sm:$0xff]
      %v1269 = vld [vmem:[%s1266 + $0x10] sm:$0xff]
      %v1270 = vld [vmem:[%s1266 + $0x18] sm:$0xff]
      %v1271 = vld [vmem:[%s1266 + $0x20] sm:$0xff]
      %v1272 = vld [vmem:[%s1266 + $0x28] sm:$0xff]
      %v1273 = vld [vmem:[%s1266 + $0x30] sm:$0xff]
      %v1274 = vld [vmem:[%s1266 + $0x38] sm:$0xff]
      %v1275 = vld [vmem:[%s1266 + $0x40] sm:$0xff]
      %v1276 = vld [vmem:[%s1266 + $0x48] sm:$0xff]
      %v1277 = vld [vmem:[%s1266 + $0x50] sm:$0xff]
      %v1278 = vld [vmem:[%s1266 + $0x58] sm:$0xff]
      %v1279 = vld [vmem:[%s1266 + $0x60] sm:$0xff]
      %v1280 = vld [vmem:[%s1266 + $0x68] sm:$0xff]
      %v1281 = vld [vmem:[%s1266 + $0x70] sm:$0xff]
      %v1282 = vld [vmem:[%s1266 + $0x78] sm:$0xff]
      %v1283 = vld [vmem:[%s1266 + $0x80] sm:$0xff]
      %v1284 = vld [vmem:[%s1266 + $0x88] sm:$0xff]
      %v1285 = vld [vmem:[%s1266 + $0x90] sm:$0xff]
      %v1286 = vld [vmem:[%s1266 + $0x98] sm:$0xff]
      %v1287 = vld [vmem:[%s1266 + $0xa0] sm:$0xff]
      %v1288 = vld [vmem:[%s1266 + $0xa8] sm:$0xff]
      %v1289 = vld [vmem:[%s1266 + $0xb0] sm:$0xff]
      %v1290 = vld [vmem:[%s1266 + $0xb8] sm:$0xff]
      %v1291 = vld [vmem:[%s1266 + $0xc0] sm:$0xff]
      %v1292 = vld [vmem:[%s1266 + $0xc8] sm:$0xff]
      %v1293 = vld [vmem:[%s1266 + $0xd0] sm:$0xff]
      %v1294 = vld [vmem:[%s1266 + $0xd8] sm:$0xff]
      %v1295 = vld [vmem:[%s1266 + $0xe0] sm:$0xff]
      %v1296 = vld [vmem:[%s1266 + $0xe8] sm:$0xff]
      %v1297 = vld [vmem:[%s1266 + $0xf0] sm:$0xff]
      %v1298 = vld [vmem:[%s1266 + $0xf8] sm:$0xff]
      %v1299 = vld [vmem:[%s1266 + $0x100] sm:$0xff]
      %v1300 = vld [vmem:[%s1266 + $0x108] sm:$0xff]
      %v1301 = vld [vmem:[%s1266 + $0x110] sm:$0xff]
      %v1302 = vld [vmem:[%s1266 + $0x118] sm:$0xff]
      %v1303 = vld [vmem:[%s1266 + $0x120] sm:$0xff]
      %v1304 = vld [vmem:[%s1266 + $0x128] sm:$0xff]
      %v1305 = vld [vmem:[%s1266 + $0x130] sm:$0xff]
      %v1306 = vld [vmem:[%s1266 + $0x138] sm:$0xff]
      %v1307 = vld [vmem:[%s1266 + $0x140] sm:$0xff]
      %v1308 = vld [vmem:[%s1266 + $0x148] sm:$0xff]
      %v1309 = vld [vmem:[%s1266 + $0x150] sm:$0xff]
      %v1310 = vld [vmem:[%s1266 + $0x158] sm:$0xff]
      %v1311 = vld [vmem:[%s1266 + $0x160] sm:$0xff]
      %v1312 = vld [vmem:[%s1266 + $0x168] sm:$0xff]
      %v1313 = vld [vmem:[%s1266 + $0x170] sm:$0xff]
      %v1314 = vld [vmem:[%s1266 + $0x178] sm:$0xff]
      %s1315 = scalar_lea.vmem %s1, 384
      %v1316 = vld [vmem:[%s1315] sm:$0xff]
      %v1317 = vld [vmem:[%s1315 + $0x8] sm:$0xff]
      %v1318 = vld [vmem:[%s1315 + $0x10] sm:$0xff]
      %v1319 = vld [vmem:[%s1315 + $0x18] sm:$0xff]
      %v1320 = vld [vmem:[%s1315 + $0x20] sm:$0xff]
      %v1321 = vld [vmem:[%s1315 + $0x28] sm:$0xff]
      %v1322 = vld [vmem:[%s1315 + $0x30] sm:$0xff]
      %v1323 = vld [vmem:[%s1315 + $0x38] sm:$0xff]
      %v1324 = vld [vmem:[%s1315 + $0x40] sm:$0xff]
      %v1325 = vld [vmem:[%s1315 + $0x48] sm:$0xff]
      %v1326 = vld [vmem:[%s1315 + $0x50] sm:$0xff]
      %v1327 = vld [vmem:[%s1315 + $0x58] sm:$0xff]
      %v1328 = vld [vmem:[%s1315 + $0x60] sm:$0xff]
      %v1329 = vld [vmem:[%s1315 + $0x68] sm:$0xff]
      %v1330 = vld [vmem:[%s1315 + $0x70] sm:$0xff]
      %v1331 = vld [vmem:[%s1315 + $0x78] sm:$0xff]
      %1332 = vmatpush.msra.mxu0 %v1331
      %1333 = vmatpush.msra.mxu0 %v1330
      %1334 = vmatpush.msra.mxu0 %v1329
      %1335 = vmatpush.msra.mxu0 %v1328
      %1336 = vmatpush.msra.mxu0 %v1327
      %1337 = vmatpush.msra.mxu0 %v1326
      %1338 = vmatpush.msra.mxu0 %v1325
      %1339 = vmatpush.msra.mxu0 %v1324
      %1340 = vmatpush.msra.mxu0 %v1323
      %1341 = vmatpush.msra.mxu0 %v1322
      %1342 = vmatpush.msra.mxu0 %v1321
      %1343 = vmatpush.msra.mxu0 %v1320
      %1344 = vmatpush.msra.mxu0 %v1319
      %1345 = vmatpush.msra.mxu0 %v1318
      %1346 = vmatpush.msra.mxu0 %v1317
      %1347 = vmatpush.msra.mxu0 %v1316
      %1348 = vmatmul.f32.gmra.mxu0 %v1267
      %v1349 = vpop.f32.mrf.mxu0
      %v1350 = vadd.f32 0.0, %v1349
      %1351 = vmatmul.f32.gmra.mxu0 %v1268
      %v1352 = vpop.f32.mrf.mxu0
      %v1353 = vadd.f32 0.0, %v1352
      %1354 = vmatmul.f32.gmra.mxu0 %v1269
      %v1355 = vpop.f32.mrf.mxu0
      %v1356 = vadd.f32 0.0, %v1355
      %1357 = vmatmul.f32.gmra.mxu0 %v1270
      %v1358 = vpop.f32.mrf.mxu0
      %v1359 = vadd.f32 0.0, %v1358
      %1360 = vmatmul.f32.gmra.mxu0 %v1271
      %v1361 = vpop.f32.mrf.mxu0
      %v1362 = vadd.f32 0.0, %v1361
      %1363 = vmatmul.f32.gmra.mxu0 %v1272
      %v1364 = vpop.f32.mrf.mxu0
      %v1365 = vadd.f32 0.0, %v1364
      %1366 = vmatmul.f32.gmra.mxu0 %v1273
      %v1367 = vpop.f32.mrf.mxu0
      %v1368 = vadd.f32 0.0, %v1367
      %1369 = vmatmul.f32.gmra.mxu0 %v1274
      %v1370 = vpop.f32.mrf.mxu0
      %v1371 = vadd.f32 0.0, %v1370
      %1372 = vmatmul.f32.gmra.mxu0 %v1275
      %v1373 = vpop.f32.mrf.mxu0
      %v1374 = vadd.f32 0.0, %v1373
      %1375 = vmatmul.f32.gmra.mxu0 %v1276
      %v1376 = vpop.f32.mrf.mxu0
      %v1377 = vadd.f32 0.0, %v1376
      %1378 = vmatmul.f32.gmra.mxu0 %v1277
      %v1379 = vpop.f32.mrf.mxu0
      %v1380 = vadd.f32 0.0, %v1379
      %1381 = vmatmul.f32.gmra.mxu0 %v1278
      %v1382 = vpop.f32.mrf.mxu0
      %v1383 = vadd.f32 0.0, %v1382
      %1384 = vmatmul.f32.gmra.mxu0 %v1279
      %v1385 = vpop.f32.mrf.mxu0
      %v1386 = vadd.f32 0.0, %v1385
      %1387 = vmatmul.f32.gmra.mxu0 %v1280
      %v1388 = vpop.f32.mrf.mxu0
      %v1389 = vadd.f32 0.0, %v1388
      %1390 = vmatmul.f32.gmra.mxu0 %v1281
      %v1391 = vpop.f32.mrf.mxu0
      %v1392 = vadd.f32 0.0, %v1391
      %1393 = vmatmul.f32.gmra.mxu0 %v1282
      %v1394 = vpop.f32.mrf.mxu0
      %v1395 = vadd.f32 0.0, %v1394
      %1396 = vmatmul.f32.gmra.mxu0 %v1283
      %v1397 = vpop.f32.mrf.mxu0
      %v1398 = vadd.f32 0.0, %v1397
      %1399 = vmatmul.f32.gmra.mxu0 %v1284
      %v1400 = vpop.f32.mrf.mxu0
      %v1401 = vadd.f32 0.0, %v1400
      %1402 = vmatmul.f32.gmra.mxu0 %v1285
      %v1403 = vpop.f32.mrf.mxu0
      %v1404 = vadd.f32 0.0, %v1403
      %1405 = vmatmul.f32.gmra.mxu0 %v1286
      %v1406 = vpop.f32.mrf.mxu0
      %v1407 = vadd.f32 0.0, %v1406
      %1408 = vmatmul.f32.gmra.mxu0 %v1287
      %v1409 = vpop.f32.mrf.mxu0
      %v1410 = vadd.f32 0.0, %v1409
      %1411 = vmatmul.f32.gmra.mxu0 %v1288
      %v1412 = vpop.f32.mrf.mxu0
      %v1413 = vadd.f32 0.0, %v1412
      %1414 = vmatmul.f32.gmra.mxu0 %v1289
      %v1415 = vpop.f32.mrf.mxu0
      %v1416 = vadd.f32 0.0, %v1415
      %1417 = vmatmul.f32.gmra.mxu0 %v1290
      %v1418 = vpop.f32.mrf.mxu0
      %v1419 = vadd.f32 0.0, %v1418
      %1420 = vmatmul.f32.gmra.mxu0 %v1291
      %v1421 = vpop.f32.mrf.mxu0
      %v1422 = vadd.f32 0.0, %v1421
      %1423 = vmatmul.f32.gmra.mxu0 %v1292
      %v1424 = vpop.f32.mrf.mxu0
      %v1425 = vadd.f32 0.0, %v1424
      %1426 = vmatmul.f32.gmra.mxu0 %v1293
      %v1427 = vpop.f32.mrf.mxu0
      %v1428 = vadd.f32 0.0, %v1427
      %1429 = vmatmul.f32.gmra.mxu0 %v1294
      %v1430 = vpop.f32.mrf.mxu0
      %v1431 = vadd.f32 0.0, %v1430
      %1432 = vmatmul.f32.gmra.mxu0 %v1295
      %v1433 = vpop.f32.mrf.mxu0
      %v1434 = vadd.f32 0.0, %v1433
      %1435 = vmatmul.f32.gmra.mxu0 %v1296
      %v1436 = vpop.f32.mrf.mxu0
      %v1437 = vadd.f32 0.0, %v1436
      %1438 = vmatmul.f32.gmra.mxu0 %v1297
      %v1439 = vpop.f32.mrf.mxu0
      %v1440 = vadd.f32 0.0, %v1439
      %1441 = vmatmul.f32.gmra.mxu0 %v1298
      %v1442 = vpop.f32.mrf.mxu0
      %v1443 = vadd.f32 0.0, %v1442
      %1444 = vmatmul.f32.gmra.mxu0 %v1299
      %v1445 = vpop.f32.mrf.mxu0
      %v1446 = vadd.f32 0.0, %v1445
      %1447 = vmatmul.f32.gmra.mxu0 %v1300
      %v1448 = vpop.f32.mrf.mxu0
      %v1449 = vadd.f32 0.0, %v1448
      %1450 = vmatmul.f32.gmra.mxu0 %v1301
      %v1451 = vpop.f32.mrf.mxu0
      %v1452 = vadd.f32 0.0, %v1451
      %1453 = vmatmul.f32.gmra.mxu0 %v1302
      %v1454 = vpop.f32.mrf.mxu0
      %v1455 = vadd.f32 0.0, %v1454
      %1456 = vmatmul.f32.gmra.mxu0 %v1303
      %v1457 = vpop.f32.mrf.mxu0
      %v1458 = vadd.f32 0.0, %v1457
      %1459 = vmatmul.f32.gmra.mxu0 %v1304
      %v1460 = vpop.f32.mrf.mxu0
      %v1461 = vadd.f32 0.0, %v1460
      %1462 = vmatmul.f32.gmra.mxu0 %v1305
      %v1463 = vpop.f32.mrf.mxu0
      %v1464 = vadd.f32 0.0, %v1463
      %1465 = vmatmul.f32.gmra.mxu0 %v1306
      %v1466 = vpop.f32.mrf.mxu0
      %v1467 = vadd.f32 0.0, %v1466
      %1468 = vmatmul.f32.gmra.mxu0 %v1307
      %v1469 = vpop.f32.mrf.mxu0
      %v1470 = vadd.f32 0.0, %v1469
      %1471 = vmatmul.f32.gmra.mxu0 %v1308
      %v1472 = vpop.f32.mrf.mxu0
      %v1473 = vadd.f32 0.0, %v1472
      %1474 = vmatmul.f32.gmra.mxu0 %v1309
      %v1475 = vpop.f32.mrf.mxu0
      %v1476 = vadd.f32 0.0, %v1475
      %1477 = vmatmul.f32.gmra.mxu0 %v1310
      %v1478 = vpop.f32.mrf.mxu0
      %v1479 = vadd.f32 0.0, %v1478
      %1480 = vmatmul.f32.gmra.mxu0 %v1311
      %v1481 = vpop.f32.mrf.mxu0
      %v1482 = vadd.f32 0.0, %v1481
      %1483 = vmatmul.f32.gmra.mxu0 %v1312
      %v1484 = vpop.f32.mrf.mxu0
      %v1485 = vadd.f32 0.0, %v1484
      %1486 = vmatmul.f32.gmra.mxu0 %v1313
      %v1487 = vpop.f32.mrf.mxu0
      %v1488 = vadd.f32 0.0, %v1487
      %1489 = vmatmul.f32.gmra.mxu0 %v1314
      %v1490 = vpop.f32.mrf.mxu0
      %v1491 = vadd.f32 0.0, %v1490
      %1492 = vdwg.mxu0
      %v1493 = vadd.f32 %v1218, %v1350
      %v1494 = vadd.f32 %v1219, %v1353
      %v1495 = vadd.f32 %v1220, %v1356
      %v1496 = vadd.f32 %v1221, %v1359
      %v1497 = vadd.f32 %v1222, %v1362
      %v1498 = vadd.f32 %v1223, %v1365
      %v1499 = vadd.f32 %v1224, %v1368
      %v1500 = vadd.f32 %v1225, %v1371
      %v1501 = vadd.f32 %v1226, %v1374
      %v1502 = vadd.f32 %v1227, %v1377
      %v1503 = vadd.f32 %v1228, %v1380
      %v1504 = vadd.f32 %v1229, %v1383
      %v1505 = vadd.f32 %v1230, %v1386
      %v1506 = vadd.f32 %v1231, %v1389
      %v1507 = vadd.f32 %v1232, %v1392
      %v1508 = vadd.f32 %v1233, %v1395
      %v1509 = vadd.f32 %v1234, %v1398
      %v1510 = vadd.f32 %v1235, %v1401
      %v1511 = vadd.f32 %v1236, %v1404
      %v1512 = vadd.f32 %v1237, %v1407
      %v1513 = vadd.f32 %v1238, %v1410
      %v1514 = vadd.f32 %v1239, %v1413
      %v1515 = vadd.f32 %v1240, %v1416
      %v1516 = vadd.f32 %v1241, %v1419
      %v1517 = vadd.f32 %v1242, %v1422
      %v1518 = vadd.f32 %v1243, %v1425
      %v1519 = vadd.f32 %v1244, %v1428
      %v1520 = vadd.f32 %v1245, %v1431
      %v1521 = vadd.f32 %v1246, %v1434
      %v1522 = vadd.f32 %v1247, %v1437
      %v1523 = vadd.f32 %v1248, %v1440
      %v1524 = vadd.f32 %v1249, %v1443
      %v1525 = vadd.f32 %v1250, %v1446
      %v1526 = vadd.f32 %v1251, %v1449
      %v1527 = vadd.f32 %v1252, %v1452
      %v1528 = vadd.f32 %v1253, %v1455
      %v1529 = vadd.f32 %v1254, %v1458
      %v1530 = vadd.f32 %v1255, %v1461
      %v1531 = vadd.f32 %v1256, %v1464
      %v1532 = vadd.f32 %v1257, %v1467
      %v1533 = vadd.f32 %v1258, %v1470
      %v1534 = vadd.f32 %v1259, %v1473
      %v1535 = vadd.f32 %v1260, %v1476
      %v1536 = vadd.f32 %v1261, %v1479
      %v1537 = vadd.f32 %v1262, %v1482
      %v1538 = vadd.f32 %v1263, %v1485
      %v1539 = vadd.f32 %v1264, %v1488
      %v1540 = vadd.f32 %v1265, %v1491
      %1541 = vst [vmem:[#allocation2] sm:$0xff] %v1493
      %1542 = vst [vmem:[#allocation2 + $0x8] sm:$0xff] %v1494
      %1543 = vst [vmem:[#allocation2 + $0x10] sm:$0xff] %v1495
      %1544 = vst [vmem:[#allocation2 + $0x18] sm:$0xff] %v1496
      %1545 = vst [vmem:[#allocation2 + $0x20] sm:$0xff] %v1497
      %1546 = vst [vmem:[#allocation2 + $0x28] sm:$0xff] %v1498
      %1547 = vst [vmem:[#allocation2 + $0x30] sm:$0xff] %v1499
      %1548 = vst [vmem:[#allocation2 + $0x38] sm:$0xff] %v1500
      %1549 = vst [vmem:[#allocation2 + $0x40] sm:$0xff] %v1501
      %1550 = vst [vmem:[#allocation2 + $0x48] sm:$0xff] %v1502
      %1551 = vst [vmem:[#allocation2 + $0x50] sm:$0xff] %v1503
      %1552 = vst [vmem:[#allocation2 + $0x58] sm:$0xff] %v1504
      %1553 = vst [vmem:[#allocation2 + $0x60] sm:$0xff] %v1505
      %1554 = vst [vmem:[#allocation2 + $0x68] sm:$0xff] %v1506
      %1555 = vst [vmem:[#allocation2 + $0x70] sm:$0xff] %v1507
      %1556 = vst [vmem:[#allocation2 + $0x78] sm:$0xff] %v1508
      %1557 = vst [vmem:[#allocation2 + $0x80] sm:$0xff] %v1509
      %1558 = vst [vmem:[#allocation2 + $0x88] sm:$0xff] %v1510
      %1559 = vst [vmem:[#allocation2 + $0x90] sm:$0xff] %v1511
      %1560 = vst [vmem:[#allocation2 + $0x98] sm:$0xff] %v1512
      %1561 = vst [vmem:[#allocation2 + $0xa0] sm:$0xff] %v1513
      %1562 = vst [vmem:[#allocation2 + $0xa8] sm:$0xff] %v1514
      %1563 = vst [vmem:[#allocation2 + $0xb0] sm:$0xff] %v1515
      %1564 = vst [vmem:[#allocation2 + $0xb8] sm:$0xff] %v1516
      %1565 = vst [vmem:[#allocation2 + $0xc0] sm:$0xff] %v1517
      %1566 = vst [vmem:[#allocation2 + $0xc8] sm:$0xff] %v1518
      %1567 = vst [vmem:[#allocation2 + $0xd0] sm:$0xff] %v1519
      %1568 = vst [vmem:[#allocation2 + $0xd8] sm:$0xff] %v1520
      %1569 = vst [vmem:[#allocation2 + $0xe0] sm:$0xff] %v1521
      %1570 = vst [vmem:[#allocation2 + $0xe8] sm:$0xff] %v1522
      %1571 = vst [vmem:[#allocation2 + $0xf0] sm:$0xff] %v1523
      %1572 = vst [vmem:[#allocation2 + $0xf8] sm:$0xff] %v1524
      %1573 = vst [vmem:[#allocation2 + $0x100] sm:$0xff] %v1525
      %1574 = vst [vmem:[#allocation2 + $0x108] sm:$0xff] %v1526
      %1575 = vst [vmem:[#allocation2 + $0x110] sm:$0xff] %v1527
      %1576 = vst [vmem:[#allocation2 + $0x118] sm:$0xff] %v1528
      %1577 = vst [vmem:[#allocation2 + $0x120] sm:$0xff] %v1529
      %1578 = vst [vmem:[#allocation2 + $0x128] sm:$0xff] %v1530
      %1579 = vst [vmem:[#allocation2 + $0x130] sm:$0xff] %v1531
      %1580 = vst [vmem:[#allocation2 + $0x138] sm:$0xff] %v1532
      %1581 = vst [vmem:[#allocation2 + $0x140] sm:$0xff] %v1533
      %1582 = vst [vmem:[#allocation2 + $0x148] sm:$0xff] %v1534
      %1583 = vst [vmem:[#allocation2 + $0x150] sm:$0xff] %v1535
      %1584 = vst [vmem:[#allocation2 + $0x158] sm:$0xff] %v1536
      %1585 = vst [vmem:[#allocation2 + $0x160] sm:$0xff] %v1537
      %1586 = vst [vmem:[#allocation2 + $0x168] sm:$0xff] %v1538
      %1587 = vst [vmem:[#allocation2 + $0x170] sm:$0xff] %v1539
      %1588 = vst [vmem:[#allocation2 + $0x178] sm:$0xff] %v1540
      %s1589 = sadd.s32 %s194, 96
      %v1590 = vld [vmem:[#allocation2] sm:$0xff]
      %v1591 = vld [vmem:[#allocation2 + $0x8] sm:$0xff]
      %v1592 = vld [vmem:[#allocation2 + $0x10] sm:$0xff]
      %v1593 = vld [vmem:[#allocation2 + $0x18] sm:$0xff]
      %v1594 = vld [vmem:[#allocation2 + $0x20] sm:$0xff]
      %v1595 = vld [vmem:[#allocation2 + $0x28] sm:$0xff]
      %v1596 = vld [vmem:[#allocation2 + $0x30] sm:$0xff]
      %v1597 = vld [vmem:[#allocation2 + $0x38] sm:$0xff]
      %v1598 = vld [vmem:[#allocation2 + $0x40] sm:$0xff]
      %v1599 = vld [vmem:[#allocation2 + $0x48] sm:$0xff]
      %v1600 = vld [vmem:[#allocation2 + $0x50] sm:$0xff]
      %v1601 = vld [vmem:[#allocation2 + $0x58] sm:$0xff]
      %v1602 = vld [vmem:[#allocation2 + $0x60] sm:$0xff]
      %v1603 = vld [vmem:[#allocation2 + $0x68] sm:$0xff]
      %v1604 = vld [vmem:[#allocation2 + $0x70] sm:$0xff]
      %v1605 = vld [vmem:[#allocation2 + $0x78] sm:$0xff]
      %v1606 = vld [vmem:[#allocation2 + $0x80] sm:$0xff]
      %v1607 = vld [vmem:[#allocation2 + $0x88] sm:$0xff]
      %v1608 = vld [vmem:[#allocation2 + $0x90] sm:$0xff]
      %v1609 = vld [vmem:[#allocation2 + $0x98] sm:$0xff]
      %v1610 = vld [vmem:[#allocation2 + $0xa0] sm:$0xff]
      %v1611 = vld [vmem:[#allocation2 + $0xa8] sm:$0xff]
      %v1612 = vld [vmem:[#allocation2 + $0xb0] sm:$0xff]
      %v1613 = vld [vmem:[#allocation2 + $0xb8] sm:$0xff]
      %v1614 = vld [vmem:[#allocation2 + $0xc0] sm:$0xff]
      %v1615 = vld [vmem:[#allocation2 + $0xc8] sm:$0xff]
      %v1616 = vld [vmem:[#allocation2 + $0xd0] sm:$0xff]
      %v1617 = vld [vmem:[#allocation2 + $0xd8] sm:$0xff]
      %v1618 = vld [vmem:[#allocation2 + $0xe0] sm:$0xff]
      %v1619 = vld [vmem:[#allocation2 + $0xe8] sm:$0xff]
      %v1620 = vld [vmem:[#allocation2 + $0xf0] sm:$0xff]
      %v1621 = vld [vmem:[#allocation2 + $0xf8] sm:$0xff]
      %v1622 = vld [vmem:[#allocation2 + $0x100] sm:$0xff]
      %v1623 = vld [vmem:[#allocation2 + $0x108] sm:$0xff]
      %v1624 = vld [vmem:[#allocation2 + $0x110] sm:$0xff]
      %v1625 = vld [vmem:[#allocation2 + $0x118] sm:$0xff]
      %v1626 = vld [vmem:[#allocation2 + $0x120] sm:$0xff]
      %v1627 = vld [vmem:[#allocation2 + $0x128] sm:$0xff]
      %v1628 = vld [vmem:[#allocation2 + $0x130] sm:$0xff]
      %v1629 = vld [vmem:[#allocation2 + $0x138] sm:$0xff]
      %v1630 = vld [vmem:[#allocation2 + $0x140] sm:$0xff]
      %v1631 = vld [vmem:[#allocation2 + $0x148] sm:$0xff]
      %v1632 = vld [vmem:[#allocation2 + $0x150] sm:$0xff]
      %v1633 = vld [vmem:[#allocation2 + $0x158] sm:$0xff]
      %v1634 = vld [vmem:[#allocation2 + $0x160] sm:$0xff]
      %v1635 = vld [vmem:[#allocation2 + $0x168] sm:$0xff]
      %v1636 = vld [vmem:[#allocation2 + $0x170] sm:$0xff]
      %v1637 = vld [vmem:[#allocation2 + $0x178] sm:$0xff]
      %s1638 = scalar_lea.vmem %s183, %s1589
      %v1639 = vld [vmem:[%s1638] sm:$0xff]
      %v1640 = vld [vmem:[%s1638 + $0x8] sm:$0xff]
      %v1641 = vld [vmem:[%s1638 + $0x10] sm:$0xff]
      %v1642 = vld [vmem:[%s1638 + $0x18] sm:$0xff]
      %v1643 = vld [vmem:[%s1638 + $0x20] sm:$0xff]
      %v1644 = vld [vmem:[%s1638 + $0x28] sm:$0xff]
      %v1645 = vld [vmem:[%s1638 + $0x30] sm:$0xff]
      %v1646 = vld [vmem:[%s1638 + $0x38] sm:$0xff]
      %v1647 = vld [vmem:[%s1638 + $0x40] sm:$0xff]
      %v1648 = vld [vmem:[%s1638 + $0x48] sm:$0xff]
      %v1649 = vld [vmem:[%s1638 + $0x50] sm:$0xff]
      %v1650 = vld [vmem:[%s1638 + $0x58] sm:$0xff]
      %v1651 = vld [vmem:[%s1638 + $0x60] sm:$0xff]
      %v1652 = vld [vmem:[%s1638 + $0x68] sm:$0xff]
      %v1653 = vld [vmem:[%s1638 + $0x70] sm:$0xff]
      %v1654 = vld [vmem:[%s1638 + $0x78] sm:$0xff]
      %v1655 = vld [vmem:[%s1638 + $0x80] sm:$0xff]
      %v1656 = vld [vmem:[%s1638 + $0x88] sm:$0xff]
      %v1657 = vld [vmem:[%s1638 + $0x90] sm:$0xff]
      %v1658 = vld [vmem:[%s1638 + $0x98] sm:$0xff]
      %v1659 = vld [vmem:[%s1638 + $0xa0] sm:$0xff]
      %v1660 = vld [vmem:[%s1638 + $0xa8] sm:$0xff]
      %v1661 = vld [vmem:[%s1638 + $0xb0] sm:$0xff]
      %v1662 = vld [vmem:[%s1638 + $0xb8] sm:$0xff]
      %v1663 = vld [vmem:[%s1638 + $0xc0] sm:$0xff]
      %v1664 = vld [vmem:[%s1638 + $0xc8] sm:$0xff]
      %v1665 = vld [vmem:[%s1638 + $0xd0] sm:$0xff]
      %v1666 = vld [vmem:[%s1638 + $0xd8] sm:$0xff]
      %v1667 = vld [vmem:[%s1638 + $0xe0] sm:$0xff]
      %v1668 = vld [vmem:[%s1638 + $0xe8] sm:$0xff]
      %v1669 = vld [vmem:[%s1638 + $0xf0] sm:$0xff]
      %v1670 = vld [vmem:[%s1638 + $0xf8] sm:$0xff]
      %v1671 = vld [vmem:[%s1638 + $0x100] sm:$0xff]
      %v1672 = vld [vmem:[%s1638 + $0x108] sm:$0xff]
      %v1673 = vld [vmem:[%s1638 + $0x110] sm:$0xff]
      %v1674 = vld [vmem:[%s1638 + $0x118] sm:$0xff]
      %v1675 = vld [vmem:[%s1638 + $0x120] sm:$0xff]
      %v1676 = vld [vmem:[%s1638 + $0x128] sm:$0xff]
      %v1677 = vld [vmem:[%s1638 + $0x130] sm:$0xff]
      %v1678 = vld [vmem:[%s1638 + $0x138] sm:$0xff]
      %v1679 = vld [vmem:[%s1638 + $0x140] sm:$0xff]
      %v1680 = vld [vmem:[%s1638 + $0x148] sm:$0xff]
      %v1681 = vld [vmem:[%s1638 + $0x150] sm:$0xff]
      %v1682 = vld [vmem:[%s1638 + $0x158] sm:$0xff]
      %v1683 = vld [vmem:[%s1638 + $0x160] sm:$0xff]
      %v1684 = vld [vmem:[%s1638 + $0x168] sm:$0xff]
      %v1685 = vld [vmem:[%s1638 + $0x170] sm:$0xff]
      %v1686 = vld [vmem:[%s1638 + $0x178] sm:$0xff]
      %s1687 = scalar_lea.vmem %s1, 512
      %v1688 = vld [vmem:[%s1687] sm:$0xff]
      %v1689 = vld [vmem:[%s1687 + $0x8] sm:$0xff]
      %v1690 = vld [vmem:[%s1687 + $0x10] sm:$0xff]
      %v1691 = vld [vmem:[%s1687 + $0x18] sm:$0xff]
      %v1692 = vld [vmem:[%s1687 + $0x20] sm:$0xff]
      %v1693 = vld [vmem:[%s1687 + $0x28] sm:$0xff]
      %v1694 = vld [vmem:[%s1687 + $0x30] sm:$0xff]
      %v1695 = vld [vmem:[%s1687 + $0x38] sm:$0xff]
      %v1696 = vld [vmem:[%s1687 + $0x40] sm:$0xff]
      %v1697 = vld [vmem:[%s1687 + $0x48] sm:$0xff]
      %v1698 = vld [vmem:[%s1687 + $0x50] sm:$0xff]
      %v1699 = vld [vmem:[%s1687 + $0x58] sm:$0xff]
      %v1700 = vld [vmem:[%s1687 + $0x60] sm:$0xff]
      %v1701 = vld [vmem:[%s1687 + $0x68] sm:$0xff]
      %v1702 = vld [vmem:[%s1687 + $0x70] sm:$0xff]
      %v1703 = vld [vmem:[%s1687 + $0x78] sm:$0xff]
      %1704 = vmatpush.msra.mxu0 %v1703
      %1705 = vmatpush.msra.mxu0 %v1702
      %1706 = vmatpush.msra.mxu0 %v1701
      %1707 = vmatpush.msra.mxu0 %v1700
      %1708 = vmatpush.msra.mxu0 %v1699
      %1709 = vmatpush.msra.mxu0 %v1698
      %1710 = vmatpush.msra.mxu0 %v1697
      %1711 = vmatpush.msra.mxu0 %v1696
      %1712 = vmatpush.msra.mxu0 %v1695
      %1713 = vmatpush.msra.mxu0 %v1694
      %1714 = vmatpush.msra.mxu0 %v1693
      %1715 = vmatpush.msra.mxu0 %v1692
      %1716 = vmatpush.msra.mxu0 %v1691
      %1717 = vmatpush.msra.mxu0 %v1690
      %1718 = vmatpush.msra.mxu0 %v1689
      %1719 = vmatpush.msra.mxu0 %v1688
      %1720 = vmatmul.f32.gmra.mxu0 %v1639
      %v1721 = vpop.f32.mrf.mxu0
      %v1722 = vadd.f32 0.0, %v1721
      %1723 = vmatmul.f32.gmra.mxu0 %v1640
      %v1724 = vpop.f32.mrf.mxu0
      %v1725 = vadd.f32 0.0, %v1724
      %1726 = vmatmul.f32.gmra.mxu0 %v1641
      %v1727 = vpop.f32.mrf.mxu0
      %v1728 = vadd.f32 0.0, %v1727
      %1729 = vmatmul.f32.gmra.mxu0 %v1642
      %v1730 = vpop.f32.mrf.mxu0
      %v1731 = vadd.f32 0.0, %v1730
      %1732 = vmatmul.f32.gmra.mxu0 %v1643
      %v1733 = vpop.f32.mrf.mxu0
      %v1734 = vadd.f32 0.0, %v1733
      %1735 = vmatmul.f32.gmra.mxu0 %v1644
      %v1736 = vpop.f32.mrf.mxu0
      %v1737 = vadd.f32 0.0, %v1736
      %1738 = vmatmul.f32.gmra.mxu0 %v1645
      %v1739 = vpop.f32.mrf.mxu0
      %v1740 = vadd.f32 0.0, %v1739
      %1741 = vmatmul.f32.gmra.mxu0 %v1646
      %v1742 = vpop.f32.mrf.mxu0
      %v1743 = vadd.f32 0.0, %v1742
      %1744 = vmatmul.f32.gmra.mxu0 %v1647
      %v1745 = vpop.f32.mrf.mxu0
      %v1746 = vadd.f32 0.0, %v1745
      %1747 = vmatmul.f32.gmra.mxu0 %v1648
      %v1748 = vpop.f32.mrf.mxu0
      %v1749 = vadd.f32 0.0, %v1748
      %1750 = vmatmul.f32.gmra.mxu0 %v1649
      %v1751 = vpop.f32.mrf.mxu0
      %v1752 = vadd.f32 0.0, %v1751
      %1753 = vmatmul.f32.gmra.mxu0 %v1650
      %v1754 = vpop.f32.mrf.mxu0
      %v1755 = vadd.f32 0.0, %v1754
      %1756 = vmatmul.f32.gmra.mxu0 %v1651
      %v1757 = vpop.f32.mrf.mxu0
      %v1758 = vadd.f32 0.0, %v1757
      %1759 = vmatmul.f32.gmra.mxu0 %v1652
      %v1760 = vpop.f32.mrf.mxu0
      %v1761 = vadd.f32 0.0, %v1760
      %1762 = vmatmul.f32.gmra.mxu0 %v1653
      %v1763 = vpop.f32.mrf.mxu0
      %v1764 = vadd.f32 0.0, %v1763
      %1765 = vmatmul.f32.gmra.mxu0 %v1654
      %v1766 = vpop.f32.mrf.mxu0
      %v1767 = vadd.f32 0.0, %v1766
      %1768 = vmatmul.f32.gmra.mxu0 %v1655
      %v1769 = vpop.f32.mrf.mxu0
      %v1770 = vadd.f32 0.0, %v1769
      %1771 = vmatmul.f32.gmra.mxu0 %v1656
      %v1772 = vpop.f32.mrf.mxu0
      %v1773 = vadd.f32 0.0, %v1772
      %1774 = vmatmul.f32.gmra.mxu0 %v1657
      %v1775 = vpop.f32.mrf.mxu0
      %v1776 = vadd.f32 0.0, %v1775
      %1777 = vmatmul.f32.gmra.mxu0 %v1658
      %v1778 = vpop.f32.mrf.mxu0
      %v1779 = vadd.f32 0.0, %v1778
      %1780 = vmatmul.f32.gmra.mxu0 %v1659
      %v1781 = vpop.f32.mrf.mxu0
      %v1782 = vadd.f32 0.0, %v1781
      %1783 = vmatmul.f32.gmra.mxu0 %v1660
      %v1784 = vpop.f32.mrf.mxu0
      %v1785 = vadd.f32 0.0, %v1784
      %1786 = vmatmul.f32.gmra.mxu0 %v1661
      %v1787 = vpop.f32.mrf.mxu0
      %v1788 = vadd.f32 0.0, %v1787
      %1789 = vmatmul.f32.gmra.mxu0 %v1662
      %v1790 = vpop.f32.mrf.mxu0
      %v1791 = vadd.f32 0.0, %v1790
      %1792 = vmatmul.f32.gmra.mxu0 %v1663
      %v1793 = vpop.f32.mrf.mxu0
      %v1794 = vadd.f32 0.0, %v1793
      %1795 = vmatmul.f32.gmra.mxu0 %v1664
      %v1796 = vpop.f32.mrf.mxu0
      %v1797 = vadd.f32 0.0, %v1796
      %1798 = vmatmul.f32.gmra.mxu0 %v1665
      %v1799 = vpop.f32.mrf.mxu0
      %v1800 = vadd.f32 0.0, %v1799
      %1801 = vmatmul.f32.gmra.mxu0 %v1666
      %v1802 = vpop.f32.mrf.mxu0
      %v1803 = vadd.f32 0.0, %v1802
      %1804 = vmatmul.f32.gmra.mxu0 %v1667
      %v1805 = vpop.f32.mrf.mxu0
      %v1806 = vadd.f32 0.0, %v1805
      %1807 = vmatmul.f32.gmra.mxu0 %v1668
      %v1808 = vpop.f32.mrf.mxu0
      %v1809 = vadd.f32 0.0, %v1808
      %1810 = vmatmul.f32.gmra.mxu0 %v1669
      %v1811 = vpop.f32.mrf.mxu0
      %v1812 = vadd.f32 0.0, %v1811
      %1813 = vmatmul.f32.gmra.mxu0 %v1670
      %v1814 = vpop.f32.mrf.mxu0
      %v1815 = vadd.f32 0.0, %v1814
      %1816 = vmatmul.f32.gmra.mxu0 %v1671
      %v1817 = vpop.f32.mrf.mxu0
      %v1818 = vadd.f32 0.0, %v1817
      %1819 = vmatmul.f32.gmra.mxu0 %v1672
      %v1820 = vpop.f32.mrf.mxu0
      %v1821 = vadd.f32 0.0, %v1820
      %1822 = vmatmul.f32.gmra.mxu0 %v1673
      %v1823 = vpop.f32.mrf.mxu0
      %v1824 = vadd.f32 0.0, %v1823
      %1825 = vmatmul.f32.gmra.mxu0 %v1674
      %v1826 = vpop.f32.mrf.mxu0
      %v1827 = vadd.f32 0.0, %v1826
      %1828 = vmatmul.f32.gmra.mxu0 %v1675
      %v1829 = vpop.f32.mrf.mxu0
      %v1830 = vadd.f32 0.0, %v1829
      %1831 = vmatmul.f32.gmra.mxu0 %v1676
      %v1832 = vpop.f32.mrf.mxu0
      %v1833 = vadd.f32 0.0, %v1832
      %1834 = vmatmul.f32.gmra.mxu0 %v1677
      %v1835 = vpop.f32.mrf.mxu0
      %v1836 = vadd.f32 0.0, %v1835
      %1837 = vmatmul.f32.gmra.mxu0 %v1678
      %v1838 = vpop.f32.mrf.mxu0
      %v1839 = vadd.f32 0.0, %v1838
      %1840 = vmatmul.f32.gmra.mxu0 %v1679
      %v1841 = vpop.f32.mrf.mxu0
      %v1842 = vadd.f32 0.0, %v1841
      %1843 = vmatmul.f32.gmra.mxu0 %v1680
      %v1844 = vpop.f32.mrf.mxu0
      %v1845 = vadd.f32 0.0, %v1844
      %1846 = vmatmul.f32.gmra.mxu0 %v1681
      %v1847 = vpop.f32.mrf.mxu0
      %v1848 = vadd.f32 0.0, %v1847
      %1849 = vmatmul.f32.gmra.mxu0 %v1682
      %v1850 = vpop.f32.mrf.mxu0
      %v1851 = vadd.f32 0.0, %v1850
      %1852 = vmatmul.f32.gmra.mxu0 %v1683
      %v1853 = vpop.f32.mrf.mxu0
      %v1854 = vadd.f32 0.0, %v1853
      %1855 = vmatmul.f32.gmra.mxu0 %v1684
      %v1856 = vpop.f32.mrf.mxu0
      %v1857 = vadd.f32 0.0, %v1856
      %1858 = vmatmul.f32.gmra.mxu0 %v1685
      %v1859 = vpop.f32.mrf.mxu0
      %v1860 = vadd.f32 0.0, %v1859
      %1861 = vmatmul.f32.gmra.mxu0 %v1686
      %v1862 = vpop.f32.mrf.mxu0
      %v1863 = vadd.f32 0.0, %v1862
      %1864 = vdwg.mxu0
      %v1865 = vadd.f32 %v1590, %v1722
      %v1866 = vadd.f32 %v1591, %v1725
      %v1867 = vadd.f32 %v1592, %v1728
      %v1868 = vadd.f32 %v1593, %v1731
      %v1869 = vadd.f32 %v1594, %v1734
      %v1870 = vadd.f32 %v1595, %v1737
      %v1871 = vadd.f32 %v1596, %v1740
      %v1872 = vadd.f32 %v1597, %v1743
      %v1873 = vadd.f32 %v1598, %v1746
      %v1874 = vadd.f32 %v1599, %v1749
      %v1875 = vadd.f32 %v1600, %v1752
      %v1876 = vadd.f32 %v1601, %v1755
      %v1877 = vadd.f32 %v1602, %v1758
      %v1878 = vadd.f32 %v1603, %v1761
      %v1879 = vadd.f32 %v1604, %v1764
      %v1880 = vadd.f32 %v1605, %v1767
      %v1881 = vadd.f32 %v1606, %v1770
      %v1882 = vadd.f32 %v1607, %v1773
      %v1883 = vadd.f32 %v1608, %v1776
      %v1884 = vadd.f32 %v1609, %v1779
      %v1885 = vadd.f32 %v1610, %v1782
      %v1886 = vadd.f32 %v1611, %v1785
      %v1887 = vadd.f32 %v1612, %v1788
      %v1888 = vadd.f32 %v1613, %v1791
      %v1889 = vadd.f32 %v1614, %v1794
      %v1890 = vadd.f32 %v1615, %v1797
      %v1891 = vadd.f32 %v1616, %v1800
      %v1892 = vadd.f32 %v1617, %v1803
      %v1893 = vadd.f32 %v1618, %v1806
      %v1894 = vadd.f32 %v1619, %v1809
      %v1895 = vadd.f32 %v1620, %v1812
      %v1896 = vadd.f32 %v1621, %v1815
      %v1897 = vadd.f32 %v1622, %v1818
      %v1898 = vadd.f32 %v1623, %v1821
      %v1899 = vadd.f32 %v1624, %v1824
      %v1900 = vadd.f32 %v1625, %v1827
      %v1901 = vadd.f32 %v1626, %v1830
      %v1902 = vadd.f32 %v1627, %v1833
      %v1903 = vadd.f32 %v1628, %v1836
      %v1904 = vadd.f32 %v1629, %v1839
      %v1905 = vadd.f32 %v1630, %v1842
      %v1906 = vadd.f32 %v1631, %v1845
      %v1907 = vadd.f32 %v1632, %v1848
      %v1908 = vadd.f32 %v1633, %v1851
      %v1909 = vadd.f32 %v1634, %v1854
      %v1910 = vadd.f32 %v1635, %v1857
      %v1911 = vadd.f32 %v1636, %v1860
      %v1912 = vadd.f32 %v1637, %v1863
      %v1913 = vxor.u32 %v1865, 2147483648
      %v1914 = vxor.u32 %v1866, 2147483648
      %v1915 = vxor.u32 %v1867, 2147483648
      %v1916 = vxor.u32 %v1868, 2147483648
      %v1917 = vxor.u32 %v1869, 2147483648
      %v1918 = vxor.u32 %v1870, 2147483648
      %v1919 = vxor.u32 %v1871, 2147483648
      %v1920 = vxor.u32 %v1872, 2147483648
      %v1921 = vxor.u32 %v1873, 2147483648
      %v1922 = vxor.u32 %v1874, 2147483648
      %v1923 = vxor.u32 %v1875, 2147483648
      %v1924 = vxor.u32 %v1876, 2147483648
      %v1925 = vxor.u32 %v1877, 2147483648
      %v1926 = vxor.u32 %v1878, 2147483648
      %v1927 = vxor.u32 %v1879, 2147483648
      %v1928 = vxor.u32 %v1880, 2147483648
      %v1929 = vxor.u32 %v1881, 2147483648
      %v1930 = vxor.u32 %v1882, 2147483648
      %v1931 = vxor.u32 %v1883, 2147483648
      %v1932 = vxor.u32 %v1884, 2147483648
      %v1933 = vxor.u32 %v1885, 2147483648
      %v1934 = vxor.u32 %v1886, 2147483648
      %v1935 = vxor.u32 %v1887, 2147483648
      %v1936 = vxor.u32 %v1888, 2147483648
      %v1937 = vxor.u32 %v1889, 2147483648
      %v1938 = vxor.u32 %v1890, 2147483648
      %v1939 = vxor.u32 %v1891, 2147483648
      %v1940 = vxor.u32 %v1892, 2147483648
      %v1941 = vxor.u32 %v1893, 2147483648
      %v1942 = vxor.u32 %v1894, 2147483648
      %v1943 = vxor.u32 %v1895, 2147483648
      %v1944 = vxor.u32 %v1896, 2147483648
      %v1945 = vxor.u32 %v1897, 2147483648
      %v1946 = vxor.u32 %v1898, 2147483648
      %v1947 = vxor.u32 %v1899, 2147483648
      %v1948 = vxor.u32 %v1900, 2147483648
      %v1949 = vxor.u32 %v1901, 2147483648
      %v1950 = vxor.u32 %v1902, 2147483648
      %v1951 = vxor.u32 %v1903, 2147483648
      %v1952 = vxor.u32 %v1904, 2147483648
      %v1953 = vxor.u32 %v1905, 2147483648
      %v1954 = vxor.u32 %v1906, 2147483648
      %v1955 = vxor.u32 %v1907, 2147483648
      %v1956 = vxor.u32 %v1908, 2147483648
      %v1957 = vxor.u32 %v1909, 2147483648
      %v1958 = vxor.u32 %v1910, 2147483648
      %v1959 = vxor.u32 %v1911, 2147483648
      %v1960 = vxor.u32 %v1912, 2147483648
      %v1961 = vmul.f32 %v1913, 1.442695
      %v1962 = vpow.pop %v1961
      %v1963 = vmul.f32 %v1914, 1.442695
      %v1964 = vpow.pop %v1963
      %v1965 = vmul.f32 %v1915, 1.442695
      %v1966 = vpow.pop %v1965
      %v1967 = vmul.f32 %v1916, 1.442695
      %v1968 = vpow.pop %v1967
      %v1969 = vmul.f32 %v1917, 1.442695
      %v1970 = vpow.pop %v1969
      %v1971 = vmul.f32 %v1918, 1.442695
      %v1972 = vpow.pop %v1971
      %v1973 = vmul.f32 %v1919, 1.442695
      %v1974 = vpow.pop %v1973
      %v1975 = vmul.f32 %v1920, 1.442695
      %v1976 = vpow.pop %v1975
      %v1977 = vmul.f32 %v1921, 1.442695
      %v1978 = vpow.pop %v1977
      %v1979 = vmul.f32 %v1922, 1.442695
      %v1980 = vpow.pop %v1979
      %v1981 = vmul.f32 %v1923, 1.442695
      %v1982 = vpow.pop %v1981
      %v1983 = vmul.f32 %v1924, 1.442695
      %v1984 = vpow.pop %v1983
      %v1985 = vmul.f32 %v1925, 1.442695
      %v1986 = vpow.pop %v1985
      %v1987 = vmul.f32 %v1926, 1.442695
      %v1988 = vpow.pop %v1987
      %v1989 = vmul.f32 %v1927, 1.442695
      %v1990 = vpow.pop %v1989
      %v1991 = vmul.f32 %v1928, 1.442695
      %v1992 = vpow.pop %v1991
      %v1993 = vmul.f32 %v1929, 1.442695
      %v1994 = vpow.pop %v1993
      %v1995 = vmul.f32 %v1930, 1.442695
      %v1996 = vpow.pop %v1995
      %v1997 = vmul.f32 %v1931, 1.442695
      %v1998 = vpow.pop %v1997
      %v1999 = vmul.f32 %v1932, 1.442695
      %v2000 = vpow.pop %v1999
      %v2001 = vmul.f32 %v1933, 1.442695
      %v2002 = vpow.pop %v2001
      %v2003 = vmul.f32 %v1934, 1.442695
      %v2004 = vpow.pop %v2003
      %v2005 = vmul.f32 %v1935, 1.442695
      %v2006 = vpow.pop %v2005
      %v2007 = vmul.f32 %v1936, 1.442695
      %v2008 = vpow.pop %v2007
      %v2009 = vmul.f32 %v1937, 1.442695
      %v2010 = vpow.pop %v2009
      %v2011 = vmul.f32 %v1938, 1.442695
      %v2012 = vpow.pop %v2011
      %v2013 = vmul.f32 %v1939, 1.442695
      %v2014 = vpow.pop %v2013
      %v2015 = vmul.f32 %v1940, 1.442695
      %v2016 = vpow.pop %v2015
      %v2017 = vmul.f32 %v1941, 1.442695
      %v2018 = vpow.pop %v2017
      %v2019 = vmul.f32 %v1942, 1.442695
      %v2020 = vpow.pop %v2019
      %v2021 = vmul.f32 %v1943, 1.442695
      %v2022 = vpow.pop %v2021
      %v2023 = vmul.f32 %v1944, 1.442695
      %v2024 = vpow.pop %v2023
      %v2025 = vmul.f32 %v1945, 1.442695
      %v2026 = vpow.pop %v2025
      %v2027 = vmul.f32 %v1946, 1.442695
      %v2028 = vpow.pop %v2027
      %v2029 = vmul.f32 %v1947, 1.442695
      %v2030 = vpow.pop %v2029
      %v2031 = vmul.f32 %v1948, 1.442695
      %v2032 = vpow.pop %v2031
      %v2033 = vmul.f32 %v1949, 1.442695
      %v2034 = vpow.pop %v2033
      %v2035 = vmul.f32 %v1950, 1.442695
      %v2036 = vpow.pop %v2035
      %v2037 = vmul.f32 %v1951, 1.442695
      %v2038 = vpow.pop %v2037
      %v2039 = vmul.f32 %v1952, 1.442695
      %v2040 = vpow.pop %v2039
      %v2041 = vmul.f32 %v1953, 1.442695
      %v2042 = vpow.pop %v2041
      %v2043 = vmul.f32 %v1954, 1.442695
      %v2044 = vpow.pop %v2043
      %v2045 = vmul.f32 %v1955, 1.442695
      %v2046 = vpow.pop %v2045
      %v2047 = vmul.f32 %v1956, 1.442695
      %v2048 = vpow.pop %v2047
      %v2049 = vmul.f32 %v1957, 1.442695
      %v2050 = vpow.pop %v2049
      %v2051 = vmul.f32 %v1958, 1.442695
      %v2052 = vpow.pop %v2051
      %v2053 = vmul.f32 %v1959, 1.442695
      %v2054 = vpow.pop %v2053
      %v2055 = vmul.f32 %v1960, 1.442695
      %v2056 = vpow.pop %v2055
      %v2057 = vadd.f32 %v1962, 1.0
      %v2058 = vadd.f32 %v1964, 1.0
      %v2059 = vadd.f32 %v1966, 1.0
      %v2060 = vadd.f32 %v1968, 1.0
      %v2061 = vadd.f32 %v1970, 1.0
      %v2062 = vadd.f32 %v1972, 1.0
      %v2063 = vadd.f32 %v1974, 1.0
      %v2064 = vadd.f32 %v1976, 1.0
      %v2065 = vadd.f32 %v1978, 1.0
      %v2066 = vadd.f32 %v1980, 1.0
      %v2067 = vadd.f32 %v1982, 1.0
      %v2068 = vadd.f32 %v1984, 1.0
      %v2069 = vadd.f32 %v1986, 1.0
      %v2070 = vadd.f32 %v1988, 1.0
      %v2071 = vadd.f32 %v1990, 1.0
      %v2072 = vadd.f32 %v1992, 1.0
      %v2073 = vadd.f32 %v1994, 1.0
      %v2074 = vadd.f32 %v1996, 1.0
      %v2075 = vadd.f32 %v1998, 1.0
      %v2076 = vadd.f32 %v2000, 1.0
      %v2077 = vadd.f32 %v2002, 1.0
      %v2078 = vadd.f32 %v2004, 1.0
      %v2079 = vadd.f32 %v2006, 1.0
      %v2080 = vadd.f32 %v2008, 1.0
      %v2081 = vadd.f32 %v2010, 1.0
      %v2082 = vadd.f32 %v2012, 1.0
      %v2083 = vadd.f32 %v2014, 1.0
      %v2084 = vadd.f32 %v2016, 1.0
      %v2085 = vadd.f32 %v2018, 1.0
      %v2086 = vadd.f32 %v2020, 1.0
      %v2087 = vadd.f32 %v2022, 1.0
      %v2088 = vadd.f32 %v2024, 1.0
      %v2089 = vadd.f32 %v2026, 1.0
      %v2090 = vadd.f32 %v2028, 1.0
      %v2091 = vadd.f32 %v2030, 1.0
      %v2092 = vadd.f32 %v2032, 1.0
      %v2093 = vadd.f32 %v2034, 1.0
      %v2094 = vadd.f32 %v2036, 1.0
      %v2095 = vadd.f32 %v2038, 1.0
      %v2096 = vadd.f32 %v2040, 1.0
      %v2097 = vadd.f32 %v2042, 1.0
      %v2098 = vadd.f32 %v2044, 1.0
      %v2099 = vadd.f32 %v2046, 1.0
      %v2100 = vadd.f32 %v2048, 1.0
      %v2101 = vadd.f32 %v2050, 1.0
      %v2102 = vadd.f32 %v2052, 1.0
      %v2103 = vadd.f32 %v2054, 1.0
      %v2104 = vadd.f32 %v2056, 1.0
      %v2105 = vrcp.pop %v2057
      %v2106 = vmul.f32 %v2057, %v2105
      %v2107 = vsub.f32 1.0, %v2106
      %v2108 = vmul.f32 %v2105, %v2107
      %v2109 = vadd.f32 %v2105, %v2108
      %vm2110 = vweird.f32 %v2057
      %vm2111 = vweird.f32 %v2105
      %vm2112 = vmor %vm2110, %vm2111
      %v2113 = vsel %vm2112, %v2105, %v2109
      %v2114 = vand.u32 2147483647, %v2057
      %vm2115 = vcmp.eq.f32.partialorder %v2114, 8.507059e+37
      %v2116 = vand.u32 %v2057, 2147483648
      %v2117 = vor.u32 1.1754944e-38, %v2116
      %v2118 = vsel %vm2115, %v2117, %v2113
      %v2119 = vmul.f32 1.0, %v2118
      %v2120 = vrcp.pop %v2058
      %v2121 = vmul.f32 %v2058, %v2120
      %v2122 = vsub.f32 1.0, %v2121
      %v2123 = vmul.f32 %v2120, %v2122
      %v2124 = vadd.f32 %v2120, %v2123
      %vm2125 = vweird.f32 %v2058
      %vm2126 = vweird.f32 %v2120
      %vm2127 = vmor %vm2125, %vm2126
      %v2128 = vsel %vm2127, %v2120, %v2124
      %v2129 = vand.u32 2147483647, %v2058
      %vm2130 = vcmp.eq.f32.partialorder %v2129, 8.507059e+37
      %v2131 = vand.u32 %v2058, 2147483648
      %v2132 = vor.u32 1.1754944e-38, %v2131
      %v2133 = vsel %vm2130, %v2132, %v2128
      %v2134 = vmul.f32 1.0, %v2133
      %v2135 = vrcp.pop %v2059
      %v2136 = vmul.f32 %v2059, %v2135
      %v2137 = vsub.f32 1.0, %v2136
      %v2138 = vmul.f32 %v2135, %v2137
      %v2139 = vadd.f32 %v2135, %v2138
      %vm2140 = vweird.f32 %v2059
      %vm2141 = vweird.f32 %v2135
      %vm2142 = vmor %vm2140, %vm2141
      %v2143 = vsel %vm2142, %v2135, %v2139
      %v2144 = vand.u32 2147483647, %v2059
      %vm2145 = vcmp.eq.f32.partialorder %v2144, 8.507059e+37
      %v2146 = vand.u32 %v2059, 2147483648
      %v2147 = vor.u32 1.1754944e-38, %v2146
      %v2148 = vsel %vm2145, %v2147, %v2143
      %v2149 = vmul.f32 1.0, %v2148
      %v2150 = vrcp.pop %v2060
      %v2151 = vmul.f32 %v2060, %v2150
      %v2152 = vsub.f32 1.0, %v2151
      %v2153 = vmul.f32 %v2150, %v2152
      %v2154 = vadd.f32 %v2150, %v2153
      %vm2155 = vweird.f32 %v2060
      %vm2156 = vweird.f32 %v2150
      %vm2157 = vmor %vm2155, %vm2156
      %v2158 = vsel %vm2157, %v2150, %v2154
      %v2159 = vand.u32 2147483647, %v2060
      %vm2160 = vcmp.eq.f32.partialorder %v2159, 8.507059e+37
      %v2161 = vand.u32 %v2060, 2147483648
      %v2162 = vor.u32 1.1754944e-38, %v2161
      %v2163 = vsel %vm2160, %v2162, %v2158
      %v2164 = vmul.f32 1.0, %v2163
      %v2165 = vrcp.pop %v2061
      %v2166 = vmul.f32 %v2061, %v2165
      %v2167 = vsub.f32 1.0, %v2166
      %v2168 = vmul.f32 %v2165, %v2167
      %v2169 = vadd.f32 %v2165, %v2168
      %vm2170 = vweird.f32 %v2061
      %vm2171 = vweird.f32 %v2165
      %vm2172 = vmor %vm2170, %vm2171
      %v2173 = vsel %vm2172, %v2165, %v2169
      %v2174 = vand.u32 2147483647, %v2061
      %vm2175 = vcmp.eq.f32.partialorder %v2174, 8.507059e+37
      %v2176 = vand.u32 %v2061, 2147483648
      %v2177 = vor.u32 1.1754944e-38, %v2176
      %v2178 = vsel %vm2175, %v2177, %v2173
      %v2179 = vmul.f32 1.0, %v2178
      %v2180 = vrcp.pop %v2062
      %v2181 = vmul.f32 %v2062, %v2180
      %v2182 = vsub.f32 1.0, %v2181
      %v2183 = vmul.f32 %v2180, %v2182
      %v2184 = vadd.f32 %v2180, %v2183
      %vm2185 = vweird.f32 %v2062
      %vm2186 = vweird.f32 %v2180
      %vm2187 = vmor %vm2185, %vm2186
      %v2188 = vsel %vm2187, %v2180, %v2184
      %v2189 = vand.u32 2147483647, %v2062
      %vm2190 = vcmp.eq.f32.partialorder %v2189, 8.507059e+37
      %v2191 = vand.u32 %v2062, 2147483648
      %v2192 = vor.u32 1.1754944e-38, %v2191
      %v2193 = vsel %vm2190, %v2192, %v2188
      %v2194 = vmul.f32 1.0, %v2193
      %v2195 = vrcp.pop %v2063
      %v2196 = vmul.f32 %v2063, %v2195
      %v2197 = vsub.f32 1.0, %v2196
      %v2198 = vmul.f32 %v2195, %v2197
      %v2199 = vadd.f32 %v2195, %v2198
      %vm2200 = vweird.f32 %v2063
      %vm2201 = vweird.f32 %v2195
      %vm2202 = vmor %vm2200, %vm2201
      %v2203 = vsel %vm2202, %v2195, %v2199
      %v2204 = vand.u32 2147483647, %v2063
      %vm2205 = vcmp.eq.f32.partialorder %v2204, 8.507059e+37
      %v2206 = vand.u32 %v2063, 2147483648
      %v2207 = vor.u32 1.1754944e-38, %v2206
      %v2208 = vsel %vm2205, %v2207, %v2203
      %v2209 = vmul.f32 1.0, %v2208
      %v2210 = vrcp.pop %v2064
      %v2211 = vmul.f32 %v2064, %v2210
      %v2212 = vsub.f32 1.0, %v2211
      %v2213 = vmul.f32 %v2210, %v2212
      %v2214 = vadd.f32 %v2210, %v2213
      %vm2215 = vweird.f32 %v2064
      %vm2216 = vweird.f32 %v2210
      %vm2217 = vmor %vm2215, %vm2216
      %v2218 = vsel %vm2217, %v2210, %v2214
      %v2219 = vand.u32 2147483647, %v2064
      %vm2220 = vcmp.eq.f32.partialorder %v2219, 8.507059e+37
      %v2221 = vand.u32 %v2064, 2147483648
      %v2222 = vor.u32 1.1754944e-38, %v2221
      %v2223 = vsel %vm2220, %v2222, %v2218
      %v2224 = vmul.f32 1.0, %v2223
      %v2225 = vrcp.pop %v2065
      %v2226 = vmul.f32 %v2065, %v2225
      %v2227 = vsub.f32 1.0, %v2226
      %v2228 = vmul.f32 %v2225, %v2227
      %v2229 = vadd.f32 %v2225, %v2228
      %vm2230 = vweird.f32 %v2065
      %vm2231 = vweird.f32 %v2225
      %vm2232 = vmor %vm2230, %vm2231
      %v2233 = vsel %vm2232, %v2225, %v2229
      %v2234 = vand.u32 2147483647, %v2065
      %vm2235 = vcmp.eq.f32.partialorder %v2234, 8.507059e+37
      %v2236 = vand.u32 %v2065, 2147483648
      %v2237 = vor.u32 1.1754944e-38, %v2236
      %v2238 = vsel %vm2235, %v2237, %v2233
      %v2239 = vmul.f32 1.0, %v2238
      %v2240 = vrcp.pop %v2066
      %v2241 = vmul.f32 %v2066, %v2240
      %v2242 = vsub.f32 1.0, %v2241
      %v2243 = vmul.f32 %v2240, %v2242
      %v2244 = vadd.f32 %v2240, %v2243
      %vm2245 = vweird.f32 %v2066
      %vm2246 = vweird.f32 %v2240
      %vm2247 = vmor %vm2245, %vm2246
      %v2248 = vsel %vm2247, %v2240, %v2244
      %v2249 = vand.u32 2147483647, %v2066
      %vm2250 = vcmp.eq.f32.partialorder %v2249, 8.507059e+37
      %v2251 = vand.u32 %v2066, 2147483648
      %v2252 = vor.u32 1.1754944e-38, %v2251
      %v2253 = vsel %vm2250, %v2252, %v2248
      %v2254 = vmul.f32 1.0, %v2253
      %v2255 = vrcp.pop %v2067
      %v2256 = vmul.f32 %v2067, %v2255
      %v2257 = vsub.f32 1.0, %v2256
      %v2258 = vmul.f32 %v2255, %v2257
      %v2259 = vadd.f32 %v2255, %v2258
      %vm2260 = vweird.f32 %v2067
      %vm2261 = vweird.f32 %v2255
      %vm2262 = vmor %vm2260, %vm2261
      %v2263 = vsel %vm2262, %v2255, %v2259
      %v2264 = vand.u32 2147483647, %v2067
      %vm2265 = vcmp.eq.f32.partialorder %v2264, 8.507059e+37
      %v2266 = vand.u32 %v2067, 2147483648
      %v2267 = vor.u32 1.1754944e-38, %v2266
      %v2268 = vsel %vm2265, %v2267, %v2263
      %v2269 = vmul.f32 1.0, %v2268
      %v2270 = vrcp.pop %v2068
      %v2271 = vmul.f32 %v2068, %v2270
      %v2272 = vsub.f32 1.0, %v2271
      %v2273 = vmul.f32 %v2270, %v2272
      %v2274 = vadd.f32 %v2270, %v2273
      %vm2275 = vweird.f32 %v2068
      %vm2276 = vweird.f32 %v2270
      %vm2277 = vmor %vm2275, %vm2276
      %v2278 = vsel %vm2277, %v2270, %v2274
      %v2279 = vand.u32 2147483647, %v2068
      %vm2280 = vcmp.eq.f32.partialorder %v2279, 8.507059e+37
      %v2281 = vand.u32 %v2068, 2147483648
      %v2282 = vor.u32 1.1754944e-38, %v2281
      %v2283 = vsel %vm2280, %v2282, %v2278
      %v2284 = vmul.f32 1.0, %v2283
      %v2285 = vrcp.pop %v2069
      %v2286 = vmul.f32 %v2069, %v2285
      %v2287 = vsub.f32 1.0, %v2286
      %v2288 = vmul.f32 %v2285, %v2287
      %v2289 = vadd.f32 %v2285, %v2288
      %vm2290 = vweird.f32 %v2069
      %vm2291 = vweird.f32 %v2285
      %vm2292 = vmor %vm2290, %vm2291
      %v2293 = vsel %vm2292, %v2285, %v2289
      %v2294 = vand.u32 2147483647, %v2069
      %vm2295 = vcmp.eq.f32.partialorder %v2294, 8.507059e+37
      %v2296 = vand.u32 %v2069, 2147483648
      %v2297 = vor.u32 1.1754944e-38, %v2296
      %v2298 = vsel %vm2295, %v2297, %v2293
      %v2299 = vmul.f32 1.0, %v2298
      %v2300 = vrcp.pop %v2070
      %v2301 = vmul.f32 %v2070, %v2300
      %v2302 = vsub.f32 1.0, %v2301
      %v2303 = vmul.f32 %v2300, %v2302
      %v2304 = vadd.f32 %v2300, %v2303
      %vm2305 = vweird.f32 %v2070
      %vm2306 = vweird.f32 %v2300
      %vm2307 = vmor %vm2305, %vm2306
      %v2308 = vsel %vm2307, %v2300, %v2304
      %v2309 = vand.u32 2147483647, %v2070
      %vm2310 = vcmp.eq.f32.partialorder %v2309, 8.507059e+37
      %v2311 = vand.u32 %v2070, 2147483648
      %v2312 = vor.u32 1.1754944e-38, %v2311
      %v2313 = vsel %vm2310, %v2312, %v2308
      %v2314 = vmul.f32 1.0, %v2313
      %v2315 = vrcp.pop %v2071
      %v2316 = vmul.f32 %v2071, %v2315
      %v2317 = vsub.f32 1.0, %v2316
      %v2318 = vmul.f32 %v2315, %v2317
      %v2319 = vadd.f32 %v2315, %v2318
      %vm2320 = vweird.f32 %v2071
      %vm2321 = vweird.f32 %v2315
      %vm2322 = vmor %vm2320, %vm2321
      %v2323 = vsel %vm2322, %v2315, %v2319
      %v2324 = vand.u32 2147483647, %v2071
      %vm2325 = vcmp.eq.f32.partialorder %v2324, 8.507059e+37
      %v2326 = vand.u32 %v2071, 2147483648
      %v2327 = vor.u32 1.1754944e-38, %v2326
      %v2328 = vsel %vm2325, %v2327, %v2323
      %v2329 = vmul.f32 1.0, %v2328
      %v2330 = vrcp.pop %v2072
      %v2331 = vmul.f32 %v2072, %v2330
      %v2332 = vsub.f32 1.0, %v2331
      %v2333 = vmul.f32 %v2330, %v2332
      %v2334 = vadd.f32 %v2330, %v2333
      %vm2335 = vweird.f32 %v2072
      %vm2336 = vweird.f32 %v2330
      %vm2337 = vmor %vm2335, %vm2336
      %v2338 = vsel %vm2337, %v2330, %v2334
      %v2339 = vand.u32 2147483647, %v2072
      %vm2340 = vcmp.eq.f32.partialorder %v2339, 8.507059e+37
      %v2341 = vand.u32 %v2072, 2147483648
      %v2342 = vor.u32 1.1754944e-38, %v2341
      %v2343 = vsel %vm2340, %v2342, %v2338
      %v2344 = vmul.f32 1.0, %v2343
      %v2345 = vrcp.pop %v2073
      %v2346 = vmul.f32 %v2073, %v2345
      %v2347 = vsub.f32 1.0, %v2346
      %v2348 = vmul.f32 %v2345, %v2347
      %v2349 = vadd.f32 %v2345, %v2348
      %vm2350 = vweird.f32 %v2073
      %vm2351 = vweird.f32 %v2345
      %vm2352 = vmor %vm2350, %vm2351
      %v2353 = vsel %vm2352, %v2345, %v2349
      %v2354 = vand.u32 2147483647, %v2073
      %vm2355 = vcmp.eq.f32.partialorder %v2354, 8.507059e+37
      %v2356 = vand.u32 %v2073, 2147483648
      %v2357 = vor.u32 1.1754944e-38, %v2356
      %v2358 = vsel %vm2355, %v2357, %v2353
      %v2359 = vmul.f32 1.0, %v2358
      %v2360 = vrcp.pop %v2074
      %v2361 = vmul.f32 %v2074, %v2360
      %v2362 = vsub.f32 1.0, %v2361
      %v2363 = vmul.f32 %v2360, %v2362
      %v2364 = vadd.f32 %v2360, %v2363
      %vm2365 = vweird.f32 %v2074
      %vm2366 = vweird.f32 %v2360
      %vm2367 = vmor %vm2365, %vm2366
      %v2368 = vsel %vm2367, %v2360, %v2364
      %v2369 = vand.u32 2147483647, %v2074
      %vm2370 = vcmp.eq.f32.partialorder %v2369, 8.507059e+37
      %v2371 = vand.u32 %v2074, 2147483648
      %v2372 = vor.u32 1.1754944e-38, %v2371
      %v2373 = vsel %vm2370, %v2372, %v2368
      %v2374 = vmul.f32 1.0, %v2373
      %v2375 = vrcp.pop %v2075
      %v2376 = vmul.f32 %v2075, %v2375
      %v2377 = vsub.f32 1.0, %v2376
      %v2378 = vmul.f32 %v2375, %v2377
      %v2379 = vadd.f32 %v2375, %v2378
      %vm2380 = vweird.f32 %v2075
      %vm2381 = vweird.f32 %v2375
      %vm2382 = vmor %vm2380, %vm2381
      %v2383 = vsel %vm2382, %v2375, %v2379
      %v2384 = vand.u32 2147483647, %v2075
      %vm2385 = vcmp.eq.f32.partialorder %v2384, 8.507059e+37
      %v2386 = vand.u32 %v2075, 2147483648
      %v2387 = vor.u32 1.1754944e-38, %v2386
      %v2388 = vsel %vm2385, %v2387, %v2383
      %v2389 = vmul.f32 1.0, %v2388
      %v2390 = vrcp.pop %v2076
      %v2391 = vmul.f32 %v2076, %v2390
      %v2392 = vsub.f32 1.0, %v2391
      %v2393 = vmul.f32 %v2390, %v2392
      %v2394 = vadd.f32 %v2390, %v2393
      %vm2395 = vweird.f32 %v2076
      %vm2396 = vweird.f32 %v2390
      %vm2397 = vmor %vm2395, %vm2396
      %v2398 = vsel %vm2397, %v2390, %v2394
      %v2399 = vand.u32 2147483647, %v2076
      %vm2400 = vcmp.eq.f32.partialorder %v2399, 8.507059e+37
      %v2401 = vand.u32 %v2076, 2147483648
      %v2402 = vor.u32 1.1754944e-38, %v2401
      %v2403 = vsel %vm2400, %v2402, %v2398
      %v2404 = vmul.f32 1.0, %v2403
      %v2405 = vrcp.pop %v2077
      %v2406 = vmul.f32 %v2077, %v2405
      %v2407 = vsub.f32 1.0, %v2406
      %v2408 = vmul.f32 %v2405, %v2407
      %v2409 = vadd.f32 %v2405, %v2408
      %vm2410 = vweird.f32 %v2077
      %vm2411 = vweird.f32 %v2405
      %vm2412 = vmor %vm2410, %vm2411
      %v2413 = vsel %vm2412, %v2405, %v2409
      %v2414 = vand.u32 2147483647, %v2077
      %vm2415 = vcmp.eq.f32.partialorder %v2414, 8.507059e+37
      %v2416 = vand.u32 %v2077, 2147483648
      %v2417 = vor.u32 1.1754944e-38, %v2416
      %v2418 = vsel %vm2415, %v2417, %v2413
      %v2419 = vmul.f32 1.0, %v2418
      %v2420 = vrcp.pop %v2078
      %v2421 = vmul.f32 %v2078, %v2420
      %v2422 = vsub.f32 1.0, %v2421
      %v2423 = vmul.f32 %v2420, %v2422
      %v2424 = vadd.f32 %v2420, %v2423
      %vm2425 = vweird.f32 %v2078
      %vm2426 = vweird.f32 %v2420
      %vm2427 = vmor %vm2425, %vm2426
      %v2428 = vsel %vm2427, %v2420, %v2424
      %v2429 = vand.u32 2147483647, %v2078
      %vm2430 = vcmp.eq.f32.partialorder %v2429, 8.507059e+37
      %v2431 = vand.u32 %v2078, 2147483648
      %v2432 = vor.u32 1.1754944e-38, %v2431
      %v2433 = vsel %vm2430, %v2432, %v2428
      %v2434 = vmul.f32 1.0, %v2433
      %v2435 = vrcp.pop %v2079
      %v2436 = vmul.f32 %v2079, %v2435
      %v2437 = vsub.f32 1.0, %v2436
      %v2438 = vmul.f32 %v2435, %v2437
      %v2439 = vadd.f32 %v2435, %v2438
      %vm2440 = vweird.f32 %v2079
      %vm2441 = vweird.f32 %v2435
      %vm2442 = vmor %vm2440, %vm2441
      %v2443 = vsel %vm2442, %v2435, %v2439
      %v2444 = vand.u32 2147483647, %v2079
      %vm2445 = vcmp.eq.f32.partialorder %v2444, 8.507059e+37
      %v2446 = vand.u32 %v2079, 2147483648
      %v2447 = vor.u32 1.1754944e-38, %v2446
      %v2448 = vsel %vm2445, %v2447, %v2443
      %v2449 = vmul.f32 1.0, %v2448
      %v2450 = vrcp.pop %v2080
      %v2451 = vmul.f32 %v2080, %v2450
      %v2452 = vsub.f32 1.0, %v2451
      %v2453 = vmul.f32 %v2450, %v2452
      %v2454 = vadd.f32 %v2450, %v2453
      %vm2455 = vweird.f32 %v2080
      %vm2456 = vweird.f32 %v2450
      %vm2457 = vmor %vm2455, %vm2456
      %v2458 = vsel %vm2457, %v2450, %v2454
      %v2459 = vand.u32 2147483647, %v2080
      %vm2460 = vcmp.eq.f32.partialorder %v2459, 8.507059e+37
      %v2461 = vand.u32 %v2080, 2147483648
      %v2462 = vor.u32 1.1754944e-38, %v2461
      %v2463 = vsel %vm2460, %v2462, %v2458
      %v2464 = vmul.f32 1.0, %v2463
      %v2465 = vrcp.pop %v2081
      %v2466 = vmul.f32 %v2081, %v2465
      %v2467 = vsub.f32 1.0, %v2466
      %v2468 = vmul.f32 %v2465, %v2467
      %v2469 = vadd.f32 %v2465, %v2468
      %vm2470 = vweird.f32 %v2081
      %vm2471 = vweird.f32 %v2465
      %vm2472 = vmor %vm2470, %vm2471
      %v2473 = vsel %vm2472, %v2465, %v2469
      %v2474 = vand.u32 2147483647, %v2081
      %vm2475 = vcmp.eq.f32.partialorder %v2474, 8.507059e+37
      %v2476 = vand.u32 %v2081, 2147483648
      %v2477 = vor.u32 1.1754944e-38, %v2476
      %v2478 = vsel %vm2475, %v2477, %v2473
      %v2479 = vmul.f32 1.0, %v2478
      %v2480 = vrcp.pop %v2082
      %v2481 = vmul.f32 %v2082, %v2480
      %v2482 = vsub.f32 1.0, %v2481
      %v2483 = vmul.f32 %v2480, %v2482
      %v2484 = vadd.f32 %v2480, %v2483
      %vm2485 = vweird.f32 %v2082
      %vm2486 = vweird.f32 %v2480
      %vm2487 = vmor %vm2485, %vm2486
      %v2488 = vsel %vm2487, %v2480, %v2484
      %v2489 = vand.u32 2147483647, %v2082
      %vm2490 = vcmp.eq.f32.partialorder %v2489, 8.507059e+37
      %v2491 = vand.u32 %v2082, 2147483648
      %v2492 = vor.u32 1.1754944e-38, %v2491
      %v2493 = vsel %vm2490, %v2492, %v2488
      %v2494 = vmul.f32 1.0, %v2493
      %v2495 = vrcp.pop %v2083
      %v2496 = vmul.f32 %v2083, %v2495
      %v2497 = vsub.f32 1.0, %v2496
      %v2498 = vmul.f32 %v2495, %v2497
      %v2499 = vadd.f32 %v2495, %v2498
      %vm2500 = vweird.f32 %v2083
      %vm2501 = vweird.f32 %v2495
      %vm2502 = vmor %vm2500, %vm2501
      %v2503 = vsel %vm2502, %v2495, %v2499
      %v2504 = vand.u32 2147483647, %v2083
      %vm2505 = vcmp.eq.f32.partialorder %v2504, 8.507059e+37
      %v2506 = vand.u32 %v2083, 2147483648
      %v2507 = vor.u32 1.1754944e-38, %v2506
      %v2508 = vsel %vm2505, %v2507, %v2503
      %v2509 = vmul.f32 1.0, %v2508
      %v2510 = vrcp.pop %v2084
      %v2511 = vmul.f32 %v2084, %v2510
      %v2512 = vsub.f32 1.0, %v2511
      %v2513 = vmul.f32 %v2510, %v2512
      %v2514 = vadd.f32 %v2510, %v2513
      %vm2515 = vweird.f32 %v2084
      %vm2516 = vweird.f32 %v2510
      %vm2517 = vmor %vm2515, %vm2516
      %v2518 = vsel %vm2517, %v2510, %v2514
      %v2519 = vand.u32 2147483647, %v2084
      %vm2520 = vcmp.eq.f32.partialorder %v2519, 8.507059e+37
      %v2521 = vand.u32 %v2084, 2147483648
      %v2522 = vor.u32 1.1754944e-38, %v2521
      %v2523 = vsel %vm2520, %v2522, %v2518
      %v2524 = vmul.f32 1.0, %v2523
      %v2525 = vrcp.pop %v2085
      %v2526 = vmul.f32 %v2085, %v2525
      %v2527 = vsub.f32 1.0, %v2526
      %v2528 = vmul.f32 %v2525, %v2527
      %v2529 = vadd.f32 %v2525, %v2528
      %vm2530 = vweird.f32 %v2085
      %vm2531 = vweird.f32 %v2525
      %vm2532 = vmor %vm2530, %vm2531
      %v2533 = vsel %vm2532, %v2525, %v2529
      %v2534 = vand.u32 2147483647, %v2085
      %vm2535 = vcmp.eq.f32.partialorder %v2534, 8.507059e+37
      %v2536 = vand.u32 %v2085, 2147483648
      %v2537 = vor.u32 1.1754944e-38, %v2536
      %v2538 = vsel %vm2535, %v2537, %v2533
      %v2539 = vmul.f32 1.0, %v2538
      %v2540 = vrcp.pop %v2086
      %v2541 = vmul.f32 %v2086, %v2540
      %v2542 = vsub.f32 1.0, %v2541
      %v2543 = vmul.f32 %v2540, %v2542
      %v2544 = vadd.f32 %v2540, %v2543
      %vm2545 = vweird.f32 %v2086
      %vm2546 = vweird.f32 %v2540
      %vm2547 = vmor %vm2545, %vm2546
      %v2548 = vsel %vm2547, %v2540, %v2544
      %v2549 = vand.u32 2147483647, %v2086
      %vm2550 = vcmp.eq.f32.partialorder %v2549, 8.507059e+37
      %v2551 = vand.u32 %v2086, 2147483648
      %v2552 = vor.u32 1.1754944e-38, %v2551
      %v2553 = vsel %vm2550, %v2552, %v2548
      %v2554 = vmul.f32 1.0, %v2553
      %v2555 = vrcp.pop %v2087
      %v2556 = vmul.f32 %v2087, %v2555
      %v2557 = vsub.f32 1.0, %v2556
      %v2558 = vmul.f32 %v2555, %v2557
      %v2559 = vadd.f32 %v2555, %v2558
      %vm2560 = vweird.f32 %v2087
      %vm2561 = vweird.f32 %v2555
      %vm2562 = vmor %vm2560, %vm2561
      %v2563 = vsel %vm2562, %v2555, %v2559
      %v2564 = vand.u32 2147483647, %v2087
      %vm2565 = vcmp.eq.f32.partialorder %v2564, 8.507059e+37
      %v2566 = vand.u32 %v2087, 2147483648
      %v2567 = vor.u32 1.1754944e-38, %v2566
      %v2568 = vsel %vm2565, %v2567, %v2563
      %v2569 = vmul.f32 1.0, %v2568
      %v2570 = vrcp.pop %v2088
      %v2571 = vmul.f32 %v2088, %v2570
      %v2572 = vsub.f32 1.0, %v2571
      %v2573 = vmul.f32 %v2570, %v2572
      %v2574 = vadd.f32 %v2570, %v2573
      %vm2575 = vweird.f32 %v2088
      %vm2576 = vweird.f32 %v2570
      %vm2577 = vmor %vm2575, %vm2576
      %v2578 = vsel %vm2577, %v2570, %v2574
      %v2579 = vand.u32 2147483647, %v2088
      %vm2580 = vcmp.eq.f32.partialorder %v2579, 8.507059e+37
      %v2581 = vand.u32 %v2088, 2147483648
      %v2582 = vor.u32 1.1754944e-38, %v2581
      %v2583 = vsel %vm2580, %v2582, %v2578
      %v2584 = vmul.f32 1.0, %v2583
      %v2585 = vrcp.pop %v2089
      %v2586 = vmul.f32 %v2089, %v2585
      %v2587 = vsub.f32 1.0, %v2586
      %v2588 = vmul.f32 %v2585, %v2587
      %v2589 = vadd.f32 %v2585, %v2588
      %vm2590 = vweird.f32 %v2089
      %vm2591 = vweird.f32 %v2585
      %vm2592 = vmor %vm2590, %vm2591
      %v2593 = vsel %vm2592, %v2585, %v2589
      %v2594 = vand.u32 2147483647, %v2089
      %vm2595 = vcmp.eq.f32.partialorder %v2594, 8.507059e+37
      %v2596 = vand.u32 %v2089, 2147483648
      %v2597 = vor.u32 1.1754944e-38, %v2596
      %v2598 = vsel %vm2595, %v2597, %v2593
      %v2599 = vmul.f32 1.0, %v2598
      %v2600 = vrcp.pop %v2090
      %v2601 = vmul.f32 %v2090, %v2600
      %v2602 = vsub.f32 1.0, %v2601
      %v2603 = vmul.f32 %v2600, %v2602
      %v2604 = vadd.f32 %v2600, %v2603
      %vm2605 = vweird.f32 %v2090
      %vm2606 = vweird.f32 %v2600
      %vm2607 = vmor %vm2605, %vm2606
      %v2608 = vsel %vm2607, %v2600, %v2604
      %v2609 = vand.u32 2147483647, %v2090
      %vm2610 = vcmp.eq.f32.partialorder %v2609, 8.507059e+37
      %v2611 = vand.u32 %v2090, 2147483648
      %v2612 = vor.u32 1.1754944e-38, %v2611
      %v2613 = vsel %vm2610, %v2612, %v2608
      %v2614 = vmul.f32 1.0, %v2613
      %v2615 = vrcp.pop %v2091
      %v2616 = vmul.f32 %v2091, %v2615
      %v2617 = vsub.f32 1.0, %v2616
      %v2618 = vmul.f32 %v2615, %v2617
      %v2619 = vadd.f32 %v2615, %v2618
      %vm2620 = vweird.f32 %v2091
      %vm2621 = vweird.f32 %v2615
      %vm2622 = vmor %vm2620, %vm2621
      %v2623 = vsel %vm2622, %v2615, %v2619
      %v2624 = vand.u32 2147483647, %v2091
      %vm2625 = vcmp.eq.f32.partialorder %v2624, 8.507059e+37
      %v2626 = vand.u32 %v2091, 2147483648
      %v2627 = vor.u32 1.1754944e-38, %v2626
      %v2628 = vsel %vm2625, %v2627, %v2623
      %v2629 = vmul.f32 1.0, %v2628
      %v2630 = vrcp.pop %v2092
      %v2631 = vmul.f32 %v2092, %v2630
      %v2632 = vsub.f32 1.0, %v2631
      %v2633 = vmul.f32 %v2630, %v2632
      %v2634 = vadd.f32 %v2630, %v2633
      %vm2635 = vweird.f32 %v2092
      %vm2636 = vweird.f32 %v2630
      %vm2637 = vmor %vm2635, %vm2636
      %v2638 = vsel %vm2637, %v2630, %v2634
      %v2639 = vand.u32 2147483647, %v2092
      %vm2640 = vcmp.eq.f32.partialorder %v2639, 8.507059e+37
      %v2641 = vand.u32 %v2092, 2147483648
      %v2642 = vor.u32 1.1754944e-38, %v2641
      %v2643 = vsel %vm2640, %v2642, %v2638
      %v2644 = vmul.f32 1.0, %v2643
      %v2645 = vrcp.pop %v2093
      %v2646 = vmul.f32 %v2093, %v2645
      %v2647 = vsub.f32 1.0, %v2646
      %v2648 = vmul.f32 %v2645, %v2647
      %v2649 = vadd.f32 %v2645, %v2648
      %vm2650 = vweird.f32 %v2093
      %vm2651 = vweird.f32 %v2645
      %vm2652 = vmor %vm2650, %vm2651
      %v2653 = vsel %vm2652, %v2645, %v2649
      %v2654 = vand.u32 2147483647, %v2093
      %vm2655 = vcmp.eq.f32.partialorder %v2654, 8.507059e+37
      %v2656 = vand.u32 %v2093, 2147483648
      %v2657 = vor.u32 1.1754944e-38, %v2656
      %v2658 = vsel %vm2655, %v2657, %v2653
      %v2659 = vmul.f32 1.0, %v2658
      %v2660 = vrcp.pop %v2094
      %v2661 = vmul.f32 %v2094, %v2660
      %v2662 = vsub.f32 1.0, %v2661
      %v2663 = vmul.f32 %v2660, %v2662
      %v2664 = vadd.f32 %v2660, %v2663
      %vm2665 = vweird.f32 %v2094
      %vm2666 = vweird.f32 %v2660
      %vm2667 = vmor %vm2665, %vm2666
      %v2668 = vsel %vm2667, %v2660, %v2664
      %v2669 = vand.u32 2147483647, %v2094
      %vm2670 = vcmp.eq.f32.partialorder %v2669, 8.507059e+37
      %v2671 = vand.u32 %v2094, 2147483648
      %v2672 = vor.u32 1.1754944e-38, %v2671
      %v2673 = vsel %vm2670, %v2672, %v2668
      %v2674 = vmul.f32 1.0, %v2673
      %v2675 = vrcp.pop %v2095
      %v2676 = vmul.f32 %v2095, %v2675
      %v2677 = vsub.f32 1.0, %v2676
      %v2678 = vmul.f32 %v2675, %v2677
      %v2679 = vadd.f32 %v2675, %v2678
      %vm2680 = vweird.f32 %v2095
      %vm2681 = vweird.f32 %v2675
      %vm2682 = vmor %vm2680, %vm2681
      %v2683 = vsel %vm2682, %v2675, %v2679
      %v2684 = vand.u32 2147483647, %v2095
      %vm2685 = vcmp.eq.f32.partialorder %v2684, 8.507059e+37
      %v2686 = vand.u32 %v2095, 2147483648
      %v2687 = vor.u32 1.1754944e-38, %v2686
      %v2688 = vsel %vm2685, %v2687, %v2683
      %v2689 = vmul.f32 1.0, %v2688
      %v2690 = vrcp.pop %v2096
      %v2691 = vmul.f32 %v2096, %v2690
      %v2692 = vsub.f32 1.0, %v2691
      %v2693 = vmul.f32 %v2690, %v2692
      %v2694 = vadd.f32 %v2690, %v2693
      %vm2695 = vweird.f32 %v2096
      %vm2696 = vweird.f32 %v2690
      %vm2697 = vmor %vm2695, %vm2696
      %v2698 = vsel %vm2697, %v2690, %v2694
      %v2699 = vand.u32 2147483647, %v2096
      %vm2700 = vcmp.eq.f32.partialorder %v2699, 8.507059e+37
      %v2701 = vand.u32 %v2096, 2147483648
      %v2702 = vor.u32 1.1754944e-38, %v2701
      %v2703 = vsel %vm2700, %v2702, %v2698
      %v2704 = vmul.f32 1.0, %v2703
      %v2705 = vrcp.pop %v2097
      %v2706 = vmul.f32 %v2097, %v2705
      %v2707 = vsub.f32 1.0, %v2706
      %v2708 = vmul.f32 %v2705, %v2707
      %v2709 = vadd.f32 %v2705, %v2708
      %vm2710 = vweird.f32 %v2097
      %vm2711 = vweird.f32 %v2705
      %vm2712 = vmor %vm2710, %vm2711
      %v2713 = vsel %vm2712, %v2705, %v2709
      %v2714 = vand.u32 2147483647, %v2097
      %vm2715 = vcmp.eq.f32.partialorder %v2714, 8.507059e+37
      %v2716 = vand.u32 %v2097, 2147483648
      %v2717 = vor.u32 1.1754944e-38, %v2716
      %v2718 = vsel %vm2715, %v2717, %v2713
      %v2719 = vmul.f32 1.0, %v2718
      %v2720 = vrcp.pop %v2098
      %v2721 = vmul.f32 %v2098, %v2720
      %v2722 = vsub.f32 1.0, %v2721
      %v2723 = vmul.f32 %v2720, %v2722
      %v2724 = vadd.f32 %v2720, %v2723
      %vm2725 = vweird.f32 %v2098
      %vm2726 = vweird.f32 %v2720
      %vm2727 = vmor %vm2725, %vm2726
      %v2728 = vsel %vm2727, %v2720, %v2724
      %v2729 = vand.u32 2147483647, %v2098
      %vm2730 = vcmp.eq.f32.partialorder %v2729, 8.507059e+37
      %v2731 = vand.u32 %v2098, 2147483648
      %v2732 = vor.u32 1.1754944e-38, %v2731
      %v2733 = vsel %vm2730, %v2732, %v2728
      %v2734 = vmul.f32 1.0, %v2733
      %v2735 = vrcp.pop %v2099
      %v2736 = vmul.f32 %v2099, %v2735
      %v2737 = vsub.f32 1.0, %v2736
      %v2738 = vmul.f32 %v2735, %v2737
      %v2739 = vadd.f32 %v2735, %v2738
      %vm2740 = vweird.f32 %v2099
      %vm2741 = vweird.f32 %v2735
      %vm2742 = vmor %vm2740, %vm2741
      %v2743 = vsel %vm2742, %v2735, %v2739
      %v2744 = vand.u32 2147483647, %v2099
      %vm2745 = vcmp.eq.f32.partialorder %v2744, 8.507059e+37
      %v2746 = vand.u32 %v2099, 2147483648
      %v2747 = vor.u32 1.1754944e-38, %v2746
      %v2748 = vsel %vm2745, %v2747, %v2743
      %v2749 = vmul.f32 1.0, %v2748
      %v2750 = vrcp.pop %v2100
      %v2751 = vmul.f32 %v2100, %v2750
      %v2752 = vsub.f32 1.0, %v2751
      %v2753 = vmul.f32 %v2750, %v2752
      %v2754 = vadd.f32 %v2750, %v2753
      %vm2755 = vweird.f32 %v2100
      %vm2756 = vweird.f32 %v2750
      %vm2757 = vmor %vm2755, %vm2756
      %v2758 = vsel %vm2757, %v2750, %v2754
      %v2759 = vand.u32 2147483647, %v2100
      %vm2760 = vcmp.eq.f32.partialorder %v2759, 8.507059e+37
      %v2761 = vand.u32 %v2100, 2147483648
      %v2762 = vor.u32 1.1754944e-38, %v2761
      %v2763 = vsel %vm2760, %v2762, %v2758
      %v2764 = vmul.f32 1.0, %v2763
      %v2765 = vrcp.pop %v2101
      %v2766 = vmul.f32 %v2101, %v2765
      %v2767 = vsub.f32 1.0, %v2766
      %v2768 = vmul.f32 %v2765, %v2767
      %v2769 = vadd.f32 %v2765, %v2768
      %vm2770 = vweird.f32 %v2101
      %vm2771 = vweird.f32 %v2765
      %vm2772 = vmor %vm2770, %vm2771
      %v2773 = vsel %vm2772, %v2765, %v2769
      %v2774 = vand.u32 2147483647, %v2101
      %vm2775 = vcmp.eq.f32.partialorder %v2774, 8.507059e+37
      %v2776 = vand.u32 %v2101, 2147483648
      %v2777 = vor.u32 1.1754944e-38, %v2776
      %v2778 = vsel %vm2775, %v2777, %v2773
      %v2779 = vmul.f32 1.0, %v2778
      %v2780 = vrcp.pop %v2102
      %v2781 = vmul.f32 %v2102, %v2780
      %v2782 = vsub.f32 1.0, %v2781
      %v2783 = vmul.f32 %v2780, %v2782
      %v2784 = vadd.f32 %v2780, %v2783
      %vm2785 = vweird.f32 %v2102
      %vm2786 = vweird.f32 %v2780
      %vm2787 = vmor %vm2785, %vm2786
      %v2788 = vsel %vm2787, %v2780, %v2784
      %v2789 = vand.u32 2147483647, %v2102
      %vm2790 = vcmp.eq.f32.partialorder %v2789, 8.507059e+37
      %v2791 = vand.u32 %v2102, 2147483648
      %v2792 = vor.u32 1.1754944e-38, %v2791
      %v2793 = vsel %vm2790, %v2792, %v2788
      %v2794 = vmul.f32 1.0, %v2793
      %v2795 = vrcp.pop %v2103
      %v2796 = vmul.f32 %v2103, %v2795
      %v2797 = vsub.f32 1.0, %v2796
      %v2798 = vmul.f32 %v2795, %v2797
      %v2799 = vadd.f32 %v2795, %v2798
      %vm2800 = vweird.f32 %v2103
      %vm2801 = vweird.f32 %v2795
      %vm2802 = vmor %vm2800, %vm2801
      %v2803 = vsel %vm2802, %v2795, %v2799
      %v2804 = vand.u32 2147483647, %v2103
      %vm2805 = vcmp.eq.f32.partialorder %v2804, 8.507059e+37
      %v2806 = vand.u32 %v2103, 2147483648
      %v2807 = vor.u32 1.1754944e-38, %v2806
      %v2808 = vsel %vm2805, %v2807, %v2803
      %v2809 = vmul.f32 1.0, %v2808
      %v2810 = vrcp.pop %v2104
      %v2811 = vmul.f32 %v2104, %v2810
      %v2812 = vsub.f32 1.0, %v2811
      %v2813 = vmul.f32 %v2810, %v2812
      %v2814 = vadd.f32 %v2810, %v2813
      %vm2815 = vweird.f32 %v2104
      %vm2816 = vweird.f32 %v2810
      %vm2817 = vmor %vm2815, %vm2816
      %v2818 = vsel %vm2817, %v2810, %v2814
      %v2819 = vand.u32 2147483647, %v2104
      %vm2820 = vcmp.eq.f32.partialorder %v2819, 8.507059e+37
      %v2821 = vand.u32 %v2104, 2147483648
      %v2822 = vor.u32 1.1754944e-38, %v2821
      %v2823 = vsel %vm2820, %v2822, %v2818
      %v2824 = vmul.f32 1.0, %v2823
      %v2825 = vmul.f32 %v1865, %v2119
      %v2826 = vmul.f32 %v1866, %v2134
      %v2827 = vmul.f32 %v1867, %v2149
      %v2828 = vmul.f32 %v1868, %v2164
      %v2829 = vmul.f32 %v1869, %v2179
      %v2830 = vmul.f32 %v1870, %v2194
      %v2831 = vmul.f32 %v1871, %v2209
      %v2832 = vmul.f32 %v1872, %v2224
      %v2833 = vmul.f32 %v1873, %v2239
      %v2834 = vmul.f32 %v1874, %v2254
      %v2835 = vmul.f32 %v1875, %v2269
      %v2836 = vmul.f32 %v1876, %v2284
      %v2837 = vmul.f32 %v1877, %v2299
      %v2838 = vmul.f32 %v1878, %v2314
      %v2839 = vmul.f32 %v1879, %v2329
      %v2840 = vmul.f32 %v1880, %v2344
      %v2841 = vmul.f32 %v1881, %v2359
      %v2842 = vmul.f32 %v1882, %v2374
      %v2843 = vmul.f32 %v1883, %v2389
      %v2844 = vmul.f32 %v1884, %v2404
      %v2845 = vmul.f32 %v1885, %v2419
      %v2846 = vmul.f32 %v1886, %v2434
      %v2847 = vmul.f32 %v1887, %v2449
      %v2848 = vmul.f32 %v1888, %v2464
      %v2849 = vmul.f32 %v1889, %v2479
      %v2850 = vmul.f32 %v1890, %v2494
      %v2851 = vmul.f32 %v1891, %v2509
      %v2852 = vmul.f32 %v1892, %v2524
      %v2853 = vmul.f32 %v1893, %v2539
      %v2854 = vmul.f32 %v1894, %v2554
      %v2855 = vmul.f32 %v1895, %v2569
      %v2856 = vmul.f32 %v1896, %v2584
      %v2857 = vmul.f32 %v1897, %v2599
      %v2858 = vmul.f32 %v1898, %v2614
      %v2859 = vmul.f32 %v1899, %v2629
      %v2860 = vmul.f32 %v1900, %v2644
      %v2861 = vmul.f32 %v1901, %v2659
      %v2862 = vmul.f32 %v1902, %v2674
      %v2863 = vmul.f32 %v1903, %v2689
      %v2864 = vmul.f32 %v1904, %v2704
      %v2865 = vmul.f32 %v1905, %v2719
      %v2866 = vmul.f32 %v1906, %v2734
      %v2867 = vmul.f32 %v1907, %v2749
      %v2868 = vmul.f32 %v1908, %v2764
      %v2869 = vmul.f32 %v1909, %v2779
      %v2870 = vmul.f32 %v1910, %v2794
      %v2871 = vmul.f32 %v1911, %v2809
      %v2872 = vmul.f32 %v1912, %v2824
      %2873 = vst [vmem:[%s192] sm:$0xff] %v2825
      %2874 = vst [vmem:[%s192 + $0x8] sm:$0xff] %v2826
      %2875 = vst [vmem:[%s192 + $0x10] sm:$0xff] %v2827
      %2876 = vst [vmem:[%s192 + $0x18] sm:$0xff] %v2828
      %2877 = vst [vmem:[%s192 + $0x20] sm:$0xff] %v2829
      %2878 = vst [vmem:[%s192 + $0x28] sm:$0xff] %v2830
      %2879 = vst [vmem:[%s192 + $0x30] sm:$0xff] %v2831
      %2880 = vst [vmem:[%s192 + $0x38] sm:$0xff] %v2832
      %2881 = vst [vmem:[%s192 + $0x40] sm:$0xff] %v2833
      %2882 = vst [vmem:[%s192 + $0x48] sm:$0xff] %v2834
      %2883 = vst [vmem:[%s192 + $0x50] sm:$0xff] %v2835
      %2884 = vst [vmem:[%s192 + $0x58] sm:$0xff] %v2836
      %2885 = vst [vmem:[%s192 + $0x60] sm:$0xff] %v2837
      %2886 = vst [vmem:[%s192 + $0x68] sm:$0xff] %v2838
      %2887 = vst [vmem:[%s192 + $0x70] sm:$0xff] %v2839
      %2888 = vst [vmem:[%s192 + $0x78] sm:$0xff] %v2840
      %2889 = vst [vmem:[%s192 + $0x80] sm:$0xff] %v2841
      %2890 = vst [vmem:[%s192 + $0x88] sm:$0xff] %v2842
      %2891 = vst [vmem:[%s192 + $0x90] sm:$0xff] %v2843
      %2892 = vst [vmem:[%s192 + $0x98] sm:$0xff] %v2844
      %2893 = vst [vmem:[%s192 + $0xa0] sm:$0xff] %v2845
      %2894 = vst [vmem:[%s192 + $0xa8] sm:$0xff] %v2846
      %2895 = vst [vmem:[%s192 + $0xb0] sm:$0xff] %v2847
      %2896 = vst [vmem:[%s192 + $0xb8] sm:$0xff] %v2848
      %2897 = vst [vmem:[%s192 + $0xc0] sm:$0xff] %v2849
      %2898 = vst [vmem:[%s192 + $0xc8] sm:$0xff] %v2850
      %2899 = vst [vmem:[%s192 + $0xd0] sm:$0xff] %v2851
      %2900 = vst [vmem:[%s192 + $0xd8] sm:$0xff] %v2852
      %2901 = vst [vmem:[%s192 + $0xe0] sm:$0xff] %v2853
      %2902 = vst [vmem:[%s192 + $0xe8] sm:$0xff] %v2854
      %2903 = vst [vmem:[%s192 + $0xf0] sm:$0xff] %v2855
      %2904 = vst [vmem:[%s192 + $0xf8] sm:$0xff] %v2856
      %2905 = vst [vmem:[%s192 + $0x100] sm:$0xff] %v2857
      %2906 = vst [vmem:[%s192 + $0x108] sm:$0xff] %v2858
      %2907 = vst [vmem:[%s192 + $0x110] sm:$0xff] %v2859
      %2908 = vst [vmem:[%s192 + $0x118] sm:$0xff] %v2860
      %2909 = vst [vmem:[%s192 + $0x120] sm:$0xff] %v2861
      %2910 = vst [vmem:[%s192 + $0x128] sm:$0xff] %v2862
      %2911 = vst [vmem:[%s192 + $0x130] sm:$0xff] %v2863
      %2912 = vst [vmem:[%s192 + $0x138] sm:$0xff] %v2864
      %2913 = vst [vmem:[%s192 + $0x140] sm:$0xff] %v2865
      %2914 = vst [vmem:[%s192 + $0x148] sm:$0xff] %v2866
      %2915 = vst [vmem:[%s192 + $0x150] sm:$0xff] %v2867
      %2916 = vst [vmem:[%s192 + $0x158] sm:$0xff] %v2868
      %2917 = vst [vmem:[%s192 + $0x160] sm:$0xff] %v2869
      %2918 = vst [vmem:[%s192 + $0x168] sm:$0xff] %v2870
      %2919 = vst [vmem:[%s192 + $0x170] sm:$0xff] %v2871
      %2920 = vst [vmem:[%s192 + $0x178] sm:$0xff] %v2872
      %s2921 = smul.u32 48, %s19
      %p2922 = scmp.lt.s32.totalorder %s18, 1
      %s2923 = scalar_select %p2922, %s18, 1
      %p2924 = scmp.lt.s32.totalorder %s2921, 95
      %s2925 = scalar_select %p2924, %s2921, 95
      %s2926 = smul.addr %s2923, 96
      %s2927 = sadd.s32 %s2925, %s2926
      %s2928 = smul.addr %s2927, 8
      %s2929 = scalar_lea.vmem %s3, %s2928
      // Predicated region
      $region33: #{conv_transpose_silu.1} parent=31 // pred_check
        %p2930 = pneg %p114
      $region34: #{conv_transpose_silu.1} parent=31 // pred_check_branch
        %2932 = sbr.rel (%p2930) target = $region36
      $region35: #{conv_transpose_silu.1} parent=31 // pred_region
        %s2933 = smul.u32 48, %s19
      $region36: #{conv_transpose_silu.1} parent=31 // pred_fallthru
        _
    $region32: #{conv_transpose_silu.1} parent=5 // pred_fallthru
      _
    %p2934 = scmp.le.s32.totalorder 2, %s9
    // Predicated region
    $region37: #{conv_transpose_silu.1} parent=5 // pred_check
      %p2935 = pneg %p2934
    $region38: #{conv_transpose_silu.1} parent=5 // pred_check_branch
      %2937 = sbr.rel (%p2935) target = $region40
    $region39: #{conv_transpose_silu.1} parent=5 // pred_region
      %s2938 = ssub.s32 %s9, 2
      // Predicated region
      $region41: #{conv_transpose_silu.1} parent=39 // pred_check
        %p2939 = pneg %p120
      $region42: #{conv_transpose_silu.1} parent=39 // pred_check_branch
        %2941 = sbr.rel (%p2939) target = $region44
      $region43: #{conv_transpose_silu.1} parent=39 // pred_region
        %s2942 = smul.u32 48, %s21
        %p2943 = scmp.lt.s32.totalorder %s20, 1
        %s2944 = scalar_select %p2943, %s20, 1
        %p2945 = scmp.lt.s32.totalorder %s2942, 95
        %s2946 = scalar_select %p2945, %s2942, 95
        %s2947 = smul.addr %s2944, 96
        %s2948 = sadd.s32 %s2946, %s2947
        %s2949 = smul.addr %s2948, 8
        %s2950 = scalar_lea.vmem %s3, %s2949
      $region44: #{conv_transpose_silu.1} parent=39 // pred_fallthru
        _
    $region40: #{conv_transpose_silu.1} parent=5 // pred_fallthru
      _
  $region6: #{conv_transpose_silu.1} parent=0 // loop_footer
    %s13 = sadd.s32 1, %s9
  $region7: #{conv_transpose_silu.1} parent=0 // loop_footer_branch
    %8 = sbr.rel target = $region3
  $region8: #{conv_transpose_silu.1} parent=0 // loop_exit
    _

</llo_original>
